<compile_context>
chip_gen: v6e
topology: v6e:2x2x1
jax: 0.10.0
libtpu: 0.0.40
codegen_flags: <defaults>
</compile_context>

<pallas_src>
import jax
import jax.numpy as jnp
from jax.experimental import pallas as pl
from jax.experimental.pallas import tpu as pltpu


def _bilstm_kernel(x_ref, lens_ref, wx_ref, whh_ref, b_ref, h0_ref, c0_ref,
                   outf_ref, outb_ref, gx_ref):
    # Shapes (all static at trace time):
    #   x_ref   : (T*Bp, E)    time-major rows, row t*Bp+b = x[t, b]
    #   lens_ref: (Bp, 1)      int32 sequence lengths
    #   wx_ref  : (E, 8H)      [W_ih_fwd | W_ih_bwd], per-dir gate order i,f,g,o
    #   whh_ref : (2, H, 4H)   per-direction recurrent weights
    #   b_ref   : (1, 8H)      [b_fwd | b_bwd] (b_ih + b_hh)
    #   h0_ref  : (2, Bp, H)   initial hidden per direction
    #   c0_ref  : (2, Bp, H)   initial cell per direction
    #   outf_ref: (T, Bp, H)   forward hidden at time t (zeros past lens)
    #   outb_ref: (T, Bp, H)   backward hidden at time t (true time slot)
    #   gx_ref  : (T*Bp, 8H)   VMEM scratch for the hoisted input projection
    T, Bp, H = outf_ref.shape
    H4 = 4 * H

    # Hoisted input projection: ONE GEMM for every timestep and both
    # directions, bias folded in.  (At production T*B this would be streamed in
    # time chunks via a grid / emit_pipeline instead of held resident.)
    gx_ref[...] = (jnp.dot(x_ref[...], wx_ref[...],
                           preferred_element_type=jnp.float32) + b_ref[...])

    lens = lens_ref[...]                      # (Bp, 1) int32
    wh_f = whh_ref[0]                         # (H, 4H), constant over all steps
    wh_b = whh_ref[1]
    h_f, c_f = h0_ref[0], c0_ref[0]           # (Bp, H)
    h_b, c_b = h0_ref[1], c0_ref[1]

    def cell(g, c):
        # PyTorch LSTM gate order: i, f, g(cell candidate), o.
        # At H >= 128 (production) each slice is 128-lane aligned; at H=32 the
        # sub-vreg slices cost a couple of XLU rotates/step (otherwise-idle slot).
        i_g = jax.nn.sigmoid(g[:, 0 * H:1 * H])
        f_g = jax.nn.sigmoid(g[:, 1 * H:2 * H])
        g_g = jnp.tanh(g[:, 2 * H:3 * H])
        o_g = jax.nn.sigmoid(g[:, 3 * H:4 * H])
        c_new = f_g * c + i_g * g_g
        h_new = o_g * jnp.tanh(c_new)
        return h_new, c_new

    # Fully unrolled time loop; every index below is a static Python int.
    for s in range(T):
        tf, tb = s, T - 1 - s                 # forward / backward time indices

        # ---- forward direction, time tf ---------------------------------
        gf = gx_ref[tf * Bp:(tf + 1) * Bp, 0:H4] + jnp.dot(
            h_f, wh_f, preferred_element_type=jnp.float32)
        hf_new, cf_new = cell(gf, c_f)
        vf = tf < lens                        # (Bp, 1): broadcasts over lanes
        h_f = jnp.where(vf, hf_new, h_f)      # freeze state past each length
        c_f = jnp.where(vf, cf_new, c_f)
        outf_ref[tf] = jnp.where(vf, hf_new, 0.0)   # per-step direct store

        # ---- backward direction, time tb (stored at its true time row) ---
        gb = gx_ref[tb * Bp:(tb + 1) * Bp, H4:2 * H4] + jnp.dot(
            h_b, wh_b, preferred_element_type=jnp.float32)
        hb_new, cb_new = cell(gb, c_b)
        vb = tb < lens
        h_b = jnp.where(vb, hb_new, h_b)
        c_b = jnp.where(vb, cb_new, c_b)
        outb_ref[tb] = jnp.where(vb, hb_new, 0.0)


def sentence_extractor_forward(params, lstm_inputs, lens, encoder_in):
    """Mirrors Sentence_Extractor.forward (inference).

    lstm_inputs : (B, T, E) padded batch_first data (packed-sequence data+lens)
    lens        : (B,) valid lengths
    encoder_in  : (h0, c0), each (2, B, H)
    returns     : (B, T, 2H) padded output, zeros past lens; Dropout = identity.
    """
    h0, c0 = encoder_in
    B, T, E = lstm_inputs.shape
    H = h0.shape[-1]
    Bp = ((max(B, 8) + 7) // 8) * 8           # pad batch to f32 sublane tile
    pad_b = Bp - B

    # Time-major rows so each step's (Bp, E) slab is a contiguous row block.
    x_tbe = jnp.transpose(lstm_inputs, (1, 0, 2))                     # (T, B, E)
    x_tbe = jnp.pad(x_tbe, ((0, 0), (0, pad_b), (0, 0)))
    x_flat = x_tbe.reshape(T * Bp, E)                                 # single copy of x

    lens_p = jnp.pad(lens.astype(jnp.int32), (0, pad_b)).reshape(Bp, 1)

    # Direction-contiguous fused input weights/bias (no zero blocks).
    wx = jnp.concatenate([params["wih"][0], params["wih"][1]], axis=-1)   # (E, 8H)
    bc = jnp.concatenate([params["b"][0], params["b"][1]], axis=-1)       # (1, 8H)
    whh = params["whh"]                                                   # (2, H, 4H)

    h0p = jnp.pad(h0, ((0, 0), (0, pad_b), (0, 0)))                       # (2, Bp, H)
    c0p = jnp.pad(c0, ((0, 0), (0, pad_b), (0, 0)))

    vmem_spec = pl.BlockSpec(memory_space=pltpu.MemorySpace.VMEM)
    out_f, out_b = pl.pallas_call(
        _bilstm_kernel,
        out_shape=(jax.ShapeDtypeStruct((T, Bp, H), jnp.float32),
                   jax.ShapeDtypeStruct((T, Bp, H), jnp.float32)),
        in_specs=[pl.BlockSpec(memory_space=pltpu.MemorySpace.VMEM)
                  for _ in range(7)],
        out_specs=(vmem_spec, pl.BlockSpec(memory_space=pltpu.MemorySpace.VMEM)),
        scratch_shapes=[pltpu.VMEM((T * Bp, 8 * H), jnp.float32)],
        compiler_params=pltpu.CompilerParams(
            vmem_limit_bytes=32 * 1024 * 1024),
    )(x_flat, lens_p, wx, whh, bc, h0p, c0p)

    # Both halves are already in true time order: one concat + batch-first
    # transpose (no output reversal pass).
    out = jnp.concatenate([out_f[:, :B, :], out_b[:, :B, :]], axis=-1)    # (T, B, 2H)
    out = jnp.transpose(out, (1, 0, 2))                                   # (B, T, 2H)
    # nn.Dropout(0.3) -> identity in eval mode.
    return out


def _ref_bilstm(params, x_bte, lens, h0, c0):
    """Pure-JAX reference matching PyTorch packed BiLSTM + pad_packed_sequence."""
    B, T, E = x_bte.shape
    H = h0.shape[-1]
    wih, whh, b = params["wih"], params["whh"], params["b"]
    mask = (jnp.arange(T)[None, :] < lens[:, None]).astype(jnp.float32)  # (B, T)
    hp = jax.lax.Precision.HIGHEST

    def run_dir(d, time_order):
        h, c = h0[d], c0[d]
        outs = {}
        for t in time_order:
            xt = x_bte[:, t]
            m = mask[:, t][:, None]
            gates = (jnp.dot(xt, wih[d], precision=hp)
                     + jnp.dot(h, whh[d], precision=hp) + b[d])
            i_g = jax.nn.sigmoid(gates[:, :H])
            f_g = jax.nn.sigmoid(gates[:, H:2 * H])
            g_g = jnp.tanh(gates[:, 2 * H:3 * H])
            o_g = jax.nn.sigmoid(gates[:, 3 * H:])
            cn = f_g * c + i_g * g_g
            hn = o_g * jnp.tanh(cn)
            h = m * hn + (1 - m) * h
            c = m * cn + (1 - m) * c
            outs[t] = hn * m
        return outs

    fwd = run_dir(0, range(T))
    bwd = run_dir(1, range(T - 1, -1, -1))
    return jnp.stack(
        [jnp.concatenate([fwd[t], bwd[t]], axis=-1) for t in range(T)], axis=1)


def init_params(key, E, H):
    k = 1.0 / jnp.sqrt(jnp.float32(H))
    k1, k2, k3, k4 = jax.random.split(key, 4)
    wih = jax.random.uniform(k1, (2, E, 4 * H), jnp.float32, -k, k)
    whh = jax.random.uniform(k2, (2, H, 4 * H), jnp.float32, -k, k)
    b_ih = jax.random.uniform(k3, (2, 1, 4 * H), jnp.float32, -k, k)
    b_hh = jax.random.uniform(k4, (2, 1, 4 * H), jnp.float32, -k, k)
    return {"wih": wih, "whh": whh, "b": b_ih + b_hh}


if __name__ == "__main__":
    B, T, E, H = 2, 8, 16, 32  # batch, max seq len, embedding_size, config.lstm_hidden

    root = jax.random.PRNGKey(0)
    kp, kx, kh, kc = jax.random.split(root, 4)

    params = init_params(kp, E, H)
    lstm_inputs = jax.random.normal(kx, (B, T, E), jnp.float32)   # padded batch_first
    lens = jnp.array([T, T - 3], dtype=jnp.int32)                 # variable lengths
    h0 = jax.random.normal(kh, (2, B, H), jnp.float32)
    c0 = jax.random.normal(kc, (2, B, H), jnp.float32)

    # zero-out padding region of the inputs (pack_padded_sequence ignores it)
    in_mask = (jnp.arange(T)[None, :, None] < lens[:, None, None]).astype(jnp.float32)
    lstm_inputs = lstm_inputs * in_mask

    fwd_fn = jax.jit(sentence_extractor_forward)
    out = fwd_fn(params, lstm_inputs, lens, (h0, c0))
    out = jax.block_until_ready(out)

    ref = _ref_bilstm(params, lstm_inputs, lens, h0, c0)
    assert out.shape == (B, T, 2 * H), out.shape
    max_err = float(jnp.abs(out - ref).max())
    assert jnp.allclose(out, ref, atol=1e-4, rtol=1e-4), max_err

    print("KERNEL_OK")
</pallas_src>

<mosaic_0001>
module attributes {stable_mosaic.version = 11 : i64} {
  func.func @_bilstm_kernel(%arg0: memref<64x16xf32, #tpu.memory_space<vmem>>, %arg1: memref<8x1xi32, #tpu.memory_space<vmem>>, %arg2: memref<16x256xf32, #tpu.memory_space<vmem>>, %arg3: memref<2x32x128xf32, #tpu.memory_space<vmem>>, %arg4: memref<1x256xf32, #tpu.memory_space<vmem>>, %arg5: memref<2x8x32xf32, #tpu.memory_space<vmem>>, %arg6: memref<2x8x32xf32, #tpu.memory_space<vmem>>, %arg7: memref<8x8x32xf32, #tpu.memory_space<vmem>>, %arg8: memref<8x8x32xf32, #tpu.memory_space<vmem>>, %arg9: memref<64x256xf32, #tpu.memory_space<vmem>>) attributes {dimension_semantics = [], scalar_prefetch = 0 : i64, scratch_operands = 1 : i64, tpu.core_type = #tpu.core_type<tc>} {
    %c0 = arith.constant 0 : index
    %c0_0 = arith.constant 0 : index
    %0 = vector.load %arg0[%c0, %c0_0] : memref<64x16xf32, #tpu.memory_space<vmem>>, vector<64x16xf32>
    %c0_1 = arith.constant 0 : index
    %c0_2 = arith.constant 0 : index
    %1 = vector.load %arg2[%c0_1, %c0_2] : memref<16x256xf32, #tpu.memory_space<vmem>>, vector<16x256xf32>
    %cst = arith.constant dense<0.000000e+00> : vector<64x256xf32>
    %2 = tpu.matmul %0, %1, %cst {dimension_numbers = #tpu.dot_dimension_numbers<[1], [0], [0], [1], [0, 0, 1, 1], [], []>} : vector<64x16xf32>, vector<16x256xf32>, vector<64x256xf32> -> vector<64x256xf32>
    %c0_3 = arith.constant 0 : index
    %c0_4 = arith.constant 0 : index
    %3 = vector.load %arg4[%c0_3, %c0_4] : memref<1x256xf32, #tpu.memory_space<vmem>>, vector<1x256xf32>
    %4 = vector.broadcast %3 : vector<1x256xf32> to vector<64x256xf32>
    %5 = arith.addf %2, %4 : vector<64x256xf32>
    %c0_5 = arith.constant 0 : index
    %c0_6 = arith.constant 0 : index
    %6 = vector.load %arg9[%c0_5, %c0_6] : memref<64x256xf32, #tpu.memory_space<vmem>>, vector<64x256xf32>
    tpu.vector_store %arg9[%c0_5, %c0_6], %5 {strides = array<i32>} : memref<64x256xf32, #tpu.memory_space<vmem>>, vector<64x256xf32>,
    %c0_7 = arith.constant 0 : index
    %c0_8 = arith.constant 0 : index
    %7 = vector.load %arg1[%c0_7, %c0_8] : memref<8x1xi32, #tpu.memory_space<vmem>>, vector<8x1xi32>
    %c0_9 = arith.constant 0 : index
    %c0_10 = arith.constant 0 : index
    %c0_11 = arith.constant 0 : index
    %8 = vector.load %arg3[%c0_9, %c0_10, %c0_11] : memref<2x32x128xf32, #tpu.memory_space<vmem>>, vector<1x32x128xf32>
    %9 = vector.shape_cast %8 : vector<1x32x128xf32> to vector<32x128xf32>
    %c1 = arith.constant 1 : index
    %c0_12 = arith.constant 0 : index
    %c0_13 = arith.constant 0 : index
    %10 = vector.load %arg3[%c1, %c0_12, %c0_13] : memref<2x32x128xf32, #tpu.memory_space<vmem>>, vector<1x32x128xf32>
    %11 = vector.shape_cast %10 : vector<1x32x128xf32> to vector<32x128xf32>
    %c0_14 = arith.constant 0 : index
    %c0_15 = arith.constant 0 : index
    %c0_16 = arith.constant 0 : index
    %12 = vector.load %arg5[%c0_14, %c0_15, %c0_16] : memref<2x8x32xf32, #tpu.memory_space<vmem>>, vector<1x8x32xf32>
    %13 = vector.shape_cast %12 : vector<1x8x32xf32> to vector<8x32xf32>
    %c0_17 = arith.constant 0 : index
    %c0_18 = arith.constant 0 : index
    %c0_19 = arith.constant 0 : index
    %14 = vector.load %arg6[%c0_17, %c0_18, %c0_19] : memref<2x8x32xf32, #tpu.memory_space<vmem>>, vector<1x8x32xf32>
    %15 = vector.shape_cast %14 : vector<1x8x32xf32> to vector<8x32xf32>
    %c1_20 = arith.constant 1 : index
    %c0_21 = arith.constant 0 : index
    %c0_22 = arith.constant 0 : index
    %16 = vector.load %arg5[%c1_20, %c0_21, %c0_22] : memref<2x8x32xf32, #tpu.memory_space<vmem>>, vector<1x8x32xf32>
    %17 = vector.shape_cast %16 : vector<1x8x32xf32> to vector<8x32xf32>
    %c1_23 = arith.constant 1 : index
    %c0_24 = arith.constant 0 : index
    %c0_25 = arith.constant 0 : index
    %18 = vector.load %arg6[%c1_23, %c0_24, %c0_25] : memref<2x8x32xf32, #tpu.memory_space<vmem>>, vector<1x8x32xf32>
    %19 = vector.shape_cast %18 : vector<1x8x32xf32> to vector<8x32xf32>
    %c0_26 = arith.constant 0 : index
    %c0_27 = arith.constant 0 : index
    %20 = vector.load %arg9[%c0_26, %c0_27] : memref<64x256xf32, #tpu.memory_space<vmem>>, vector<8x128xf32>
    %cst_28 = arith.constant dense<0.000000e+00> : vector<8x128xf32>
    %21 = tpu.matmul %13, %9, %cst_28 {dimension_numbers = #tpu.dot_dimension_numbers<[1], [0], [0], [1], [0, 0, 1, 1], [], []>} : vector<8x32xf32>, vector<32x128xf32>, vector<8x128xf32> -> vector<8x128xf32>
    %22 = arith.addf %20, %21 : vector<8x128xf32>
    %23 = vector.extract_strided_slice %22 {offsets = [0, 0], sizes = [8, 32], strides = [1, 1]} : vector<8x128xf32> to vector<8x32xf32>
    %24 = arith.negf %23 : vector<8x32xf32>
    %25 = math.exp %24 : vector<8x32xf32>
    %cst_29 = arith.constant 1.000000e+00 : f32
    %26 = vector.broadcast %cst_29 : f32 to vector<8x32xf32>
    %27 = arith.addf %26, %25 : vector<8x32xf32>
    %28 = arith.divf %26, %27 : vector<8x32xf32>
    %29 = vector.extract_strided_slice %22 {offsets = [0, 32], sizes = [8, 32], strides = [1, 1]} : vector<8x128xf32> to vector<8x32xf32>
    %30 = arith.negf %29 : vector<8x32xf32>
    %31 = math.exp %30 : vector<8x32xf32>
    %cst_30 = arith.constant 1.000000e+00 : f32
    %32 = vector.broadcast %cst_30 : f32 to vector<8x32xf32>
    %33 = arith.addf %32, %31 : vector<8x32xf32>
    %34 = arith.divf %32, %33 : vector<8x32xf32>
    %35 = vector.extract_strided_slice %22 {offsets = [0, 64], sizes = [8, 32], strides = [1, 1]} : vector<8x128xf32> to vector<8x32xf32>
    %36 = math.tanh %35 : vector<8x32xf32>
    %37 = vector.extract_strided_slice %22 {offsets = [0, 96], sizes = [8, 32], strides = [1, 1]} : vector<8x128xf32> to vector<8x32xf32>
    %38 = arith.negf %37 : vector<8x32xf32>
    %39 = math.exp %38 : vector<8x32xf32>
    %cst_31 = arith.constant 1.000000e+00 : f32
    %40 = vector.broadcast %cst_31 : f32 to vector<8x32xf32>
    %41 = arith.addf %40, %39 : vector<8x32xf32>
    %42 = arith.divf %40, %41 : vector<8x32xf32>
    %43 = arith.mulf %34, %15 : vector<8x32xf32>
    %44 = arith.mulf %28, %36 : vector<8x32xf32>
    %45 = arith.addf %43, %44 : vector<8x32xf32>
    %46 = math.tanh %45 : vector<8x32xf32>
    %47 = arith.mulf %42, %46 : vector<8x32xf32>
    %c0_i32 = arith.constant 0 : i32
    %48 = vector.broadcast %c0_i32 : i32 to vector<8x1xi32>
    %49 = arith.cmpi sgt, %7, %48 : vector<8x1xi32>
    %50 = vector.shape_cast %49 : vector<8x1xi1> to vector<8x1xi1>
    %51 = vector.broadcast %50 : vector<8x1xi1> to vector<8x32xi1>
    %52 = arith.select %51, %47, %13 : vector<8x32xi1>, vector<8x32xf32>
    %53 = vector.shape_cast %49 : vector<8x1xi1> to vector<8x1xi1>
    %54 = vector.broadcast %53 : vector<8x1xi1> to vector<8x32xi1>
    %55 = arith.select %54, %45, %15 : vector<8x32xi1>, vector<8x32xf32>
    %cst_32 = arith.constant 0.000000e+00 : f32
    %56 = vector.shape_cast %49 : vector<8x1xi1> to vector<8x1xi1>
    %57 = vector.broadcast %56 : vector<8x1xi1> to vector<8x32xi1>
    %58 = vector.broadcast %cst_32 : f32 to vector<8x32xf32>
    %59 = arith.select %57, %47, %58 : vector<8x32xi1>, vector<8x32xf32>
    %c0_33 = arith.constant 0 : index
    %c0_34 = arith.constant 0 : index
    %c0_35 = arith.constant 0 : index
    %60 = vector.load %arg7[%c0_33, %c0_34, %c0_35] : memref<8x8x32xf32, #tpu.memory_space<vmem>>, vector<1x8x32xf32>
    %61 = vector.shape_cast %60 : vector<1x8x32xf32> to vector<8x32xf32>
    %62 = vector.shape_cast %59 : vector<8x32xf32> to vector<1x8x32xf32>
    tpu.vector_store %arg7[%c0_33, %c0_34, %c0_35], %62 {strides = array<i32>} : memref<8x8x32xf32, #tpu.memory_space<vmem>>, vector<1x8x32xf32>,
    %c56 = arith.constant 56 : index
    %c128 = arith.constant 128 : index
    %63 = vector.load %arg9[%c56, %c128] : memref<64x256xf32, #tpu.memory_space<vmem>>, vector<8x128xf32>
    %cst_36 = arith.constant dense<0.000000e+00> : vector<8x128xf32>
    %64 = tpu.matmul %17, %11, %cst_36 {dimension_numbers = #tpu.dot_dimension_numbers<[1], [0], [0], [1], [0, 0, 1, 1], [], []>} : vector<8x32xf32>, vector<32x128xf32>, vector<8x128xf32> -> vector<8x128xf32>
    %65 = arith.addf %63, %64 : vector<8x128xf32>
    %66 = vector.extract_strided_slice %65 {offsets = [0, 0], sizes = [8, 32], strides = [1, 1]} : vector<8x128xf32> to vector<8x32xf32>
    %67 = arith.negf %66 : vector<8x32xf32>
    %68 = math.exp %67 : vector<8x32xf32>
    %cst_37 = arith.constant 1.000000e+00 : f32
    %69 = vector.broadcast %cst_37 : f32 to vector<8x32xf32>
    %70 = arith.addf %69, %68 : vector<8x32xf32>
    %71 = arith.divf %69, %70 : vector<8x32xf32>
    %72 = vector.extract_strided_slice %65 {offsets = [0, 32], sizes = [8, 32], strides = [1, 1]} : vector<8x128xf32> to vector<8x32xf32>
    %73 = arith.negf %72 : vector<8x32xf32>
    %74 = math.exp %73 : vector<8x32xf32>
    %cst_38 = arith.constant 1.000000e+00 : f32
    %75 = vector.broadcast %cst_38 : f32 to vector<8x32xf32>
    %76 = arith.addf %75, %74 : vector<8x32xf32>
    %77 = arith.divf %75, %76 : vector<8x32xf32>
    %78 = vector.extract_strided_slice %65 {offsets = [0, 64], sizes = [8, 32], strides = [1, 1]} : vector<8x128xf32> to vector<8x32xf32>
    %79 = math.tanh %78 : vector<8x32xf32>
    %80 = vector.extract_strided_slice %65 {offsets = [0, 96], sizes = [8, 32], strides = [1, 1]} : vector<8x128xf32> to vector<8x32xf32>
    %81 = arith.negf %80 : vector<8x32xf32>
    %82 = math.exp %81 : vector<8x32xf32>
    %cst_39 = arith.constant 1.000000e+00 : f32
    %83 = vector.broadcast %cst_39 : f32 to vector<8x32xf32>
    %84 = arith.addf %83, %82 : vector<8x32xf32>
    %85 = arith.divf %83, %84 : vector<8x32xf32>
    %86 = arith.mulf %77, %19 : vector<8x32xf32>
    %87 = arith.mulf %71, %79 : vector<8x32xf32>
    %88 = arith.addf %86, %87 : vector<8x32xf32>
    %89 = math.tanh %88 : vector<8x32xf32>
    %90 = arith.mulf %85, %89 : vector<8x32xf32>
    %c7_i32 = arith.constant 7 : i32
    %91 = vector.broadcast %c7_i32 : i32 to vector<8x1xi32>
    %92 = arith.cmpi sgt, %7, %91 : vector<8x1xi32>
    %93 = vector.shape_cast %92 : vector<8x1xi1> to vector<8x1xi1>
    %94 = vector.broadcast %93 : vector<8x1xi1> to vector<8x32xi1>
    %95 = arith.select %94, %90, %17 : vector<8x32xi1>, vector<8x32xf32>
    %96 = vector.shape_cast %92 : vector<8x1xi1> to vector<8x1xi1>
    %97 = vector.broadcast %96 : vector<8x1xi1> to vector<8x32xi1>
    %98 = arith.select %97, %88, %19 : vector<8x32xi1>, vector<8x32xf32>
    %cst_40 = arith.constant 0.000000e+00 : f32
    %99 = vector.shape_cast %92 : vector<8x1xi1> to vector<8x1xi1>
    %100 = vector.broadcast %99 : vector<8x1xi1> to vector<8x32xi1>
    %101 = vector.broadcast %cst_40 : f32 to vector<8x32xf32>
    %102 = arith.select %100, %90, %101 : vector<8x32xi1>, vector<8x32xf32>
    %c7 = arith.constant 7 : index
    %c0_41 = arith.constant 0 : index
    %c0_42 = arith.constant 0 : index
    %103 = vector.load %arg8[%c7, %c0_41, %c0_42] : memref<8x8x32xf32, #tpu.memory_space<vmem>>, vector<1x8x32xf32>
    %104 = vector.shape_cast %103 : vector<1x8x32xf32> to vector<8x32xf32>
    %105 = vector.shape_cast %102 : vector<8x32xf32> to vector<1x8x32xf32>
    tpu.vector_store %arg8[%c7, %c0_41, %c0_42], %105 {strides = array<i32>} : memref<8x8x32xf32, #tpu.memory_space<vmem>>, vector<1x8x32xf32>,
    %c8 = arith.constant 8 : index
    %c0_43 = arith.constant 0 : index
    %106 = vector.load %arg9[%c8, %c0_43] : memref<64x256xf32, #tpu.memory_space<vmem>>, vector<8x128xf32>
    %cst_44 = arith.constant dense<0.000000e+00> : vector<8x128xf32>
    %107 = tpu.matmul %52, %9, %cst_44 {dimension_numbers = #tpu.dot_dimension_numbers<[1], [0], [0], [1], [0, 0, 1, 1], [], []>} : vector<8x32xf32>, vector<32x128xf32>, vector<8x128xf32> -> vector<8x128xf32>
    %108 = arith.addf %106, %107 : vector<8x128xf32>
    %109 = vector.extract_strided_slice %108 {offsets = [0, 0], sizes = [8, 32], strides = [1, 1]} : vector<8x128xf32> to vector<8x32xf32>
    %110 = arith.negf %109 : vector<8x32xf32>
    %111 = math.exp %110 : vector<8x32xf32>
    %cst_45 = arith.constant 1.000000e+00 : f32
    %112 = vector.broadcast %cst_45 : f32 to vector<8x32xf32>
    %113 = arith.addf %112, %111 : vector<8x32xf32>
    %114 = arith.divf %112, %113 : vector<8x32xf32>
    %115 = vector.extract_strided_slice %108 {offsets = [0, 32], sizes = [8, 32], strides = [1, 1]} : vector<8x128xf32> to vector<8x32xf32>
    %116 = arith.negf %115 : vector<8x32xf32>
    %117 = math.exp %116 : vector<8x32xf32>
    %cst_46 = arith.constant 1.000000e+00 : f32
    %118 = vector.broadcast %cst_46 : f32 to vector<8x32xf32>
    %119 = arith.addf %118, %117 : vector<8x32xf32>
    %120 = arith.divf %118, %119 : vector<8x32xf32>
    %121 = vector.extract_strided_slice %108 {offsets = [0, 64], sizes = [8, 32], strides = [1, 1]} : vector<8x128xf32> to vector<8x32xf32>
    %122 = math.tanh %121 : vector<8x32xf32>
    %123 = vector.extract_strided_slice %108 {offsets = [0, 96], sizes = [8, 32], strides = [1, 1]} : vector<8x128xf32> to vector<8x32xf32>
    %124 = arith.negf %123 : vector<8x32xf32>
    %125 = math.exp %124 : vector<8x32xf32>
    %cst_47 = arith.constant 1.000000e+00 : f32
    %126 = vector.broadcast %cst_47 : f32 to vector<8x32xf32>
    %127 = arith.addf %126, %125 : vector<8x32xf32>
    %128 = arith.divf %126, %127 : vector<8x32xf32>
    %129 = arith.mulf %120, %55 : vector<8x32xf32>
    %130 = arith.mulf %114, %122 : vector<8x32xf32>
    %131 = arith.addf %129, %130 : vector<8x32xf32>
    %132 = math.tanh %131 : vector<8x32xf32>
    %133 = arith.mulf %128, %132 : vector<8x32xf32>
    %c1_i32 = arith.constant 1 : i32
    %134 = vector.broadcast %c1_i32 : i32 to vector<8x1xi32>
    %135 = arith.cmpi sgt, %7, %134 : vector<8x1xi32>
    %136 = vector.shape_cast %135 : vector<8x1xi1> to vector<8x1xi1>
    %137 = vector.broadcast %136 : vector<8x1xi1> to vector<8x32xi1>
    %138 = arith.select %137, %133, %52 : vector<8x32xi1>, vector<8x32xf32>
    %139 = vector.shape_cast %135 : vector<8x1xi1> to vector<8x1xi1>
    %140 = vector.broadcast %139 : vector<8x1xi1> to vector<8x32xi1>
    %141 = arith.select %140, %131, %55 : vector<8x32xi1>, vector<8x32xf32>
    %cst_48 = arith.constant 0.000000e+00 : f32
    %142 = vector.shape_cast %135 : vector<8x1xi1> to vector<8x1xi1>
    %143 = vector.broadcast %142 : vector<8x1xi1> to vector<8x32xi1>
    %144 = vector.broadcast %cst_48 : f32 to vector<8x32xf32>
    %145 = arith.select %143, %133, %144 : vector<8x32xi1>, vector<8x32xf32>
    %c1_49 = arith.constant 1 : index
    %c0_50 = arith.constant 0 : index
    %c0_51 = arith.constant 0 : index
    %146 = vector.load %arg7[%c1_49, %c0_50, %c0_51] : memref<8x8x32xf32, #tpu.memory_space<vmem>>, vector<1x8x32xf32>
    %147 = vector.shape_cast %146 : vector<1x8x32xf32> to vector<8x32xf32>
    %148 = vector.shape_cast %145 : vector<8x32xf32> to vector<1x8x32xf32>
    tpu.vector_store %arg7[%c1_49, %c0_50, %c0_51], %148 {strides = array<i32>} : memref<8x8x32xf32, #tpu.memory_space<vmem>>, vector<1x8x32xf32>,
    %c48 = arith.constant 48 : index
    %c128_52 = arith.constant 128 : index
    %149 = vector.load %arg9[%c48, %c128_52] : memref<64x256xf32, #tpu.memory_space<vmem>>, vector<8x128xf32>
    %cst_53 = arith.constant dense<0.000000e+00> : vector<8x128xf32>
    %150 = tpu.matmul %95, %11, %cst_53 {dimension_numbers = #tpu.dot_dimension_numbers<[1], [0], [0], [1], [0, 0, 1, 1], [], []>} : vector<8x32xf32>, vector<32x128xf32>, vector<8x128xf32> -> vector<8x128xf32>
    %151 = arith.addf %149, %150 : vector<8x128xf32>
    %152 = vector.extract_strided_slice %151 {offsets = [0, 0], sizes = [8, 32], strides = [1, 1]} : vector<8x128xf32> to vector<8x32xf32>
    %153 = arith.negf %152 : vector<8x32xf32>
    %154 = math.exp %153 : vector<8x32xf32>
    %cst_54 = arith.constant 1.000000e+00 : f32
    %155 = vector.broadcast %cst_54 : f32 to vector<8x32xf32>
    %156 = arith.addf %155, %154 : vector<8x32xf32>
    %157 = arith.divf %155, %156 : vector<8x32xf32>
    %158 = vector.extract_strided_slice %151 {offsets = [0, 32], sizes = [8, 32], strides = [1, 1]} : vector<8x128xf32> to vector<8x32xf32>
    %159 = arith.negf %158 : vector<8x32xf32>
    %160 = math.exp %159 : vector<8x32xf32>
    %cst_55 = arith.constant 1.000000e+00 : f32
    %161 = vector.broadcast %cst_55 : f32 to vector<8x32xf32>
    %162 = arith.addf %161, %160 : vector<8x32xf32>
    %163 = arith.divf %161, %162 : vector<8x32xf32>
    %164 = vector.extract_strided_slice %151 {offsets = [0, 64], sizes = [8, 32], strides = [1, 1]} : vector<8x128xf32> to vector<8x32xf32>
    %165 = math.tanh %164 : vector<8x32xf32>
    %166 = vector.extract_strided_slice %151 {offsets = [0, 96], sizes = [8, 32], strides = [1, 1]} : vector<8x128xf32> to vector<8x32xf32>
    %167 = arith.negf %166 : vector<8x32xf32>
    %168 = math.exp %167 : vector<8x32xf32>
    %cst_56 = arith.constant 1.000000e+00 : f32
    %169 = vector.broadcast %cst_56 : f32 to vector<8x32xf32>
    %170 = arith.addf %169, %168 : vector<8x32xf32>
    %171 = arith.divf %169, %170 : vector<8x32xf32>
    %172 = arith.mulf %163, %98 : vector<8x32xf32>
    %173 = arith.mulf %157, %165 : vector<8x32xf32>
    %174 = arith.addf %172, %173 : vector<8x32xf32>
    %175 = math.tanh %174 : vector<8x32xf32>
    %176 = arith.mulf %171, %175 : vector<8x32xf32>
    %c6_i32 = arith.constant 6 : i32
    %177 = vector.broadcast %c6_i32 : i32 to vector<8x1xi32>
    %178 = arith.cmpi sgt, %7, %177 : vector<8x1xi32>
    %179 = vector.shape_cast %178 : vector<8x1xi1> to vector<8x1xi1>
    %180 = vector.broadcast %179 : vector<8x1xi1> to vector<8x32xi1>
    %181 = arith.select %180, %176, %95 : vector<8x32xi1>, vector<8x32xf32>
    %182 = vector.shape_cast %178 : vector<8x1xi1> to vector<8x1xi1>
    %183 = vector.broadcast %182 : vector<8x1xi1> to vector<8x32xi1>
    %184 = arith.select %183, %174, %98 : vector<8x32xi1>, vector<8x32xf32>
    %cst_57 = arith.constant 0.000000e+00 : f32
    %185 = vector.shape_cast %178 : vector<8x1xi1> to vector<8x1xi1>
    %186 = vector.broadcast %185 : vector<8x1xi1> to vector<8x32xi1>
    %187 = vector.broadcast %cst_57 : f32 to vector<8x32xf32>
    %188 = arith.select %186, %176, %187 : vector<8x32xi1>, vector<8x32xf32>
    %c6 = arith.constant 6 : index
    %c0_58 = arith.constant 0 : index
    %c0_59 = arith.constant 0 : index
    %189 = vector.load %arg8[%c6, %c0_58, %c0_59] : memref<8x8x32xf32, #tpu.memory_space<vmem>>, vector<1x8x32xf32>
    %190 = vector.shape_cast %189 : vector<1x8x32xf32> to vector<8x32xf32>
    %191 = vector.shape_cast %188 : vector<8x32xf32> to vector<1x8x32xf32>
    tpu.vector_store %arg8[%c6, %c0_58, %c0_59], %191 {strides = array<i32>} : memref<8x8x32xf32, #tpu.memory_space<vmem>>, vector<1x8x32xf32>,
    %c16 = arith.constant 16 : index
    %c0_60 = arith.constant 0 : index
    %192 = vector.load %arg9[%c16, %c0_60] : memref<64x256xf32, #tpu.memory_space<vmem>>, vector<8x128xf32>
    %cst_61 = arith.constant dense<0.000000e+00> : vector<8x128xf32>
    %193 = tpu.matmul %138, %9, %cst_61 {dimension_numbers = #tpu.dot_dimension_numbers<[1], [0], [0], [1], [0, 0, 1, 1], [], []>} : vector<8x32xf32>, vector<32x128xf32>, vector<8x128xf32> -> vector<8x128xf32>
    %194 = arith.addf %192, %193 : vector<8x128xf32>
    %195 = vector.extract_strided_slice %194 {offsets = [0, 0], sizes = [8, 32], strides = [1, 1]} : vector<8x128xf32> to vector<8x32xf32>
    %196 = arith.negf %195 : vector<8x32xf32>
    %197 = math.exp %196 : vector<8x32xf32>
    %cst_62 = arith.constant 1.000000e+00 : f32
    %198 = vector.broadcast %cst_62 : f32 to vector<8x32xf32>
    %199 = arith.addf %198, %197 : vector<8x32xf32>
    %200 = arith.divf %198, %199 : vector<8x32xf32>
    %201 = vector.extract_strided_slice %194 {offsets = [0, 32], sizes = [8, 32], strides = [1, 1]} : vector<8x128xf32> to vector<8x32xf32>
    %202 = arith.negf %201 : vector<8x32xf32>
    %203 = math.exp %202 : vector<8x32xf32>
    %cst_63 = arith.constant 1.000000e+00 : f32
    %204 = vector.broadcast %cst_63 : f32 to vector<8x32xf32>
    %205 = arith.addf %204, %203 : vector<8x32xf32>
    %206 = arith.divf %204, %205 : vector<8x32xf32>
    %207 = vector.extract_strided_slice %194 {offsets = [0, 64], sizes = [8, 32], strides = [1, 1]} : vector<8x128xf32> to vector<8x32xf32>
    %208 = math.tanh %207 : vector<8x32xf32>
    %209 = vector.extract_strided_slice %194 {offsets = [0, 96], sizes = [8, 32], strides = [1, 1]} : vector<8x128xf32> to vector<8x32xf32>
    %210 = arith.negf %209 : vector<8x32xf32>
    %211 = math.exp %210 : vector<8x32xf32>
    %cst_64 = arith.constant 1.000000e+00 : f32
    %212 = vector.broadcast %cst_64 : f32 to vector<8x32xf32>
    %213 = arith.addf %212, %211 : vector<8x32xf32>
    %214 = arith.divf %212, %213 : vector<8x32xf32>
    %215 = arith.mulf %206, %141 : vector<8x32xf32>
    %216 = arith.mulf %200, %208 : vector<8x32xf32>
    %217 = arith.addf %215, %216 : vector<8x32xf32>
    %218 = math.tanh %217 : vector<8x32xf32>
    %219 = arith.mulf %214, %218 : vector<8x32xf32>
    %c2_i32 = arith.constant 2 : i32
    %220 = vector.broadcast %c2_i32 : i32 to vector<8x1xi32>
    %221 = arith.cmpi sgt, %7, %220 : vector<8x1xi32>
    %222 = vector.shape_cast %221 : vector<8x1xi1> to vector<8x1xi1>
    %223 = vector.broadcast %222 : vector<8x1xi1> to vector<8x32xi1>
    %224 = arith.select %223, %219, %138 : vector<8x32xi1>, vector<8x32xf32>
    %225 = vector.shape_cast %221 : vector<8x1xi1> to vector<8x1xi1>
    %226 = vector.broadcast %225 : vector<8x1xi1> to vector<8x32xi1>
    %227 = arith.select %226, %217, %141 : vector<8x32xi1>, vector<8x32xf32>
    %cst_65 = arith.constant 0.000000e+00 : f32
    %228 = vector.shape_cast %221 : vector<8x1xi1> to vector<8x1xi1>
    %229 = vector.broadcast %228 : vector<8x1xi1> to vector<8x32xi1>
    %230 = vector.broadcast %cst_65 : f32 to vector<8x32xf32>
    %231 = arith.select %229, %219, %230 : vector<8x32xi1>, vector<8x32xf32>
    %c2 = arith.constant 2 : index
    %c0_66 = arith.constant 0 : index
    %c0_67 = arith.constant 0 : index
    %232 = vector.load %arg7[%c2, %c0_66, %c0_67] : memref<8x8x32xf32, #tpu.memory_space<vmem>>, vector<1x8x32xf32>
    %233 = vector.shape_cast %232 : vector<1x8x32xf32> to vector<8x32xf32>
    %234 = vector.shape_cast %231 : vector<8x32xf32> to vector<1x8x32xf32>
    tpu.vector_store %arg7[%c2, %c0_66, %c0_67], %234 {strides = array<i32>} : memref<8x8x32xf32, #tpu.memory_space<vmem>>, vector<1x8x32xf32>,
    %c40 = arith.constant 40 : index
    %c128_68 = arith.constant 128 : index
    %235 = vector.load %arg9[%c40, %c128_68] : memref<64x256xf32, #tpu.memory_space<vmem>>, vector<8x128xf32>
    %cst_69 = arith.constant dense<0.000000e+00> : vector<8x128xf32>
    %236 = tpu.matmul %181, %11, %cst_69 {dimension_numbers = #tpu.dot_dimension_numbers<[1], [0], [0], [1], [0, 0, 1, 1], [], []>} : vector<8x32xf32>, vector<32x128xf32>, vector<8x128xf32> -> vector<8x128xf32>
    %237 = arith.addf %235, %236 : vector<8x128xf32>
    %238 = vector.extract_strided_slice %237 {offsets = [0, 0], sizes = [8, 32], strides = [1, 1]} : vector<8x128xf32> to vector<8x32xf32>
    %239 = arith.negf %238 : vector<8x32xf32>
    %240 = math.exp %239 : vector<8x32xf32>
    %cst_70 = arith.constant 1.000000e+00 : f32
    %241 = vector.broadcast %cst_70 : f32 to vector<8x32xf32>
    %242 = arith.addf %241, %240 : vector<8x32xf32>
    %243 = arith.divf %241, %242 : vector<8x32xf32>
    %244 = vector.extract_strided_slice %237 {offsets = [0, 32], sizes = [8, 32], strides = [1, 1]} : vector<8x128xf32> to vector<8x32xf32>
    %245 = arith.negf %244 : vector<8x32xf32>
    %246 = math.exp %245 : vector<8x32xf32>
    %cst_71 = arith.constant 1.000000e+00 : f32
    %247 = vector.broadcast %cst_71 : f32 to vector<8x32xf32>
    %248 = arith.addf %247, %246 : vector<8x32xf32>
    %249 = arith.divf %247, %248 : vector<8x32xf32>
    %250 = vector.extract_strided_slice %237 {offsets = [0, 64], sizes = [8, 32], strides = [1, 1]} : vector<8x128xf32> to vector<8x32xf32>
    %251 = math.tanh %250 : vector<8x32xf32>
    %252 = vector.extract_strided_slice %237 {offsets = [0, 96], sizes = [8, 32], strides = [1, 1]} : vector<8x128xf32> to vector<8x32xf32>
    %253 = arith.negf %252 : vector<8x32xf32>
    %254 = math.exp %253 : vector<8x32xf32>
    %cst_72 = arith.constant 1.000000e+00 : f32
    %255 = vector.broadcast %cst_72 : f32 to vector<8x32xf32>
    %256 = arith.addf %255, %254 : vector<8x32xf32>
    %257 = arith.divf %255, %256 : vector<8x32xf32>
    %258 = arith.mulf %249, %184 : vector<8x32xf32>
    %259 = arith.mulf %243, %251 : vector<8x32xf32>
    %260 = arith.addf %258, %259 : vector<8x32xf32>
    %261 = math.tanh %260 : vector<8x32xf32>
    %262 = arith.mulf %257, %261 : vector<8x32xf32>
    %c5_i32 = arith.constant 5 : i32
    %263 = vector.broadcast %c5_i32 : i32 to vector<8x1xi32>
    %264 = arith.cmpi sgt, %7, %263 : vector<8x1xi32>
    %265 = vector.shape_cast %264 : vector<8x1xi1> to vector<8x1xi1>
    %266 = vector.broadcast %265 : vector<8x1xi1> to vector<8x32xi1>
    %267 = arith.select %266, %262, %181 : vector<8x32xi1>, vector<8x32xf32>
    %268 = vector.shape_cast %264 : vector<8x1xi1> to vector<8x1xi1>
    %269 = vector.broadcast %268 : vector<8x1xi1> to vector<8x32xi1>
    %270 = arith.select %269, %260, %184 : vector<8x32xi1>, vector<8x32xf32>
    %cst_73 = arith.constant 0.000000e+00 : f32
    %271 = vector.shape_cast %264 : vector<8x1xi1> to vector<8x1xi1>
    %272 = vector.broadcast %271 : vector<8x1xi1> to vector<8x32xi1>
    %273 = vector.broadcast %cst_73 : f32 to vector<8x32xf32>
    %274 = arith.select %272, %262, %273 : vector<8x32xi1>, vector<8x32xf32>
    %c5 = arith.constant 5 : index
    %c0_74 = arith.constant 0 : index
    %c0_75 = arith.constant 0 : index
    %275 = vector.load %arg8[%c5, %c0_74, %c0_75] : memref<8x8x32xf32, #tpu.memory_space<vmem>>, vector<1x8x32xf32>
    %276 = vector.shape_cast %275 : vector<1x8x32xf32> to vector<8x32xf32>
    %277 = vector.shape_cast %274 : vector<8x32xf32> to vector<1x8x32xf32>
    tpu.vector_store %arg8[%c5, %c0_74, %c0_75], %277 {strides = array<i32>} : memref<8x8x32xf32, #tpu.memory_space<vmem>>, vector<1x8x32xf32>,
    %c24 = arith.constant 24 : index
    %c0_76 = arith.constant 0 : index
    %278 = vector.load %arg9[%c24, %c0_76] : memref<64x256xf32, #tpu.memory_space<vmem>>, vector<8x128xf32>
    %cst_77 = arith.constant dense<0.000000e+00> : vector<8x128xf32>
    %279 = tpu.matmul %224, %9, %cst_77 {dimension_numbers = #tpu.dot_dimension_numbers<[1], [0], [0], [1], [0, 0, 1, 1], [], []>} : vector<8x32xf32>, vector<32x128xf32>, vector<8x128xf32> -> vector<8x128xf32>
    %280 = arith.addf %278, %279 : vector<8x128xf32>
    %281 = vector.extract_strided_slice %280 {offsets = [0, 0], sizes = [8, 32], strides = [1, 1]} : vector<8x128xf32> to vector<8x32xf32>
    %282 = arith.negf %281 : vector<8x32xf32>
    %283 = math.exp %282 : vector<8x32xf32>
    %cst_78 = arith.constant 1.000000e+00 : f32
    %284 = vector.broadcast %cst_78 : f32 to vector<8x32xf32>
    %285 = arith.addf %284, %283 : vector<8x32xf32>
    %286 = arith.divf %284, %285 : vector<8x32xf32>
    %287 = vector.extract_strided_slice %280 {offsets = [0, 32], sizes = [8, 32], strides = [1, 1]} : vector<8x128xf32> to vector<8x32xf32>
    %288 = arith.negf %287 : vector<8x32xf32>
    %289 = math.exp %288 : vector<8x32xf32>
    %cst_79 = arith.constant 1.000000e+00 : f32
    %290 = vector.broadcast %cst_79 : f32 to vector<8x32xf32>
    %291 = arith.addf %290, %289 : vector<8x32xf32>
    %292 = arith.divf %290, %291 : vector<8x32xf32>
    %293 = vector.extract_strided_slice %280 {offsets = [0, 64], sizes = [8, 32], strides = [1, 1]} : vector<8x128xf32> to vector<8x32xf32>
    %294 = math.tanh %293 : vector<8x32xf32>
    %295 = vector.extract_strided_slice %280 {offsets = [0, 96], sizes = [8, 32], strides = [1, 1]} : vector<8x128xf32> to vector<8x32xf32>
    %296 = arith.negf %295 : vector<8x32xf32>
    %297 = math.exp %296 : vector<8x32xf32>
    %cst_80 = arith.constant 1.000000e+00 : f32
    %298 = vector.broadcast %cst_80 : f32 to vector<8x32xf32>
    %299 = arith.addf %298, %297 : vector<8x32xf32>
    %300 = arith.divf %298, %299 : vector<8x32xf32>
    %301 = arith.mulf %292, %227 : vector<8x32xf32>
    %302 = arith.mulf %286, %294 : vector<8x32xf32>
    %303 = arith.addf %301, %302 : vector<8x32xf32>
    %304 = math.tanh %303 : vector<8x32xf32>
    %305 = arith.mulf %300, %304 : vector<8x32xf32>
    %c3_i32 = arith.constant 3 : i32
    %306 = vector.broadcast %c3_i32 : i32 to vector<8x1xi32>
    %307 = arith.cmpi sgt, %7, %306 : vector<8x1xi32>
    %308 = vector.shape_cast %307 : vector<8x1xi1> to vector<8x1xi1>
    %309 = vector.broadcast %308 : vector<8x1xi1> to vector<8x32xi1>
    %310 = arith.select %309, %305, %224 : vector<8x32xi1>, vector<8x32xf32>
    %311 = vector.shape_cast %307 : vector<8x1xi1> to vector<8x1xi1>
    %312 = vector.broadcast %311 : vector<8x1xi1> to vector<8x32xi1>
    %313 = arith.select %312, %303, %227 : vector<8x32xi1>, vector<8x32xf32>
    %cst_81 = arith.constant 0.000000e+00 : f32
    %314 = vector.shape_cast %307 : vector<8x1xi1> to vector<8x1xi1>
    %315 = vector.broadcast %314 : vector<8x1xi1> to vector<8x32xi1>
    %316 = vector.broadcast %cst_81 : f32 to vector<8x32xf32>
    %317 = arith.select %315, %305, %316 : vector<8x32xi1>, vector<8x32xf32>
    %c3 = arith.constant 3 : index
    %c0_82 = arith.constant 0 : index
    %c0_83 = arith.constant 0 : index
    %318 = vector.load %arg7[%c3, %c0_82, %c0_83] : memref<8x8x32xf32, #tpu.memory_space<vmem>>, vector<1x8x32xf32>
    %319 = vector.shape_cast %318 : vector<1x8x32xf32> to vector<8x32xf32>
    %320 = vector.shape_cast %317 : vector<8x32xf32> to vector<1x8x32xf32>
    tpu.vector_store %arg7[%c3, %c0_82, %c0_83], %320 {strides = array<i32>} : memref<8x8x32xf32, #tpu.memory_space<vmem>>, vector<1x8x32xf32>,
    %c32 = arith.constant 32 : index
    %c128_84 = arith.constant 128 : index
    %321 = vector.load %arg9[%c32, %c128_84] : memref<64x256xf32, #tpu.memory_space<vmem>>, vector<8x128xf32>
    %cst_85 = arith.constant dense<0.000000e+00> : vector<8x128xf32>
    %322 = tpu.matmul %267, %11, %cst_85 {dimension_numbers = #tpu.dot_dimension_numbers<[1], [0], [0], [1], [0, 0, 1, 1], [], []>} : vector<8x32xf32>, vector<32x128xf32>, vector<8x128xf32> -> vector<8x128xf32>
    %323 = arith.addf %321, %322 : vector<8x128xf32>
    %324 = vector.extract_strided_slice %323 {offsets = [0, 0], sizes = [8, 32], strides = [1, 1]} : vector<8x128xf32> to vector<8x32xf32>
    %325 = arith.negf %324 : vector<8x32xf32>
    %326 = math.exp %325 : vector<8x32xf32>
    %cst_86 = arith.constant 1.000000e+00 : f32
    %327 = vector.broadcast %cst_86 : f32 to vector<8x32xf32>
    %328 = arith.addf %327, %326 : vector<8x32xf32>
    %329 = arith.divf %327, %328 : vector<8x32xf32>
    %330 = vector.extract_strided_slice %323 {offsets = [0, 32], sizes = [8, 32], strides = [1, 1]} : vector<8x128xf32> to vector<8x32xf32>
    %331 = arith.negf %330 : vector<8x32xf32>
    %332 = math.exp %331 : vector<8x32xf32>
    %cst_87 = arith.constant 1.000000e+00 : f32
    %333 = vector.broadcast %cst_87 : f32 to vector<8x32xf32>
    %334 = arith.addf %333, %332 : vector<8x32xf32>
    %335 = arith.divf %333, %334 : vector<8x32xf32>
    %336 = vector.extract_strided_slice %323 {offsets = [0, 64], sizes = [8, 32], strides = [1, 1]} : vector<8x128xf32> to vector<8x32xf32>
    %337 = math.tanh %336 : vector<8x32xf32>
    %338 = vector.extract_strided_slice %323 {offsets = [0, 96], sizes = [8, 32], strides = [1, 1]} : vector<8x128xf32> to vector<8x32xf32>
    %339 = arith.negf %338 : vector<8x32xf32>
    %340 = math.exp %339 : vector<8x32xf32>
    %cst_88 = arith.constant 1.000000e+00 : f32
    %341 = vector.broadcast %cst_88 : f32 to vector<8x32xf32>
    %342 = arith.addf %341, %340 : vector<8x32xf32>
    %343 = arith.divf %341, %342 : vector<8x32xf32>
    %344 = arith.mulf %335, %270 : vector<8x32xf32>
    %345 = arith.mulf %329, %337 : vector<8x32xf32>
    %346 = arith.addf %344, %345 : vector<8x32xf32>
    %347 = math.tanh %346 : vector<8x32xf32>
    %348 = arith.mulf %343, %347 : vector<8x32xf32>
    %c4_i32 = arith.constant 4 : i32
    %349 = vector.broadcast %c4_i32 : i32 to vector<8x1xi32>
    %350 = arith.cmpi sgt, %7, %349 : vector<8x1xi32>
    %351 = vector.shape_cast %350 : vector<8x1xi1> to vector<8x1xi1>
    %352 = vector.broadcast %351 : vector<8x1xi1> to vector<8x32xi1>
    %353 = arith.select %352, %348, %267 : vector<8x32xi1>, vector<8x32xf32>
    %354 = vector.shape_cast %350 : vector<8x1xi1> to vector<8x1xi1>
    %355 = vector.broadcast %354 : vector<8x1xi1> to vector<8x32xi1>
    %356 = arith.select %355, %346, %270 : vector<8x32xi1>, vector<8x32xf32>
    %cst_89 = arith.constant 0.000000e+00 : f32
    %357 = vector.shape_cast %350 : vector<8x1xi1> to vector<8x1xi1>
    %358 = vector.broadcast %357 : vector<8x1xi1> to vector<8x32xi1>
    %359 = vector.broadcast %cst_89 : f32 to vector<8x32xf32>
    %360 = arith.select %358, %348, %359 : vector<8x32xi1>, vector<8x32xf32>
    %c4 = arith.constant 4 : index
    %c0_90 = arith.constant 0 : index
    %c0_91 = arith.constant 0 : index
    %361 = vector.load %arg8[%c4, %c0_90, %c0_91] : memref<8x8x32xf32, #tpu.memory_space<vmem>>, vector<1x8x32xf32>
    %362 = vector.shape_cast %361 : vector<1x8x32xf32> to vector<8x32xf32>
    %363 = vector.shape_cast %360 : vector<8x32xf32> to vector<1x8x32xf32>
    tpu.vector_store %arg8[%c4, %c0_90, %c0_91], %363 {strides = array<i32>} : memref<8x8x32xf32, #tpu.memory_space<vmem>>, vector<1x8x32xf32>,
    %c32_92 = arith.constant 32 : index
    %c0_93 = arith.constant 0 : index
    %364 = vector.load %arg9[%c32_92, %c0_93] : memref<64x256xf32, #tpu.memory_space<vmem>>, vector<8x128xf32>
    %cst_94 = arith.constant dense<0.000000e+00> : vector<8x128xf32>
    %365 = tpu.matmul %310, %9, %cst_94 {dimension_numbers = #tpu.dot_dimension_numbers<[1], [0], [0], [1], [0, 0, 1, 1], [], []>} : vector<8x32xf32>, vector<32x128xf32>, vector<8x128xf32> -> vector<8x128xf32>
    %366 = arith.addf %364, %365 : vector<8x128xf32>
    %367 = vector.extract_strided_slice %366 {offsets = [0, 0], sizes = [8, 32], strides = [1, 1]} : vector<8x128xf32> to vector<8x32xf32>
    %368 = arith.negf %367 : vector<8x32xf32>
    %369 = math.exp %368 : vector<8x32xf32>
    %cst_95 = arith.constant 1.000000e+00 : f32
    %370 = vector.broadcast %cst_95 : f32 to vector<8x32xf32>
    %371 = arith.addf %370, %369 : vector<8x32xf32>
    %372 = arith.divf %370, %371 : vector<8x32xf32>
    %373 = vector.extract_strided_slice %366 {offsets = [0, 32], sizes = [8, 32], strides = [1, 1]} : vector<8x128xf32> to vector<8x32xf32>
    %374 = arith.negf %373 : vector<8x32xf32>
    %375 = math.exp %374 : vector<8x32xf32>
    %cst_96 = arith.constant 1.000000e+00 : f32
    %376 = vector.broadcast %cst_96 : f32 to vector<8x32xf32>
    %377 = arith.addf %376, %375 : vector<8x32xf32>
    %378 = arith.divf %376, %377 : vector<8x32xf32>
    %379 = vector.extract_strided_slice %366 {offsets = [0, 64], sizes = [8, 32], strides = [1, 1]} : vector<8x128xf32> to vector<8x32xf32>
    %380 = math.tanh %379 : vector<8x32xf32>
    %381 = vector.extract_strided_slice %366 {offsets = [0, 96], sizes = [8, 32], strides = [1, 1]} : vector<8x128xf32> to vector<8x32xf32>
    %382 = arith.negf %381 : vector<8x32xf32>
    %383 = math.exp %382 : vector<8x32xf32>
    %cst_97 = arith.constant 1.000000e+00 : f32
    %384 = vector.broadcast %cst_97 : f32 to vector<8x32xf32>
    %385 = arith.addf %384, %383 : vector<8x32xf32>
    %386 = arith.divf %384, %385 : vector<8x32xf32>
    %387 = arith.mulf %378, %313 : vector<8x32xf32>
    %388 = arith.mulf %372, %380 : vector<8x32xf32>
    %389 = arith.addf %387, %388 : vector<8x32xf32>
    %390 = math.tanh %389 : vector<8x32xf32>
    %391 = arith.mulf %386, %390 : vector<8x32xf32>
    %c4_i32_98 = arith.constant 4 : i32
    %392 = vector.broadcast %c4_i32_98 : i32 to vector<8x1xi32>
    %393 = arith.cmpi sgt, %7, %392 : vector<8x1xi32>
    %394 = vector.shape_cast %393 : vector<8x1xi1> to vector<8x1xi1>
    %395 = vector.broadcast %394 : vector<8x1xi1> to vector<8x32xi1>
    %396 = arith.select %395, %391, %310 : vector<8x32xi1>, vector<8x32xf32>
    %397 = vector.shape_cast %393 : vector<8x1xi1> to vector<8x1xi1>
    %398 = vector.broadcast %397 : vector<8x1xi1> to vector<8x32xi1>
    %399 = arith.select %398, %389, %313 : vector<8x32xi1>, vector<8x32xf32>
    %cst_99 = arith.constant 0.000000e+00 : f32
    %400 = vector.shape_cast %393 : vector<8x1xi1> to vector<8x1xi1>
    %401 = vector.broadcast %400 : vector<8x1xi1> to vector<8x32xi1>
    %402 = vector.broadcast %cst_99 : f32 to vector<8x32xf32>
    %403 = arith.select %401, %391, %402 : vector<8x32xi1>, vector<8x32xf32>
    %c4_100 = arith.constant 4 : index
    %c0_101 = arith.constant 0 : index
    %c0_102 = arith.constant 0 : index
    %404 = vector.load %arg7[%c4_100, %c0_101, %c0_102] : memref<8x8x32xf32, #tpu.memory_space<vmem>>, vector<1x8x32xf32>
    %405 = vector.shape_cast %404 : vector<1x8x32xf32> to vector<8x32xf32>
    %406 = vector.shape_cast %403 : vector<8x32xf32> to vector<1x8x32xf32>
    tpu.vector_store %arg7[%c4_100, %c0_101, %c0_102], %406 {strides = array<i32>} : memref<8x8x32xf32, #tpu.memory_space<vmem>>, vector<1x8x32xf32>,
    %c24_103 = arith.constant 24 : index
    %c128_104 = arith.constant 128 : index
    %407 = vector.load %arg9[%c24_103, %c128_104] : memref<64x256xf32, #tpu.memory_space<vmem>>, vector<8x128xf32>
    %cst_105 = arith.constant dense<0.000000e+00> : vector<8x128xf32>
    %408 = tpu.matmul %353, %11, %cst_105 {dimension_numbers = #tpu.dot_dimension_numbers<[1], [0], [0], [1], [0, 0, 1, 1], [], []>} : vector<8x32xf32>, vector<32x128xf32>, vector<8x128xf32> -> vector<8x128xf32>
    %409 = arith.addf %407, %408 : vector<8x128xf32>
    %410 = vector.extract_strided_slice %409 {offsets = [0, 0], sizes = [8, 32], strides = [1, 1]} : vector<8x128xf32> to vector<8x32xf32>
    %411 = arith.negf %410 : vector<8x32xf32>
    %412 = math.exp %411 : vector<8x32xf32>
    %cst_106 = arith.constant 1.000000e+00 : f32
    %413 = vector.broadcast %cst_106 : f32 to vector<8x32xf32>
    %414 = arith.addf %413, %412 : vector<8x32xf32>
    %415 = arith.divf %413, %414 : vector<8x32xf32>
    %416 = vector.extract_strided_slice %409 {offsets = [0, 32], sizes = [8, 32], strides = [1, 1]} : vector<8x128xf32> to vector<8x32xf32>
    %417 = arith.negf %416 : vector<8x32xf32>
    %418 = math.exp %417 : vector<8x32xf32>
    %cst_107 = arith.constant 1.000000e+00 : f32
    %419 = vector.broadcast %cst_107 : f32 to vector<8x32xf32>
    %420 = arith.addf %419, %418 : vector<8x32xf32>
    %421 = arith.divf %419, %420 : vector<8x32xf32>
    %422 = vector.extract_strided_slice %409 {offsets = [0, 64], sizes = [8, 32], strides = [1, 1]} : vector<8x128xf32> to vector<8x32xf32>
    %423 = math.tanh %422 : vector<8x32xf32>
    %424 = vector.extract_strided_slice %409 {offsets = [0, 96], sizes = [8, 32], strides = [1, 1]} : vector<8x128xf32> to vector<8x32xf32>
    %425 = arith.negf %424 : vector<8x32xf32>
    %426 = math.exp %425 : vector<8x32xf32>
    %cst_108 = arith.constant 1.000000e+00 : f32
    %427 = vector.broadcast %cst_108 : f32 to vector<8x32xf32>
    %428 = arith.addf %427, %426 : vector<8x32xf32>
    %429 = arith.divf %427, %428 : vector<8x32xf32>
    %430 = arith.mulf %421, %356 : vector<8x32xf32>
    %431 = arith.mulf %415, %423 : vector<8x32xf32>
    %432 = arith.addf %430, %431 : vector<8x32xf32>
    %433 = math.tanh %432 : vector<8x32xf32>
    %434 = arith.mulf %429, %433 : vector<8x32xf32>
    %c3_i32_109 = arith.constant 3 : i32
    %435 = vector.broadcast %c3_i32_109 : i32 to vector<8x1xi32>
    %436 = arith.cmpi sgt, %7, %435 : vector<8x1xi32>
    %437 = vector.shape_cast %436 : vector<8x1xi1> to vector<8x1xi1>
    %438 = vector.broadcast %437 : vector<8x1xi1> to vector<8x32xi1>
    %439 = arith.select %438, %434, %353 : vector<8x32xi1>, vector<8x32xf32>
    %440 = vector.shape_cast %436 : vector<8x1xi1> to vector<8x1xi1>
    %441 = vector.broadcast %440 : vector<8x1xi1> to vector<8x32xi1>
    %442 = arith.select %441, %432, %356 : vector<8x32xi1>, vector<8x32xf32>
    %cst_110 = arith.constant 0.000000e+00 : f32
    %443 = vector.shape_cast %436 : vector<8x1xi1> to vector<8x1xi1>
    %444 = vector.broadcast %443 : vector<8x1xi1> to vector<8x32xi1>
    %445 = vector.broadcast %cst_110 : f32 to vector<8x32xf32>
    %446 = arith.select %444, %434, %445 : vector<8x32xi1>, vector<8x32xf32>
    %c3_111 = arith.constant 3 : index
    %c0_112 = arith.constant 0 : index
    %c0_113 = arith.constant 0 : index
    %447 = vector.load %arg8[%c3_111, %c0_112, %c0_113] : memref<8x8x32xf32, #tpu.memory_space<vmem>>, vector<1x8x32xf32>
    %448 = vector.shape_cast %447 : vector<1x8x32xf32> to vector<8x32xf32>
    %449 = vector.shape_cast %446 : vector<8x32xf32> to vector<1x8x32xf32>
    tpu.vector_store %arg8[%c3_111, %c0_112, %c0_113], %449 {strides = array<i32>} : memref<8x8x32xf32, #tpu.memory_space<vmem>>, vector<1x8x32xf32>,
    %c40_114 = arith.constant 40 : index
    %c0_115 = arith.constant 0 : index
    %450 = vector.load %arg9[%c40_114, %c0_115] : memref<64x256xf32, #tpu.memory_space<vmem>>, vector<8x128xf32>
    %cst_116 = arith.constant dense<0.000000e+00> : vector<8x128xf32>
    %451 = tpu.matmul %396, %9, %cst_116 {dimension_numbers = #tpu.dot_dimension_numbers<[1], [0], [0], [1], [0, 0, 1, 1], [], []>} : vector<8x32xf32>, vector<32x128xf32>, vector<8x128xf32> -> vector<8x128xf32>
    %452 = arith.addf %450, %451 : vector<8x128xf32>
    %453 = vector.extract_strided_slice %452 {offsets = [0, 0], sizes = [8, 32], strides = [1, 1]} : vector<8x128xf32> to vector<8x32xf32>
    %454 = arith.negf %453 : vector<8x32xf32>
    %455 = math.exp %454 : vector<8x32xf32>
    %cst_117 = arith.constant 1.000000e+00 : f32
    %456 = vector.broadcast %cst_117 : f32 to vector<8x32xf32>
    %457 = arith.addf %456, %455 : vector<8x32xf32>
    %458 = arith.divf %456, %457 : vector<8x32xf32>
    %459 = vector.extract_strided_slice %452 {offsets = [0, 32], sizes = [8, 32], strides = [1, 1]} : vector<8x128xf32> to vector<8x32xf32>
    %460 = arith.negf %459 : vector<8x32xf32>
    %461 = math.exp %460 : vector<8x32xf32>
    %cst_118 = arith.constant 1.000000e+00 : f32
    %462 = vector.broadcast %cst_118 : f32 to vector<8x32xf32>
    %463 = arith.addf %462, %461 : vector<8x32xf32>
    %464 = arith.divf %462, %463 : vector<8x32xf32>
    %465 = vector.extract_strided_slice %452 {offsets = [0, 64], sizes = [8, 32], strides = [1, 1]} : vector<8x128xf32> to vector<8x32xf32>
    %466 = math.tanh %465 : vector<8x32xf32>
    %467 = vector.extract_strided_slice %452 {offsets = [0, 96], sizes = [8, 32], strides = [1, 1]} : vector<8x128xf32> to vector<8x32xf32>
    %468 = arith.negf %467 : vector<8x32xf32>
    %469 = math.exp %468 : vector<8x32xf32>
    %cst_119 = arith.constant 1.000000e+00 : f32
    %470 = vector.broadcast %cst_119 : f32 to vector<8x32xf32>
    %471 = arith.addf %470, %469 : vector<8x32xf32>
    %472 = arith.divf %470, %471 : vector<8x32xf32>
    %473 = arith.mulf %464, %399 : vector<8x32xf32>
    %474 = arith.mulf %458, %466 : vector<8x32xf32>
    %475 = arith.addf %473, %474 : vector<8x32xf32>
    %476 = math.tanh %475 : vector<8x32xf32>
    %477 = arith.mulf %472, %476 : vector<8x32xf32>
    %c5_i32_120 = arith.constant 5 : i32
    %478 = vector.broadcast %c5_i32_120 : i32 to vector<8x1xi32>
    %479 = arith.cmpi sgt, %7, %478 : vector<8x1xi32>
    %480 = vector.shape_cast %479 : vector<8x1xi1> to vector<8x1xi1>
    %481 = vector.broadcast %480 : vector<8x1xi1> to vector<8x32xi1>
    %482 = arith.select %481, %477, %396 : vector<8x32xi1>, vector<8x32xf32>
    %483 = vector.shape_cast %479 : vector<8x1xi1> to vector<8x1xi1>
    %484 = vector.broadcast %483 : vector<8x1xi1> to vector<8x32xi1>
    %485 = arith.select %484, %475, %399 : vector<8x32xi1>, vector<8x32xf32>
    %cst_121 = arith.constant 0.000000e+00 : f32
    %486 = vector.shape_cast %479 : vector<8x1xi1> to vector<8x1xi1>
    %487 = vector.broadcast %486 : vector<8x1xi1> to vector<8x32xi1>
    %488 = vector.broadcast %cst_121 : f32 to vector<8x32xf32>
    %489 = arith.select %487, %477, %488 : vector<8x32xi1>, vector<8x32xf32>
    %c5_122 = arith.constant 5 : index
    %c0_123 = arith.constant 0 : index
    %c0_124 = arith.constant 0 : index
    %490 = vector.load %arg7[%c5_122, %c0_123, %c0_124] : memref<8x8x32xf32, #tpu.memory_space<vmem>>, vector<1x8x32xf32>
    %491 = vector.shape_cast %490 : vector<1x8x32xf32> to vector<8x32xf32>
    %492 = vector.shape_cast %489 : vector<8x32xf32> to vector<1x8x32xf32>
    tpu.vector_store %arg7[%c5_122, %c0_123, %c0_124], %492 {strides = array<i32>} : memref<8x8x32xf32, #tpu.memory_space<vmem>>, vector<1x8x32xf32>,
    %c16_125 = arith.constant 16 : index
    %c128_126 = arith.constant 128 : index
    %493 = vector.load %arg9[%c16_125, %c128_126] : memref<64x256xf32, #tpu.memory_space<vmem>>, vector<8x128xf32>
    %cst_127 = arith.constant dense<0.000000e+00> : vector<8x128xf32>
    %494 = tpu.matmul %439, %11, %cst_127 {dimension_numbers = #tpu.dot_dimension_numbers<[1], [0], [0], [1], [0, 0, 1, 1], [], []>} : vector<8x32xf32>, vector<32x128xf32>, vector<8x128xf32> -> vector<8x128xf32>
    %495 = arith.addf %493, %494 : vector<8x128xf32>
    %496 = vector.extract_strided_slice %495 {offsets = [0, 0], sizes = [8, 32], strides = [1, 1]} : vector<8x128xf32> to vector<8x32xf32>
    %497 = arith.negf %496 : vector<8x32xf32>
    %498 = math.exp %497 : vector<8x32xf32>
    %cst_128 = arith.constant 1.000000e+00 : f32
    %499 = vector.broadcast %cst_128 : f32 to vector<8x32xf32>
    %500 = arith.addf %499, %498 : vector<8x32xf32>
    %501 = arith.divf %499, %500 : vector<8x32xf32>
    %502 = vector.extract_strided_slice %495 {offsets = [0, 32], sizes = [8, 32], strides = [1, 1]} : vector<8x128xf32> to vector<8x32xf32>
    %503 = arith.negf %502 : vector<8x32xf32>
    %504 = math.exp %503 : vector<8x32xf32>
    %cst_129 = arith.constant 1.000000e+00 : f32
    %505 = vector.broadcast %cst_129 : f32 to vector<8x32xf32>
    %506 = arith.addf %505, %504 : vector<8x32xf32>
    %507 = arith.divf %505, %506 : vector<8x32xf32>
    %508 = vector.extract_strided_slice %495 {offsets = [0, 64], sizes = [8, 32], strides = [1, 1]} : vector<8x128xf32> to vector<8x32xf32>
    %509 = math.tanh %508 : vector<8x32xf32>
    %510 = vector.extract_strided_slice %495 {offsets = [0, 96], sizes = [8, 32], strides = [1, 1]} : vector<8x128xf32> to vector<8x32xf32>
    %511 = arith.negf %510 : vector<8x32xf32>
    %512 = math.exp %511 : vector<8x32xf32>
    %cst_130 = arith.constant 1.000000e+00 : f32
    %513 = vector.broadcast %cst_130 : f32 to vector<8x32xf32>
    %514 = arith.addf %513, %512 : vector<8x32xf32>
    %515 = arith.divf %513, %514 : vector<8x32xf32>
    %516 = arith.mulf %507, %442 : vector<8x32xf32>
    %517 = arith.mulf %501, %509 : vector<8x32xf32>
    %518 = arith.addf %516, %517 : vector<8x32xf32>
    %519 = math.tanh %518 : vector<8x32xf32>
    %520 = arith.mulf %515, %519 : vector<8x32xf32>
    %c2_i32_131 = arith.constant 2 : i32
    %521 = vector.broadcast %c2_i32_131 : i32 to vector<8x1xi32>
    %522 = arith.cmpi sgt, %7, %521 : vector<8x1xi32>
    %523 = vector.shape_cast %522 : vector<8x1xi1> to vector<8x1xi1>
    %524 = vector.broadcast %523 : vector<8x1xi1> to vector<8x32xi1>
    %525 = arith.select %524, %520, %439 : vector<8x32xi1>, vector<8x32xf32>
    %526 = vector.shape_cast %522 : vector<8x1xi1> to vector<8x1xi1>
    %527 = vector.broadcast %526 : vector<8x1xi1> to vector<8x32xi1>
    %528 = arith.select %527, %518, %442 : vector<8x32xi1>, vector<8x32xf32>
    %cst_132 = arith.constant 0.000000e+00 : f32
    %529 = vector.shape_cast %522 : vector<8x1xi1> to vector<8x1xi1>
    %530 = vector.broadcast %529 : vector<8x1xi1> to vector<8x32xi1>
    %531 = vector.broadcast %cst_132 : f32 to vector<8x32xf32>
    %532 = arith.select %530, %520, %531 : vector<8x32xi1>, vector<8x32xf32>
    %c2_133 = arith.constant 2 : index
    %c0_134 = arith.constant 0 : index
    %c0_135 = arith.constant 0 : index
    %533 = vector.load %arg8[%c2_133, %c0_134, %c0_135] : memref<8x8x32xf32, #tpu.memory_space<vmem>>, vector<1x8x32xf32>
    %534 = vector.shape_cast %533 : vector<1x8x32xf32> to vector<8x32xf32>
    %535 = vector.shape_cast %532 : vector<8x32xf32> to vector<1x8x32xf32>
    tpu.vector_store %arg8[%c2_133, %c0_134, %c0_135], %535 {strides = array<i32>} : memref<8x8x32xf32, #tpu.memory_space<vmem>>, vector<1x8x32xf32>,
    %c48_136 = arith.constant 48 : index
    %c0_137 = arith.constant 0 : index
    %536 = vector.load %arg9[%c48_136, %c0_137] : memref<64x256xf32, #tpu.memory_space<vmem>>, vector<8x128xf32>
    %cst_138 = arith.constant dense<0.000000e+00> : vector<8x128xf32>
    %537 = tpu.matmul %482, %9, %cst_138 {dimension_numbers = #tpu.dot_dimension_numbers<[1], [0], [0], [1], [0, 0, 1, 1], [], []>} : vector<8x32xf32>, vector<32x128xf32>, vector<8x128xf32> -> vector<8x128xf32>
    %538 = arith.addf %536, %537 : vector<8x128xf32>
    %539 = vector.extract_strided_slice %538 {offsets = [0, 0], sizes = [8, 32], strides = [1, 1]} : vector<8x128xf32> to vector<8x32xf32>
    %540 = arith.negf %539 : vector<8x32xf32>
    %541 = math.exp %540 : vector<8x32xf32>
    %cst_139 = arith.constant 1.000000e+00 : f32
    %542 = vector.broadcast %cst_139 : f32 to vector<8x32xf32>
    %543 = arith.addf %542, %541 : vector<8x32xf32>
    %544 = arith.divf %542, %543 : vector<8x32xf32>
    %545 = vector.extract_strided_slice %538 {offsets = [0, 32], sizes = [8, 32], strides = [1, 1]} : vector<8x128xf32> to vector<8x32xf32>
    %546 = arith.negf %545 : vector<8x32xf32>
    %547 = math.exp %546 : vector<8x32xf32>
    %cst_140 = arith.constant 1.000000e+00 : f32
    %548 = vector.broadcast %cst_140 : f32 to vector<8x32xf32>
    %549 = arith.addf %548, %547 : vector<8x32xf32>
    %550 = arith.divf %548, %549 : vector<8x32xf32>
    %551 = vector.extract_strided_slice %538 {offsets = [0, 64], sizes = [8, 32], strides = [1, 1]} : vector<8x128xf32> to vector<8x32xf32>
    %552 = math.tanh %551 : vector<8x32xf32>
    %553 = vector.extract_strided_slice %538 {offsets = [0, 96], sizes = [8, 32], strides = [1, 1]} : vector<8x128xf32> to vector<8x32xf32>
    %554 = arith.negf %553 : vector<8x32xf32>
    %555 = math.exp %554 : vector<8x32xf32>
    %cst_141 = arith.constant 1.000000e+00 : f32
    %556 = vector.broadcast %cst_141 : f32 to vector<8x32xf32>
    %557 = arith.addf %556, %555 : vector<8x32xf32>
    %558 = arith.divf %556, %557 : vector<8x32xf32>
    %559 = arith.mulf %550, %485 : vector<8x32xf32>
    %560 = arith.mulf %544, %552 : vector<8x32xf32>
    %561 = arith.addf %559, %560 : vector<8x32xf32>
    %562 = math.tanh %561 : vector<8x32xf32>
    %563 = arith.mulf %558, %562 : vector<8x32xf32>
    %c6_i32_142 = arith.constant 6 : i32
    %564 = vector.broadcast %c6_i32_142 : i32 to vector<8x1xi32>
    %565 = arith.cmpi sgt, %7, %564 : vector<8x1xi32>
    %566 = vector.shape_cast %565 : vector<8x1xi1> to vector<8x1xi1>
    %567 = vector.broadcast %566 : vector<8x1xi1> to vector<8x32xi1>
    %568 = arith.select %567, %563, %482 : vector<8x32xi1>, vector<8x32xf32>
    %569 = vector.shape_cast %565 : vector<8x1xi1> to vector<8x1xi1>
    %570 = vector.broadcast %569 : vector<8x1xi1> to vector<8x32xi1>
    %571 = arith.select %570, %561, %485 : vector<8x32xi1>, vector<8x32xf32>
    %cst_143 = arith.constant 0.000000e+00 : f32
    %572 = vector.shape_cast %565 : vector<8x1xi1> to vector<8x1xi1>
    %573 = vector.broadcast %572 : vector<8x1xi1> to vector<8x32xi1>
    %574 = vector.broadcast %cst_143 : f32 to vector<8x32xf32>
    %575 = arith.select %573, %563, %574 : vector<8x32xi1>, vector<8x32xf32>
    %c6_144 = arith.constant 6 : index
    %c0_145 = arith.constant 0 : index
    %c0_146 = arith.constant 0 : index
    %576 = vector.load %arg7[%c6_144, %c0_145, %c0_146] : memref<8x8x32xf32, #tpu.memory_space<vmem>>, vector<1x8x32xf32>
    %577 = vector.shape_cast %576 : vector<1x8x32xf32> to vector<8x32xf32>
    %578 = vector.shape_cast %575 : vector<8x32xf32> to vector<1x8x32xf32>
    tpu.vector_store %arg7[%c6_144, %c0_145, %c0_146], %578 {strides = array<i32>} : memref<8x8x32xf32, #tpu.memory_space<vmem>>, vector<1x8x32xf32>,
    %c8_147 = arith.constant 8 : index
    %c128_148 = arith.constant 128 : index
    %579 = vector.load %arg9[%c8_147, %c128_148] : memref<64x256xf32, #tpu.memory_space<vmem>>, vector<8x128xf32>
    %cst_149 = arith.constant dense<0.000000e+00> : vector<8x128xf32>
    %580 = tpu.matmul %525, %11, %cst_149 {dimension_numbers = #tpu.dot_dimension_numbers<[1], [0], [0], [1], [0, 0, 1, 1], [], []>} : vector<8x32xf32>, vector<32x128xf32>, vector<8x128xf32> -> vector<8x128xf32>
    %581 = arith.addf %579, %580 : vector<8x128xf32>
    %582 = vector.extract_strided_slice %581 {offsets = [0, 0], sizes = [8, 32], strides = [1, 1]} : vector<8x128xf32> to vector<8x32xf32>
    %583 = arith.negf %582 : vector<8x32xf32>
    %584 = math.exp %583 : vector<8x32xf32>
    %cst_150 = arith.constant 1.000000e+00 : f32
    %585 = vector.broadcast %cst_150 : f32 to vector<8x32xf32>
    %586 = arith.addf %585, %584 : vector<8x32xf32>
    %587 = arith.divf %585, %586 : vector<8x32xf32>
    %588 = vector.extract_strided_slice %581 {offsets = [0, 32], sizes = [8, 32], strides = [1, 1]} : vector<8x128xf32> to vector<8x32xf32>
    %589 = arith.negf %588 : vector<8x32xf32>
    %590 = math.exp %589 : vector<8x32xf32>
    %cst_151 = arith.constant 1.000000e+00 : f32
    %591 = vector.broadcast %cst_151 : f32 to vector<8x32xf32>
    %592 = arith.addf %591, %590 : vector<8x32xf32>
    %593 = arith.divf %591, %592 : vector<8x32xf32>
    %594 = vector.extract_strided_slice %581 {offsets = [0, 64], sizes = [8, 32], strides = [1, 1]} : vector<8x128xf32> to vector<8x32xf32>
    %595 = math.tanh %594 : vector<8x32xf32>
    %596 = vector.extract_strided_slice %581 {offsets = [0, 96], sizes = [8, 32], strides = [1, 1]} : vector<8x128xf32> to vector<8x32xf32>
    %597 = arith.negf %596 : vector<8x32xf32>
    %598 = math.exp %597 : vector<8x32xf32>
    %cst_152 = arith.constant 1.000000e+00 : f32
    %599 = vector.broadcast %cst_152 : f32 to vector<8x32xf32>
    %600 = arith.addf %599, %598 : vector<8x32xf32>
    %601 = arith.divf %599, %600 : vector<8x32xf32>
    %602 = arith.mulf %593, %528 : vector<8x32xf32>
    %603 = arith.mulf %587, %595 : vector<8x32xf32>
    %604 = arith.addf %602, %603 : vector<8x32xf32>
    %605 = math.tanh %604 : vector<8x32xf32>
    %606 = arith.mulf %601, %605 : vector<8x32xf32>
    %c1_i32_153 = arith.constant 1 : i32
    %607 = vector.broadcast %c1_i32_153 : i32 to vector<8x1xi32>
    %608 = arith.cmpi sgt, %7, %607 : vector<8x1xi32>
    %609 = vector.shape_cast %608 : vector<8x1xi1> to vector<8x1xi1>
    %610 = vector.broadcast %609 : vector<8x1xi1> to vector<8x32xi1>
    %611 = arith.select %610, %606, %525 : vector<8x32xi1>, vector<8x32xf32>
    %612 = vector.shape_cast %608 : vector<8x1xi1> to vector<8x1xi1>
    %613 = vector.broadcast %612 : vector<8x1xi1> to vector<8x32xi1>
    %614 = arith.select %613, %604, %528 : vector<8x32xi1>, vector<8x32xf32>
    %cst_154 = arith.constant 0.000000e+00 : f32
    %615 = vector.shape_cast %608 : vector<8x1xi1> to vector<8x1xi1>
    %616 = vector.broadcast %615 : vector<8x1xi1> to vector<8x32xi1>
    %617 = vector.broadcast %cst_154 : f32 to vector<8x32xf32>
    %618 = arith.select %616, %606, %617 : vector<8x32xi1>, vector<8x32xf32>
    %c1_155 = arith.constant 1 : index
    %c0_156 = arith.constant 0 : index
    %c0_157 = arith.constant 0 : index
    %619 = vector.load %arg8[%c1_155, %c0_156, %c0_157] : memref<8x8x32xf32, #tpu.memory_space<vmem>>, vector<1x8x32xf32>
    %620 = vector.shape_cast %619 : vector<1x8x32xf32> to vector<8x32xf32>
    %621 = vector.shape_cast %618 : vector<8x32xf32> to vector<1x8x32xf32>
    tpu.vector_store %arg8[%c1_155, %c0_156, %c0_157], %621 {strides = array<i32>} : memref<8x8x32xf32, #tpu.memory_space<vmem>>, vector<1x8x32xf32>,
    %c56_158 = arith.constant 56 : index
    %c0_159 = arith.constant 0 : index
    %622 = vector.load %arg9[%c56_158, %c0_159] : memref<64x256xf32, #tpu.memory_space<vmem>>, vector<8x128xf32>
    %cst_160 = arith.constant dense<0.000000e+00> : vector<8x128xf32>
    %623 = tpu.matmul %568, %9, %cst_160 {dimension_numbers = #tpu.dot_dimension_numbers<[1], [0], [0], [1], [0, 0, 1, 1], [], []>} : vector<8x32xf32>, vector<32x128xf32>, vector<8x128xf32> -> vector<8x128xf32>
    %624 = arith.addf %622, %623 : vector<8x128xf32>
    %625 = vector.extract_strided_slice %624 {offsets = [0, 0], sizes = [8, 32], strides = [1, 1]} : vector<8x128xf32> to vector<8x32xf32>
    %626 = arith.negf %625 : vector<8x32xf32>
    %627 = math.exp %626 : vector<8x32xf32>
    %cst_161 = arith.constant 1.000000e+00 : f32
    %628 = vector.broadcast %cst_161 : f32 to vector<8x32xf32>
    %629 = arith.addf %628, %627 : vector<8x32xf32>
    %630 = arith.divf %628, %629 : vector<8x32xf32>
    %631 = vector.extract_strided_slice %624 {offsets = [0, 32], sizes = [8, 32], strides = [1, 1]} : vector<8x128xf32> to vector<8x32xf32>
    %632 = arith.negf %631 : vector<8x32xf32>
    %633 = math.exp %632 : vector<8x32xf32>
    %cst_162 = arith.constant 1.000000e+00 : f32
    %634 = vector.broadcast %cst_162 : f32 to vector<8x32xf32>
    %635 = arith.addf %634, %633 : vector<8x32xf32>
    %636 = arith.divf %634, %635 : vector<8x32xf32>
    %637 = vector.extract_strided_slice %624 {offsets = [0, 64], sizes = [8, 32], strides = [1, 1]} : vector<8x128xf32> to vector<8x32xf32>
    %638 = math.tanh %637 : vector<8x32xf32>
    %639 = vector.extract_strided_slice %624 {offsets = [0, 96], sizes = [8, 32], strides = [1, 1]} : vector<8x128xf32> to vector<8x32xf32>
    %640 = arith.negf %639 : vector<8x32xf32>
    %641 = math.exp %640 : vector<8x32xf32>
    %cst_163 = arith.constant 1.000000e+00 : f32
    %642 = vector.broadcast %cst_163 : f32 to vector<8x32xf32>
    %643 = arith.addf %642, %641 : vector<8x32xf32>
    %644 = arith.divf %642, %643 : vector<8x32xf32>
    %645 = arith.mulf %636, %571 : vector<8x32xf32>
    %646 = arith.mulf %630, %638 : vector<8x32xf32>
    %647 = arith.addf %645, %646 : vector<8x32xf32>
    %648 = math.tanh %647 : vector<8x32xf32>
    %649 = arith.mulf %644, %648 : vector<8x32xf32>
    %c7_i32_164 = arith.constant 7 : i32
    %650 = vector.broadcast %c7_i32_164 : i32 to vector<8x1xi32>
    %651 = arith.cmpi sgt, %7, %650 : vector<8x1xi32>
    %cst_165 = arith.constant 0.000000e+00 : f32
    %652 = vector.shape_cast %651 : vector<8x1xi1> to vector<8x1xi1>
    %653 = vector.broadcast %652 : vector<8x1xi1> to vector<8x32xi1>
    %654 = vector.broadcast %cst_165 : f32 to vector<8x32xf32>
    %655 = arith.select %653, %649, %654 : vector<8x32xi1>, vector<8x32xf32>
    %c7_166 = arith.constant 7 : index
    %c0_167 = arith.constant 0 : index
    %c0_168 = arith.constant 0 : index
    %656 = vector.load %arg7[%c7_166, %c0_167, %c0_168] : memref<8x8x32xf32, #tpu.memory_space<vmem>>, vector<1x8x32xf32>
    %657 = vector.shape_cast %656 : vector<1x8x32xf32> to vector<8x32xf32>
    %658 = vector.shape_cast %655 : vector<8x32xf32> to vector<1x8x32xf32>
    tpu.vector_store %arg7[%c7_166, %c0_167, %c0_168], %658 {strides = array<i32>} : memref<8x8x32xf32, #tpu.memory_space<vmem>>, vector<1x8x32xf32>,
    %c0_169 = arith.constant 0 : index
    %c128_170 = arith.constant 128 : index
    %659 = vector.load %arg9[%c0_169, %c128_170] : memref<64x256xf32, #tpu.memory_space<vmem>>, vector<8x128xf32>
    %cst_171 = arith.constant dense<0.000000e+00> : vector<8x128xf32>
    %660 = tpu.matmul %611, %11, %cst_171 {dimension_numbers = #tpu.dot_dimension_numbers<[1], [0], [0], [1], [0, 0, 1, 1], [], []>} : vector<8x32xf32>, vector<32x128xf32>, vector<8x128xf32> -> vector<8x128xf32>
    %661 = arith.addf %659, %660 : vector<8x128xf32>
    %662 = vector.extract_strided_slice %661 {offsets = [0, 0], sizes = [8, 32], strides = [1, 1]} : vector<8x128xf32> to vector<8x32xf32>
    %663 = arith.negf %662 : vector<8x32xf32>
    %664 = math.exp %663 : vector<8x32xf32>
    %cst_172 = arith.constant 1.000000e+00 : f32
    %665 = vector.broadcast %cst_172 : f32 to vector<8x32xf32>
    %666 = arith.addf %665, %664 : vector<8x32xf32>
    %667 = arith.divf %665, %666 : vector<8x32xf32>
    %668 = vector.extract_strided_slice %661 {offsets = [0, 32], sizes = [8, 32], strides = [1, 1]} : vector<8x128xf32> to vector<8x32xf32>
    %669 = arith.negf %668 : vector<8x32xf32>
    %670 = math.exp %669 : vector<8x32xf32>
    %cst_173 = arith.constant 1.000000e+00 : f32
    %671 = vector.broadcast %cst_173 : f32 to vector<8x32xf32>
    %672 = arith.addf %671, %670 : vector<8x32xf32>
    %673 = arith.divf %671, %672 : vector<8x32xf32>
    %674 = vector.extract_strided_slice %661 {offsets = [0, 64], sizes = [8, 32], strides = [1, 1]} : vector<8x128xf32> to vector<8x32xf32>
    %675 = math.tanh %674 : vector<8x32xf32>
    %676 = vector.extract_strided_slice %661 {offsets = [0, 96], sizes = [8, 32], strides = [1, 1]} : vector<8x128xf32> to vector<8x32xf32>
    %677 = arith.negf %676 : vector<8x32xf32>
    %678 = math.exp %677 : vector<8x32xf32>
    %cst_174 = arith.constant 1.000000e+00 : f32
    %679 = vector.broadcast %cst_174 : f32 to vector<8x32xf32>
    %680 = arith.addf %679, %678 : vector<8x32xf32>
    %681 = arith.divf %679, %680 : vector<8x32xf32>
    %682 = arith.mulf %673, %614 : vector<8x32xf32>
    %683 = arith.mulf %667, %675 : vector<8x32xf32>
    %684 = arith.addf %682, %683 : vector<8x32xf32>
    %685 = math.tanh %684 : vector<8x32xf32>
    %686 = arith.mulf %681, %685 : vector<8x32xf32>
    %c0_i32_175 = arith.constant 0 : i32
    %687 = vector.broadcast %c0_i32_175 : i32 to vector<8x1xi32>
    %688 = arith.cmpi sgt, %7, %687 : vector<8x1xi32>
    %cst_176 = arith.constant 0.000000e+00 : f32
    %689 = vector.shape_cast %688 : vector<8x1xi1> to vector<8x1xi1>
    %690 = vector.broadcast %689 : vector<8x1xi1> to vector<8x32xi1>
    %691 = vector.broadcast %cst_176 : f32 to vector<8x32xf32>
    %692 = arith.select %690, %686, %691 : vector<8x32xi1>, vector<8x32xf32>
    %c0_177 = arith.constant 0 : index
    %c0_178 = arith.constant 0 : index
    %c0_179 = arith.constant 0 : index
    %693 = vector.load %arg8[%c0_177, %c0_178, %c0_179] : memref<8x8x32xf32, #tpu.memory_space<vmem>>, vector<1x8x32xf32>
    %694 = vector.shape_cast %693 : vector<1x8x32xf32> to vector<8x32xf32>
    %695 = vector.shape_cast %692 : vector<8x32xf32> to vector<1x8x32xf32>
    tpu.vector_store %arg8[%c0_177, %c0_178, %c0_179], %695 {strides = array<i32>} : memref<8x8x32xf32, #tpu.memory_space<vmem>>, vector<1x8x32xf32>,
    return
  }
}

</mosaic_0001>

<llo_original>
// kernel: sentence_extractor_forward.1
$region0: #{sentence_extractor_forward.1}
  #allocation0 [shape = 'u32[]', space=smem, size = 0x4, offset = 0x4, fixed_abs, tag = 'smem constant byte address 0x4 - core index']
  #allocation1 [shape = 'u32[144,128]{1,0:T(1,128)}', space=vmem, size = 0x12000, scoped, tag = 'internal scratch']
  #allocation2 [shape = 'f32[64,256]{1,0:T(8,128)}', space=vmem, size = 0x10000, scoped, tag = 'scratch operand']
  %s0 = inlined_call_operand.vmem [shape: f32[64,16], index: 0, kind: input, shape index: {}]
  %s1 = inlined_call_operand.vmem [shape: s32[8,1], index: 1, kind: input, shape index: {}]
  %s2 = inlined_call_operand.vmem [shape: f32[16,256], index: 2, kind: input, shape index: {}]
  %s3 = inlined_call_operand.vmem [shape: f32[2,32,128], index: 3, kind: input, shape index: {}]
  %s4 = inlined_call_operand.vmem [shape: f32[1,256], index: 4, kind: input, shape index: {}]
  %s5 = inlined_call_operand.vmem [shape: f32[2,8,32], index: 5, kind: input, shape index: {}]
  %s6 = inlined_call_operand.vmem [shape: f32[2,8,32], index: 6, kind: input, shape index: {}]
  %s7 = inlined_call_operand.vmem [shape: f32[8,8,32], index: 7, kind: output, shape index: {0}]
  %s8 = inlined_call_operand.vmem [shape: f32[8,8,32], index: 8, kind: output, shape index: {1}]
  %9 = xla_tuple %s7, %s8
  %s10 = sld [smem:[#allocation0]]
  $region46: #{sentence_extractor_forward.1} parent=0
    _
  %s12 = ssub.s32 1, %s10
  %s13 = scalar_select 0, %s12, %s10
  // Predicated region
  $region2: #{sentence_extractor_forward.1} parent=0 // pred_check
    _
  $region3: #{sentence_extractor_forward.1} parent=0 // pred_check_branch
    %15 = sbr.rel (0) target = $region5
  $region4: #{sentence_extractor_forward.1} parent=0 // pred_region
    _
  $region5: #{sentence_extractor_forward.1} parent=0 // pred_fallthru
    _
  // Predicated region
  $region6: #{sentence_extractor_forward.1} parent=0 // pred_check
    _
  $region7: #{sentence_extractor_forward.1} parent=0 // pred_check_branch
    %17 = sbr.rel (0) target = $region9
  $region8: #{sentence_extractor_forward.1} parent=0 // pred_region
    _
  $region9: #{sentence_extractor_forward.1} parent=0 // pred_fallthru
    _
  // Predicated region
  $region10: #{sentence_extractor_forward.1} parent=0 // pred_check
    _
  $region11: #{sentence_extractor_forward.1} parent=0 // pred_check_branch
    %19 = sbr.rel (0) target = $region13
  $region12: #{sentence_extractor_forward.1} parent=0 // pred_region
    _
  $region13: #{sentence_extractor_forward.1} parent=0 // pred_fallthru
    _
  // Predicated region
  $region14: #{sentence_extractor_forward.1} parent=0 // pred_check
    _
  $region15: #{sentence_extractor_forward.1} parent=0 // pred_check_branch
    %21 = sbr.rel (0) target = $region17
  $region16: #{sentence_extractor_forward.1} parent=0 // pred_region
    _
  $region17: #{sentence_extractor_forward.1} parent=0 // pred_fallthru
    _
  // Predicated region
  $region18: #{sentence_extractor_forward.1} parent=0 // pred_check
    _
  $region19: #{sentence_extractor_forward.1} parent=0 // pred_check_branch
    %23 = sbr.rel (0) target = $region21
  $region20: #{sentence_extractor_forward.1} parent=0 // pred_region
    _
  $region21: #{sentence_extractor_forward.1} parent=0 // pred_fallthru
    _
  // Predicated region
  $region22: #{sentence_extractor_forward.1} parent=0 // pred_check
    _
  $region23: #{sentence_extractor_forward.1} parent=0 // pred_check_branch
    %25 = sbr.rel (0) target = $region25
  $region24: #{sentence_extractor_forward.1} parent=0 // pred_region
    _
  $region25: #{sentence_extractor_forward.1} parent=0 // pred_fallthru
    _
  // Predicated region
  $region26: #{sentence_extractor_forward.1} parent=0 // pred_check
    _
  $region27: #{sentence_extractor_forward.1} parent=0 // pred_check_branch
    %27 = sbr.rel (0) target = $region29
  $region28: #{sentence_extractor_forward.1} parent=0 // pred_region
    _
  $region29: #{sentence_extractor_forward.1} parent=0 // pred_fallthru
    _
  %v28 = vld [vmem:[%s0] sm:$0xff]
  %v29 = vld [vmem:[%s0 + $0x8] sm:$0xff]
  %v30 = vld [vmem:[%s0 + $0x10] sm:$0xff]
  %v31 = vld [vmem:[%s0 + $0x18] sm:$0xff]
  %v32 = vld [vmem:[%s0 + $0x20] sm:$0xff]
  %v33 = vld [vmem:[%s0 + $0x28] sm:$0xff]
  %v34 = vld [vmem:[%s0 + $0x30] sm:$0xff]
  %v35 = vld [vmem:[%s0 + $0x38] sm:$0xff]
  %v36 = vld [vmem:[%s2] sm:$0xff]
  %v37 = vld [vmem:[%s2 + $0x8] sm:$0xff]
  %v38 = vld [vmem:[%s2 + $0x10] sm:$0xff]
  %v39 = vld [vmem:[%s2 + $0x18] sm:$0xff]
  %v40 = vld [vmem:[%s4] sm:$0x3]
  %v42 = vlaneseq
  %v43 = vshrl.u32 %v42, 7
  %v44 = vsub.s32 0, %v43
  %v45 = vrot.slane %v40, %v44
  %v46 = vlaneseq
  %v47 = vshrl.u32 %v46, 7
  %v48 = vsub.s32 1, %v47
  %v49 = vrot.slane %v40, %v48
  %vm52 = vcmask 130048
  %v54 = vsel %vm52, %v28, 0
  %v57 = vsel %vm52, %v29, 0
  %v60 = vsel %vm52, %v30, 0
  %v63 = vsel %vm52, %v31, 0
  %v66 = vsel %vm52, %v32, 0
  %v69 = vsel %vm52, %v33, 0
  %v72 = vsel %vm52, %v34, 0
  %v75 = vsel %vm52, %v35, 0
  %77 = vmatprep.subr.mxu0 0.0
  %78 = vmatpush1.msra.mxu0 0.0
  %79 = vmatprep.subr.mxu0 0.0
  %80 = vmatpush1.msra.mxu0 0.0
  %81 = vmatprep.subr.mxu0 0.0
  %82 = vmatpush1.msra.mxu0 0.0
  %83 = vmatprep.subr.mxu0 0.0
  %84 = vmatpush1.msra.mxu0 0.0
  %85 = vmatprep.subr.mxu0 0.0
  %86 = vmatpush1.msra.mxu0 0.0
  %87 = vmatprep.subr.mxu0 0.0
  %88 = vmatpush1.msra.mxu0 0.0
  %89 = vmatprep.subr.mxu0 0.0
  %90 = vmatpush1.msra.mxu0 0.0
  %91 = vmatprep.subr.mxu0 0.0
  %92 = vmatpush1.msra.mxu0 0.0
  %93 = vmatprep.subr.mxu0 0.0
  %94 = vmatpush1.msra.mxu0 0.0
  %95 = vmatprep.subr.mxu0 0.0
  %96 = vmatpush1.msra.mxu0 0.0
  %97 = vmatprep.subr.mxu0 0.0
  %98 = vmatpush1.msra.mxu0 0.0
  %99 = vmatprep.subr.mxu0 0.0
  %100 = vmatpush1.msra.mxu0 0.0
  %101 = vmatprep.subr.mxu0 0.0
  %102 = vmatpush1.msra.mxu0 0.0
  %103 = vmatprep.subr.mxu0 0.0
  %104 = vmatpush1.msra.mxu0 0.0
  %105 = vmatprep.subr.mxu0 %v39
  %106 = vmatpush1.msra.mxu0 %v38
  %107 = vmatprep.subr.mxu0 %v37
  %108 = vmatpush1.msra.mxu0 %v36
  %109 = vmatprep.subr.mxu0 0.0
  %110 = vmatpush2.msra.mxu0 0.0
  %111 = vmatprep.subr.mxu0 0.0
  %112 = vmatpush2.msra.mxu0 0.0
  %113 = vmatprep.subr.mxu0 0.0
  %114 = vmatpush2.msra.mxu0 0.0
  %115 = vmatprep.subr.mxu0 0.0
  %116 = vmatpush2.msra.mxu0 0.0
  %117 = vmatprep.subr.mxu0 0.0
  %118 = vmatpush2.msra.mxu0 0.0
  %119 = vmatprep.subr.mxu0 0.0
  %120 = vmatpush2.msra.mxu0 0.0
  %121 = vmatprep.subr.mxu0 0.0
  %122 = vmatpush2.msra.mxu0 0.0
  %123 = vmatprep.subr.mxu0 0.0
  %124 = vmatpush2.msra.mxu0 0.0
  %125 = vmatprep.subr.mxu0 0.0
  %126 = vmatpush2.msra.mxu0 0.0
  %127 = vmatprep.subr.mxu0 0.0
  %128 = vmatpush2.msra.mxu0 0.0
  %129 = vmatprep.subr.mxu0 0.0
  %130 = vmatpush2.msra.mxu0 0.0
  %131 = vmatprep.subr.mxu0 0.0
  %132 = vmatpush2.msra.mxu0 0.0
  %133 = vmatprep.subr.mxu0 0.0
  %134 = vmatpush2.msra.mxu0 0.0
  %135 = vmatprep.subr.mxu0 0.0
  %136 = vmatpush2.msra.mxu0 0.0
  %137 = vmatprep.subr.mxu0 0.0
  %138 = vmatpush2.msra.mxu0 0.0
  %139 = vmatprep.subr.mxu0 0.0
  %140 = vmatpush2.msra.mxu0 0.0
  %141 = vmatprep.mubr.f32.mxu0 0.0
  %142 = vmatmul.mubr.f32.gmra.mxu0 %v54
  %v143 = vpop.f32.mrf.mxu0
  %v144 = vadd.f32 %v45, %v143
  %v145 = vpop.f32.mrf.mxu0
  %v146 = vadd.f32 %v49, %v145
  %147 = vmatprep.mubr.f32.mxu0 0.0
  %148 = vmatmul.mubr.f32.gmra.mxu0 %v57
  %v149 = vpop.f32.mrf.mxu0
  %v150 = vadd.f32 %v45, %v149
  %v151 = vpop.f32.mrf.mxu0
  %v152 = vadd.f32 %v49, %v151
  %153 = vmatprep.mubr.f32.mxu0 0.0
  %154 = vmatmul.mubr.f32.gmra.mxu0 %v60
  %v155 = vpop.f32.mrf.mxu0
  %v156 = vadd.f32 %v45, %v155
  %v157 = vpop.f32.mrf.mxu0
  %v158 = vadd.f32 %v49, %v157
  %159 = vmatprep.mubr.f32.mxu0 0.0
  %160 = vmatmul.mubr.f32.gmra.mxu0 %v63
  %v161 = vpop.f32.mrf.mxu0
  %v162 = vadd.f32 %v45, %v161
  %v163 = vpop.f32.mrf.mxu0
  %v164 = vadd.f32 %v49, %v163
  %165 = vmatprep.mubr.f32.mxu0 0.0
  %166 = vmatmul.mubr.f32.gmra.mxu0 %v66
  %v167 = vpop.f32.mrf.mxu0
  %v168 = vadd.f32 %v45, %v167
  %v169 = vpop.f32.mrf.mxu0
  %v170 = vadd.f32 %v49, %v169
  %171 = vmatprep.mubr.f32.mxu0 0.0
  %172 = vmatmul.mubr.f32.gmra.mxu0 %v69
  %v173 = vpop.f32.mrf.mxu0
  %v174 = vadd.f32 %v45, %v173
  %v175 = vpop.f32.mrf.mxu0
  %v176 = vadd.f32 %v49, %v175
  %177 = vmatprep.mubr.f32.mxu0 0.0
  %178 = vmatmul.mubr.f32.gmra.mxu0 %v72
  %v179 = vpop.f32.mrf.mxu0
  %v180 = vadd.f32 %v45, %v179
  %v181 = vpop.f32.mrf.mxu0
  %v182 = vadd.f32 %v49, %v181
  %183 = vmatprep.mubr.f32.mxu0 0.0
  %184 = vmatmul.mubr.f32.gmra.mxu0 %v75
  %v185 = vpop.f32.mrf.mxu0
  %v186 = vadd.f32 %v45, %v185
  %v187 = vpop.f32.mrf.mxu0
  %v188 = vadd.f32 %v49, %v187
  %189 = vdwg.mxu0
  %190 = vst [vmem:[#allocation2] sm:$0xff] %v144
  %191 = vst [vmem:[#allocation2 + $0x8] sm:$0xff] %v146
  %192 = vst [vmem:[#allocation2 + $0x10] sm:$0xff] %v150
  %193 = vst [vmem:[#allocation2 + $0x18] sm:$0xff] %v152
  %194 = vst [vmem:[#allocation2 + $0x20] sm:$0xff] %v156
  %195 = vst [vmem:[#allocation2 + $0x28] sm:$0xff] %v158
  %196 = vst [vmem:[#allocation2 + $0x30] sm:$0xff] %v162
  %197 = vst [vmem:[#allocation2 + $0x38] sm:$0xff] %v164
  %198 = vst [vmem:[#allocation2 + $0x40] sm:$0xff] %v168
  %199 = vst [vmem:[#allocation2 + $0x48] sm:$0xff] %v170
  %200 = vst [vmem:[#allocation2 + $0x50] sm:$0xff] %v174
  %201 = vst [vmem:[#allocation2 + $0x58] sm:$0xff] %v176
  %202 = vst [vmem:[#allocation2 + $0x60] sm:$0xff] %v180
  %203 = vst [vmem:[#allocation2 + $0x68] sm:$0xff] %v182
  %204 = vst [vmem:[#allocation2 + $0x70] sm:$0xff] %v186
  %205 = vst [vmem:[#allocation2 + $0x78] sm:$0xff] %v188
  %v206 = vld [vmem:[%s1] sm:$0xff]
  %v207 = vld [vmem:[%s3] sm:$0xff]
  %v208 = vld [vmem:[%s3 + $0x8] sm:$0xff]
  %v209 = vld [vmem:[%s3 + $0x10] sm:$0xff]
  %v210 = vld [vmem:[%s3 + $0x18] sm:$0xff]
  %s211 = scalar_lea.vmem %s3, 32
  %v212 = vld [vmem:[%s211] sm:$0xff]
  %v213 = vld [vmem:[%s211 + $0x8] sm:$0xff]
  %v214 = vld [vmem:[%s211 + $0x10] sm:$0xff]
  %v215 = vld [vmem:[%s211 + $0x18] sm:$0xff]
  %v216 = vld [vmem:[%s5] sm:$0xff]
  %v217 = vld [vmem:[%s6] sm:$0xff]
  %s218 = scalar_lea.vmem %s5, 8
  %v219 = vld [vmem:[%s218] sm:$0xff]
  %s220 = scalar_lea.vmem %s6, 8
  %v221 = vld [vmem:[%s220] sm:$0xff]
  %v222 = vld [vmem:[#allocation2] sm:$0xff]
  %vm223 = vcmask 261120
  %v225 = vsel %vm223, %v216, 0
  %227 = vmatprep.subr.mxu0 0.0
  %228 = vmatpush1.msra.mxu0 0.0
  %229 = vmatprep.subr.mxu0 0.0
  %230 = vmatpush1.msra.mxu0 0.0
  %231 = vmatprep.subr.mxu0 0.0
  %232 = vmatpush1.msra.mxu0 0.0
  %233 = vmatprep.subr.mxu0 0.0
  %234 = vmatpush1.msra.mxu0 0.0
  %235 = vmatprep.subr.mxu0 0.0
  %236 = vmatpush1.msra.mxu0 0.0
  %237 = vmatprep.subr.mxu0 0.0
  %238 = vmatpush1.msra.mxu0 0.0
  %239 = vmatprep.subr.mxu0 0.0
  %240 = vmatpush1.msra.mxu0 0.0
  %241 = vmatprep.subr.mxu0 0.0
  %242 = vmatpush1.msra.mxu0 0.0
  %243 = vmatprep.subr.mxu0 0.0
  %244 = vmatpush1.msra.mxu0 0.0
  %245 = vmatprep.subr.mxu0 0.0
  %246 = vmatpush1.msra.mxu0 0.0
  %247 = vmatprep.subr.mxu0 0.0
  %248 = vmatpush1.msra.mxu0 0.0
  %249 = vmatprep.subr.mxu0 0.0
  %250 = vmatpush1.msra.mxu0 0.0
  %251 = vmatprep.subr.mxu0 0.0
  %252 = vmatpush1.msra.mxu0 %v210
  %253 = vmatprep.subr.mxu0 0.0
  %254 = vmatpush1.msra.mxu0 %v209
  %255 = vmatprep.subr.mxu0 0.0
  %256 = vmatpush1.msra.mxu0 %v208
  %257 = vmatprep.subr.mxu0 0.0
  %258 = vmatpush1.msra.mxu0 %v207
  %259 = vmatprep.subr.mxu0 0.0
  %260 = vmatpush2.msra.mxu0 0.0
  %261 = vmatprep.subr.mxu0 0.0
  %262 = vmatpush2.msra.mxu0 0.0
  %263 = vmatprep.subr.mxu0 0.0
  %264 = vmatpush2.msra.mxu0 0.0
  %265 = vmatprep.subr.mxu0 0.0
  %266 = vmatpush2.msra.mxu0 0.0
  %267 = vmatprep.subr.mxu0 0.0
  %268 = vmatpush2.msra.mxu0 0.0
  %269 = vmatprep.subr.mxu0 0.0
  %270 = vmatpush2.msra.mxu0 0.0
  %271 = vmatprep.subr.mxu0 0.0
  %272 = vmatpush2.msra.mxu0 0.0
  %273 = vmatprep.subr.mxu0 0.0
  %274 = vmatpush2.msra.mxu0 0.0
  %275 = vmatprep.subr.mxu0 0.0
  %276 = vmatpush2.msra.mxu0 0.0
  %277 = vmatprep.subr.mxu0 0.0
  %278 = vmatpush2.msra.mxu0 0.0
  %279 = vmatprep.subr.mxu0 0.0
  %280 = vmatpush2.msra.mxu0 0.0
  %281 = vmatprep.subr.mxu0 0.0
  %282 = vmatpush2.msra.mxu0 0.0
  %283 = vmatprep.subr.mxu0 0.0
  %284 = vmatpush2.msra.mxu0 0.0
  %285 = vmatprep.subr.mxu0 0.0
  %286 = vmatpush2.msra.mxu0 0.0
  %287 = vmatprep.subr.mxu0 0.0
  %288 = vmatpush2.msra.mxu0 0.0
  %289 = vmatprep.subr.mxu0 0.0
  %290 = vmatpush2.msra.mxu0 0.0
  %291 = vmatprep.mubr.f32.mxu0 0.0
  %292 = vmatmul.mubr.f32.gmra.mxu0 %v225
  %v293 = vpop.f32.mrf.mxu0
  %v294 = vadd.f32 0.0, %v293
  %v295 = vpop.f32.mrf.mxu0
  %296 = vdwg.mxu0
  %v297 = vadd.f32 %v222, %v294
  %v298 = vxor.u32 %v297, 2147483648
  %v299 = vmul.f32 %v298, 1.442695
  %v300 = vpow.pop %v299
  %v301 = vadd.f32 %v300, 1.0
  %v302 = vrcp.pop %v301
  %v303 = vmul.f32 1.0, %v302
  %v304 = vtanh.pop %v297
  %306 = vrot.lane.b32.xlu0 %v217, 32
  %v307 = vpop.permute.xlu0 %306
  %v309 = vmul.f32 %v303, %v307
  %311 = vrot.lane.b32.xlu0 %v304, 64
  %v312 = vpop.permute.xlu0 %311
  %v314 = vmul.f32 %v303, %v312
  %316 = vrot.lane.b32.xlu0 %v314, 32
  %v317 = vpop.permute.xlu0 %316
  %v319 = vadd.f32 %v309, %v317
  %v320 = vtanh.pop %v319
  %322 = vrot.lane.b32.xlu0 %v320, 64
  %v323 = vpop.permute.xlu0 %322
  %v325 = vmul.f32 %v303, %v323
  %vm326 = vcmp.gt.s32.totalorder %v206, 0
  %v327 = vsel %vm326, 1, 0
  %328 = vset.pattern.permute.xlu0 0
  %329 = vperm.xlu0 %328, %v327
  %v330 = vpop.permute.xlu0 %329
  %vm331 = vcmp.eq.s32.totalorder %v330, 1
  %332 = vrot.lane.b32.xlu0 %v216, 96
  %v333 = vpop.permute.xlu0 %332
  %v335 = vsel %vm331, %v325, %v333
  %v336 = vsel %vm331, %v319, %v307
  %v337 = vsel %vm331, %v325, 0.0
  %339 = vrot.lane.b32.xlu0 %v337, 32
  %v340 = vpop.permute.xlu0 %339
  %342 = vst.msk [vmem:[%s7] sm:$0xff] %vm223, %v340
  %v343 = vld [vmem:[#allocation2 + $0x78] sm:$0xff]
  %v345 = vsel %vm223, %v219, 0
  %347 = vmatprep.subr.mxu0 0.0
  %348 = vmatpush1.msra.mxu0 0.0
  %349 = vmatprep.subr.mxu0 0.0
  %350 = vmatpush1.msra.mxu0 0.0
  %351 = vmatprep.subr.mxu0 0.0
  %352 = vmatpush1.msra.mxu0 0.0
  %353 = vmatprep.subr.mxu0 0.0
  %354 = vmatpush1.msra.mxu0 0.0
  %355 = vmatprep.subr.mxu0 0.0
  %356 = vmatpush1.msra.mxu0 0.0
  %357 = vmatprep.subr.mxu0 0.0
  %358 = vmatpush1.msra.mxu0 0.0
  %359 = vmatprep.subr.mxu0 0.0
  %360 = vmatpush1.msra.mxu0 0.0
  %361 = vmatprep.subr.mxu0 0.0
  %362 = vmatpush1.msra.mxu0 0.0
  %363 = vmatprep.subr.mxu0 0.0
  %364 = vmatpush1.msra.mxu0 0.0
  %365 = vmatprep.subr.mxu0 0.0
  %366 = vmatpush1.msra.mxu0 0.0
  %367 = vmatprep.subr.mxu0 0.0
  %368 = vmatpush1.msra.mxu0 0.0
  %369 = vmatprep.subr.mxu0 0.0
  %370 = vmatpush1.msra.mxu0 0.0
  %371 = vmatprep.subr.mxu0 0.0
  %372 = vmatpush1.msra.mxu0 %v215
  %373 = vmatprep.subr.mxu0 0.0
  %374 = vmatpush1.msra.mxu0 %v214
  %375 = vmatprep.subr.mxu0 0.0
  %376 = vmatpush1.msra.mxu0 %v213
  %377 = vmatprep.subr.mxu0 0.0
  %378 = vmatpush1.msra.mxu0 %v212
  %379 = vmatprep.subr.mxu0 0.0
  %380 = vmatpush2.msra.mxu0 0.0
  %381 = vmatprep.subr.mxu0 0.0
  %382 = vmatpush2.msra.mxu0 0.0
  %383 = vmatprep.subr.mxu0 0.0
  %384 = vmatpush2.msra.mxu0 0.0
  %385 = vmatprep.subr.mxu0 0.0
  %386 = vmatpush2.msra.mxu0 0.0
  %387 = vmatprep.subr.mxu0 0.0
  %388 = vmatpush2.msra.mxu0 0.0
  %389 = vmatprep.subr.mxu0 0.0
  %390 = vmatpush2.msra.mxu0 0.0
  %391 = vmatprep.subr.mxu0 0.0
  %392 = vmatpush2.msra.mxu0 0.0
  %393 = vmatprep.subr.mxu0 0.0
  %394 = vmatpush2.msra.mxu0 0.0
  %395 = vmatprep.subr.mxu0 0.0
  %396 = vmatpush2.msra.mxu0 0.0
  %397 = vmatprep.subr.mxu0 0.0
  %398 = vmatpush2.msra.mxu0 0.0
  %399 = vmatprep.subr.mxu0 0.0
  %400 = vmatpush2.msra.mxu0 0.0
  %401 = vmatprep.subr.mxu0 0.0
  %402 = vmatpush2.msra.mxu0 0.0
  %403 = vmatprep.subr.mxu0 0.0
  %404 = vmatpush2.msra.mxu0 0.0
  %405 = vmatprep.subr.mxu0 0.0
  %406 = vmatpush2.msra.mxu0 0.0
  %407 = vmatprep.subr.mxu0 0.0
  %408 = vmatpush2.msra.mxu0 0.0
  %409 = vmatprep.subr.mxu0 0.0
  %410 = vmatpush2.msra.mxu0 0.0
  %411 = vmatprep.mubr.f32.mxu0 0.0
  %412 = vmatmul.mubr.f32.gmra.mxu0 %v345
  %v413 = vpop.f32.mrf.mxu0
  %v414 = vadd.f32 0.0, %v413
  %v415 = vpop.f32.mrf.mxu0
  %416 = vdwg.mxu0
  %v417 = vadd.f32 %v343, %v414
  %v418 = vxor.u32 %v417, 2147483648
  %v419 = vmul.f32 %v418, 1.442695
  %v420 = vpow.pop %v419
  %v421 = vadd.f32 %v420, 1.0
  %v422 = vrcp.pop %v421
  %v423 = vmul.f32 1.0, %v422
  %v424 = vtanh.pop %v417
  %426 = vrot.lane.b32.xlu0 %v221, 32
  %v427 = vpop.permute.xlu0 %426
  %v429 = vmul.f32 %v423, %v427
  %431 = vrot.lane.b32.xlu0 %v424, 64
  %v432 = vpop.permute.xlu0 %431
  %v434 = vmul.f32 %v423, %v432
  %436 = vrot.lane.b32.xlu0 %v434, 32
  %v437 = vpop.permute.xlu0 %436
  %v439 = vadd.f32 %v429, %v437
  %v440 = vtanh.pop %v439
  %442 = vrot.lane.b32.xlu0 %v440, 64
  %v443 = vpop.permute.xlu0 %442
  %v445 = vmul.f32 %v423, %v443
  %vm446 = vcmp.gt.s32.totalorder %v206, 7
  %v447 = vsel %vm446, 1, 0
  %448 = vset.pattern.permute.xlu0 0
  %449 = vperm.xlu0 %448, %v447
  %v450 = vpop.permute.xlu0 %449
  %vm451 = vcmp.eq.s32.totalorder %v450, 1
  %452 = vrot.lane.b32.xlu0 %v219, 96
  %v453 = vpop.permute.xlu0 %452
  %v455 = vsel %vm451, %v445, %v453
  %v456 = vsel %vm451, %v439, %v427
  %v457 = vsel %vm451, %v445, 0.0
  %459 = vrot.lane.b32.xlu0 %v457, 32
  %v460 = vpop.permute.xlu0 %459
  %s462 = scalar_lea.vmem %s8, 56
  %463 = vst.msk [vmem:[%s462] sm:$0xff] %vm223, %v460
  %v464 = vld [vmem:[#allocation2 + $0x10] sm:$0xff]
  %466 = vrot.lane.b32.xlu0 %v335, 32
  %v467 = vpop.permute.xlu0 %466
  %v468 = vsel %vm223, %v467, 0
  %470 = vmatprep.subr.mxu0 0.0
  %471 = vmatpush1.msra.mxu0 0.0
  %472 = vmatprep.subr.mxu0 0.0
  %473 = vmatpush1.msra.mxu0 0.0
  %474 = vmatprep.subr.mxu0 0.0
  %475 = vmatpush1.msra.mxu0 0.0
  %476 = vmatprep.subr.mxu0 0.0
  %477 = vmatpush1.msra.mxu0 0.0
  %478 = vmatprep.subr.mxu0 0.0
  %479 = vmatpush1.msra.mxu0 0.0
  %480 = vmatprep.subr.mxu0 0.0
  %481 = vmatpush1.msra.mxu0 0.0
  %482 = vmatprep.subr.mxu0 0.0
  %483 = vmatpush1.msra.mxu0 0.0
  %484 = vmatprep.subr.mxu0 0.0
  %485 = vmatpush1.msra.mxu0 0.0
  %486 = vmatprep.subr.mxu0 0.0
  %487 = vmatpush1.msra.mxu0 0.0
  %488 = vmatprep.subr.mxu0 0.0
  %489 = vmatpush1.msra.mxu0 0.0
  %490 = vmatprep.subr.mxu0 0.0
  %491 = vmatpush1.msra.mxu0 0.0
  %492 = vmatprep.subr.mxu0 0.0
  %493 = vmatpush1.msra.mxu0 0.0
  %494 = vmatprep.subr.mxu0 0.0
  %495 = vmatpush1.msra.mxu0 %v210
  %496 = vmatprep.subr.mxu0 0.0
  %497 = vmatpush1.msra.mxu0 %v209
  %498 = vmatprep.subr.mxu0 0.0
  %499 = vmatpush1.msra.mxu0 %v208
  %500 = vmatprep.subr.mxu0 0.0
  %501 = vmatpush1.msra.mxu0 %v207
  %502 = vmatprep.subr.mxu0 0.0
  %503 = vmatpush2.msra.mxu0 0.0
  %504 = vmatprep.subr.mxu0 0.0
  %505 = vmatpush2.msra.mxu0 0.0
  %506 = vmatprep.subr.mxu0 0.0
  %507 = vmatpush2.msra.mxu0 0.0
  %508 = vmatprep.subr.mxu0 0.0
  %509 = vmatpush2.msra.mxu0 0.0
  %510 = vmatprep.subr.mxu0 0.0
  %511 = vmatpush2.msra.mxu0 0.0
  %512 = vmatprep.subr.mxu0 0.0
  %513 = vmatpush2.msra.mxu0 0.0
  %514 = vmatprep.subr.mxu0 0.0
  %515 = vmatpush2.msra.mxu0 0.0
  %516 = vmatprep.subr.mxu0 0.0
  %517 = vmatpush2.msra.mxu0 0.0
  %518 = vmatprep.subr.mxu0 0.0
  %519 = vmatpush2.msra.mxu0 0.0
  %520 = vmatprep.subr.mxu0 0.0
  %521 = vmatpush2.msra.mxu0 0.0
  %522 = vmatprep.subr.mxu0 0.0
  %523 = vmatpush2.msra.mxu0 0.0
  %524 = vmatprep.subr.mxu0 0.0
  %525 = vmatpush2.msra.mxu0 0.0
  %526 = vmatprep.subr.mxu0 0.0
  %527 = vmatpush2.msra.mxu0 0.0
  %528 = vmatprep.subr.mxu0 0.0
  %529 = vmatpush2.msra.mxu0 0.0
  %530 = vmatprep.subr.mxu0 0.0
  %531 = vmatpush2.msra.mxu0 0.0
  %532 = vmatprep.subr.mxu0 0.0
  %533 = vmatpush2.msra.mxu0 0.0
  %534 = vmatprep.mubr.f32.mxu0 0.0
  %535 = vmatmul.mubr.f32.gmra.mxu0 %v468
  %v536 = vpop.f32.mrf.mxu0
  %v537 = vadd.f32 0.0, %v536
  %v538 = vpop.f32.mrf.mxu0
  %539 = vdwg.mxu0
  %v540 = vadd.f32 %v464, %v537
  %v541 = vxor.u32 %v540, 2147483648
  %v542 = vmul.f32 %v541, 1.442695
  %v543 = vpow.pop %v542
  %v544 = vadd.f32 %v543, 1.0
  %v545 = vrcp.pop %v544
  %v546 = vmul.f32 1.0, %v545
  %v547 = vtanh.pop %v540
  %v548 = vmul.f32 %v546, %v336
  %550 = vrot.lane.b32.xlu0 %v547, 64
  %v551 = vpop.permute.xlu0 %550
  %v553 = vmul.f32 %v546, %v551
  %555 = vrot.lane.b32.xlu0 %v553, 32
  %v556 = vpop.permute.xlu0 %555
  %v558 = vadd.f32 %v548, %v556
  %v559 = vtanh.pop %v558
  %561 = vrot.lane.b32.xlu0 %v559, 64
  %v562 = vpop.permute.xlu0 %561
  %v564 = vmul.f32 %v546, %v562
  %vm565 = vcmp.gt.s32.totalorder %v206, 1
  %v566 = vsel %vm565, 1, 0
  %567 = vset.pattern.permute.xlu0 0
  %568 = vperm.xlu0 %567, %v566
  %v569 = vpop.permute.xlu0 %568
  %vm570 = vcmp.eq.s32.totalorder %v569, 1
  %v571 = vsel %vm570, %v564, %v335
  %v572 = vsel %vm570, %v558, %v336
  %v573 = vsel %vm570, %v564, 0.0
  %575 = vrot.lane.b32.xlu0 %v573, 32
  %v576 = vpop.permute.xlu0 %575
  %s578 = scalar_lea.vmem %s7, 8
  %579 = vst.msk [vmem:[%s578] sm:$0xff] %vm223, %v576
  %v580 = vld [vmem:[#allocation2 + $0x68] sm:$0xff]
  %582 = vrot.lane.b32.xlu0 %v455, 32
  %v583 = vpop.permute.xlu0 %582
  %v584 = vsel %vm223, %v583, 0
  %586 = vmatprep.subr.mxu0 0.0
  %587 = vmatpush1.msra.mxu0 0.0
  %588 = vmatprep.subr.mxu0 0.0
  %589 = vmatpush1.msra.mxu0 0.0
  %590 = vmatprep.subr.mxu0 0.0
  %591 = vmatpush1.msra.mxu0 0.0
  %592 = vmatprep.subr.mxu0 0.0
  %593 = vmatpush1.msra.mxu0 0.0
  %594 = vmatprep.subr.mxu0 0.0
  %595 = vmatpush1.msra.mxu0 0.0
  %596 = vmatprep.subr.mxu0 0.0
  %597 = vmatpush1.msra.mxu0 0.0
  %598 = vmatprep.subr.mxu0 0.0
  %599 = vmatpush1.msra.mxu0 0.0
  %600 = vmatprep.subr.mxu0 0.0
  %601 = vmatpush1.msra.mxu0 0.0
  %602 = vmatprep.subr.mxu0 0.0
  %603 = vmatpush1.msra.mxu0 0.0
  %604 = vmatprep.subr.mxu0 0.0
  %605 = vmatpush1.msra.mxu0 0.0
  %606 = vmatprep.subr.mxu0 0.0
  %607 = vmatpush1.msra.mxu0 0.0
  %608 = vmatprep.subr.mxu0 0.0
  %609 = vmatpush1.msra.mxu0 0.0
  %610 = vmatprep.subr.mxu0 0.0
  %611 = vmatpush1.msra.mxu0 %v215
  %612 = vmatprep.subr.mxu0 0.0
  %613 = vmatpush1.msra.mxu0 %v214
  %614 = vmatprep.subr.mxu0 0.0
  %615 = vmatpush1.msra.mxu0 %v213
  %616 = vmatprep.subr.mxu0 0.0
  %617 = vmatpush1.msra.mxu0 %v212
  %618 = vmatprep.subr.mxu0 0.0
  %619 = vmatpush2.msra.mxu0 0.0
  %620 = vmatprep.subr.mxu0 0.0
  %621 = vmatpush2.msra.mxu0 0.0
  %622 = vmatprep.subr.mxu0 0.0
  %623 = vmatpush2.msra.mxu0 0.0
  %624 = vmatprep.subr.mxu0 0.0
  %625 = vmatpush2.msra.mxu0 0.0
  %626 = vmatprep.subr.mxu0 0.0
  %627 = vmatpush2.msra.mxu0 0.0
  %628 = vmatprep.subr.mxu0 0.0
  %629 = vmatpush2.msra.mxu0 0.0
  %630 = vmatprep.subr.mxu0 0.0
  %631 = vmatpush2.msra.mxu0 0.0
  %632 = vmatprep.subr.mxu0 0.0
  %633 = vmatpush2.msra.mxu0 0.0
  %634 = vmatprep.subr.mxu0 0.0
  %635 = vmatpush2.msra.mxu0 0.0
  %636 = vmatprep.subr.mxu0 0.0
  %637 = vmatpush2.msra.mxu0 0.0
  %638 = vmatprep.subr.mxu0 0.0
  %639 = vmatpush2.msra.mxu0 0.0
  %640 = vmatprep.subr.mxu0 0.0
  %641 = vmatpush2.msra.mxu0 0.0
  %642 = vmatprep.subr.mxu0 0.0
  %643 = vmatpush2.msra.mxu0 0.0
  %644 = vmatprep.subr.mxu0 0.0
  %645 = vmatpush2.msra.mxu0 0.0
  %646 = vmatprep.subr.mxu0 0.0
  %647 = vmatpush2.msra.mxu0 0.0
  %648 = vmatprep.subr.mxu0 0.0
  %649 = vmatpush2.msra.mxu0 0.0
  %650 = vmatprep.mubr.f32.mxu0 0.0
  %651 = vmatmul.mubr.f32.gmra.mxu0 %v584
  %v652 = vpop.f32.mrf.mxu0
  %v653 = vadd.f32 0.0, %v652
  %v654 = vpop.f32.mrf.mxu0
  %655 = vdwg.mxu0
  %v656 = vadd.f32 %v580, %v653
  %v657 = vxor.u32 %v656, 2147483648
  %v658 = vmul.f32 %v657, 1.442695
  %v659 = vpow.pop %v658
  %v660 = vadd.f32 %v659, 1.0
  %v661 = vrcp.pop %v660
  %v662 = vmul.f32 1.0, %v661
  %v663 = vtanh.pop %v656
  %v664 = vmul.f32 %v662, %v456
  %666 = vrot.lane.b32.xlu0 %v663, 64
  %v667 = vpop.permute.xlu0 %666
  %v669 = vmul.f32 %v662, %v667
  %671 = vrot.lane.b32.xlu0 %v669, 32
  %v672 = vpop.permute.xlu0 %671
  %v674 = vadd.f32 %v664, %v672
  %v675 = vtanh.pop %v674
  %677 = vrot.lane.b32.xlu0 %v675, 64
  %v678 = vpop.permute.xlu0 %677
  %v680 = vmul.f32 %v662, %v678
  %vm681 = vcmp.gt.s32.totalorder %v206, 6
  %v682 = vsel %vm681, 1, 0
  %683 = vset.pattern.permute.xlu0 0
  %684 = vperm.xlu0 %683, %v682
  %v685 = vpop.permute.xlu0 %684
  %vm686 = vcmp.eq.s32.totalorder %v685, 1
  %v687 = vsel %vm686, %v680, %v455
  %v688 = vsel %vm686, %v674, %v456
  %v689 = vsel %vm686, %v680, 0.0
  %691 = vrot.lane.b32.xlu0 %v689, 32
  %v692 = vpop.permute.xlu0 %691
  %s694 = scalar_lea.vmem %s8, 48
  %695 = vst.msk [vmem:[%s694] sm:$0xff] %vm223, %v692
  %v696 = vld [vmem:[#allocation2 + $0x20] sm:$0xff]
  %698 = vrot.lane.b32.xlu0 %v571, 32
  %v699 = vpop.permute.xlu0 %698
  %v700 = vsel %vm223, %v699, 0
  %702 = vmatprep.subr.mxu0 0.0
  %703 = vmatpush1.msra.mxu0 0.0
  %704 = vmatprep.subr.mxu0 0.0
  %705 = vmatpush1.msra.mxu0 0.0
  %706 = vmatprep.subr.mxu0 0.0
  %707 = vmatpush1.msra.mxu0 0.0
  %708 = vmatprep.subr.mxu0 0.0
  %709 = vmatpush1.msra.mxu0 0.0
  %710 = vmatprep.subr.mxu0 0.0
  %711 = vmatpush1.msra.mxu0 0.0
  %712 = vmatprep.subr.mxu0 0.0
  %713 = vmatpush1.msra.mxu0 0.0
  %714 = vmatprep.subr.mxu0 0.0
  %715 = vmatpush1.msra.mxu0 0.0
  %716 = vmatprep.subr.mxu0 0.0
  %717 = vmatpush1.msra.mxu0 0.0
  %718 = vmatprep.subr.mxu0 0.0
  %719 = vmatpush1.msra.mxu0 0.0
  %720 = vmatprep.subr.mxu0 0.0
  %721 = vmatpush1.msra.mxu0 0.0
  %722 = vmatprep.subr.mxu0 0.0
  %723 = vmatpush1.msra.mxu0 0.0
  %724 = vmatprep.subr.mxu0 0.0
  %725 = vmatpush1.msra.mxu0 0.0
  %726 = vmatprep.subr.mxu0 0.0
  %727 = vmatpush1.msra.mxu0 %v210
  %728 = vmatprep.subr.mxu0 0.0
  %729 = vmatpush1.msra.mxu0 %v209
  %730 = vmatprep.subr.mxu0 0.0
  %731 = vmatpush1.msra.mxu0 %v208
  %732 = vmatprep.subr.mxu0 0.0
  %733 = vmatpush1.msra.mxu0 %v207
  %734 = vmatprep.subr.mxu0 0.0
  %735 = vmatpush2.msra.mxu0 0.0
  %736 = vmatprep.subr.mxu0 0.0
  %737 = vmatpush2.msra.mxu0 0.0
  %738 = vmatprep.subr.mxu0 0.0
  %739 = vmatpush2.msra.mxu0 0.0
  %740 = vmatprep.subr.mxu0 0.0
  %741 = vmatpush2.msra.mxu0 0.0
  %742 = vmatprep.subr.mxu0 0.0
  %743 = vmatpush2.msra.mxu0 0.0
  %744 = vmatprep.subr.mxu0 0.0
  %745 = vmatpush2.msra.mxu0 0.0
  %746 = vmatprep.subr.mxu0 0.0
  %747 = vmatpush2.msra.mxu0 0.0
  %748 = vmatprep.subr.mxu0 0.0
  %749 = vmatpush2.msra.mxu0 0.0
  %750 = vmatprep.subr.mxu0 0.0
  %751 = vmatpush2.msra.mxu0 0.0
  %752 = vmatprep.subr.mxu0 0.0
  %753 = vmatpush2.msra.mxu0 0.0
  %754 = vmatprep.subr.mxu0 0.0
  %755 = vmatpush2.msra.mxu0 0.0
  %756 = vmatprep.subr.mxu0 0.0
  %757 = vmatpush2.msra.mxu0 0.0
  %758 = vmatprep.subr.mxu0 0.0
  %759 = vmatpush2.msra.mxu0 0.0
  %760 = vmatprep.subr.mxu0 0.0
  %761 = vmatpush2.msra.mxu0 0.0
  %762 = vmatprep.subr.mxu0 0.0
  %763 = vmatpush2.msra.mxu0 0.0
  %764 = vmatprep.subr.mxu0 0.0
  %765 = vmatpush2.msra.mxu0 0.0
  %766 = vmatprep.mubr.f32.mxu0 0.0
  %767 = vmatmul.mubr.f32.gmra.mxu0 %v700
  %v768 = vpop.f32.mrf.mxu0
  %v769 = vadd.f32 0.0, %v768
  %v770 = vpop.f32.mrf.mxu0
  %771 = vdwg.mxu0
  %v772 = vadd.f32 %v696, %v769
  %v773 = vxor.u32 %v772, 2147483648
  %v774 = vmul.f32 %v773, 1.442695
  %v775 = vpow.pop %v774
  %v776 = vadd.f32 %v775, 1.0
  %v777 = vrcp.pop %v776
  %v778 = vmul.f32 1.0, %v777
  %v779 = vtanh.pop %v772
  %v780 = vmul.f32 %v778, %v572
  %782 = vrot.lane.b32.xlu0 %v779, 64
  %v783 = vpop.permute.xlu0 %782
  %v785 = vmul.f32 %v778, %v783
  %787 = vrot.lane.b32.xlu0 %v785, 32
  %v788 = vpop.permute.xlu0 %787
  %v790 = vadd.f32 %v780, %v788
  %v791 = vtanh.pop %v790
  %793 = vrot.lane.b32.xlu0 %v791, 64
  %v794 = vpop.permute.xlu0 %793
  %v796 = vmul.f32 %v778, %v794
  %vm797 = vcmp.gt.s32.totalorder %v206, 2
  %v798 = vsel %vm797, 1, 0
  %799 = vset.pattern.permute.xlu0 0
  %800 = vperm.xlu0 %799, %v798
  %v801 = vpop.permute.xlu0 %800
  %vm802 = vcmp.eq.s32.totalorder %v801, 1
  %v803 = vsel %vm802, %v796, %v571
  %v804 = vsel %vm802, %v790, %v572
  %v805 = vsel %vm802, %v796, 0.0
  %807 = vrot.lane.b32.xlu0 %v805, 32
  %v808 = vpop.permute.xlu0 %807
  %s810 = scalar_lea.vmem %s7, 16
  %811 = vst.msk [vmem:[%s810] sm:$0xff] %vm223, %v808
  %v812 = vld [vmem:[#allocation2 + $0x58] sm:$0xff]
  %814 = vrot.lane.b32.xlu0 %v687, 32
  %v815 = vpop.permute.xlu0 %814
  %v816 = vsel %vm223, %v815, 0
  %818 = vmatprep.subr.mxu0 0.0
  %819 = vmatpush1.msra.mxu0 0.0
  %820 = vmatprep.subr.mxu0 0.0
  %821 = vmatpush1.msra.mxu0 0.0
  %822 = vmatprep.subr.mxu0 0.0
  %823 = vmatpush1.msra.mxu0 0.0
  %824 = vmatprep.subr.mxu0 0.0
  %825 = vmatpush1.msra.mxu0 0.0
  %826 = vmatprep.subr.mxu0 0.0
  %827 = vmatpush1.msra.mxu0 0.0
  %828 = vmatprep.subr.mxu0 0.0
  %829 = vmatpush1.msra.mxu0 0.0
  %830 = vmatprep.subr.mxu0 0.0
  %831 = vmatpush1.msra.mxu0 0.0
  %832 = vmatprep.subr.mxu0 0.0
  %833 = vmatpush1.msra.mxu0 0.0
  %834 = vmatprep.subr.mxu0 0.0
  %835 = vmatpush1.msra.mxu0 0.0
  %836 = vmatprep.subr.mxu0 0.0
  %837 = vmatpush1.msra.mxu0 0.0
  %838 = vmatprep.subr.mxu0 0.0
  %839 = vmatpush1.msra.mxu0 0.0
  %840 = vmatprep.subr.mxu0 0.0
  %841 = vmatpush1.msra.mxu0 0.0
  %842 = vmatprep.subr.mxu0 0.0
  %843 = vmatpush1.msra.mxu0 %v215
  %844 = vmatprep.subr.mxu0 0.0
  %845 = vmatpush1.msra.mxu0 %v214
  %846 = vmatprep.subr.mxu0 0.0
  %847 = vmatpush1.msra.mxu0 %v213
  %848 = vmatprep.subr.mxu0 0.0
  %849 = vmatpush1.msra.mxu0 %v212
  %850 = vmatprep.subr.mxu0 0.0
  %851 = vmatpush2.msra.mxu0 0.0
  %852 = vmatprep.subr.mxu0 0.0
  %853 = vmatpush2.msra.mxu0 0.0
  %854 = vmatprep.subr.mxu0 0.0
  %855 = vmatpush2.msra.mxu0 0.0
  %856 = vmatprep.subr.mxu0 0.0
  %857 = vmatpush2.msra.mxu0 0.0
  %858 = vmatprep.subr.mxu0 0.0
  %859 = vmatpush2.msra.mxu0 0.0
  %860 = vmatprep.subr.mxu0 0.0
  %861 = vmatpush2.msra.mxu0 0.0
  %862 = vmatprep.subr.mxu0 0.0
  %863 = vmatpush2.msra.mxu0 0.0
  %864 = vmatprep.subr.mxu0 0.0
  %865 = vmatpush2.msra.mxu0 0.0
  %866 = vmatprep.subr.mxu0 0.0
  %867 = vmatpush2.msra.mxu0 0.0
  %868 = vmatprep.subr.mxu0 0.0
  %869 = vmatpush2.msra.mxu0 0.0
  %870 = vmatprep.subr.mxu0 0.0
  %871 = vmatpush2.msra.mxu0 0.0
  %872 = vmatprep.subr.mxu0 0.0
  %873 = vmatpush2.msra.mxu0 0.0
  %874 = vmatprep.subr.mxu0 0.0
  %875 = vmatpush2.msra.mxu0 0.0
  %876 = vmatprep.subr.mxu0 0.0
  %877 = vmatpush2.msra.mxu0 0.0
  %878 = vmatprep.subr.mxu0 0.0
  %879 = vmatpush2.msra.mxu0 0.0
  %880 = vmatprep.subr.mxu0 0.0
  %881 = vmatpush2.msra.mxu0 0.0
  %882 = vmatprep.mubr.f32.mxu0 0.0
  %883 = vmatmul.mubr.f32.gmra.mxu0 %v816
  %v884 = vpop.f32.mrf.mxu0
  %v885 = vadd.f32 0.0, %v884
  %v886 = vpop.f32.mrf.mxu0
  %887 = vdwg.mxu0
  %v888 = vadd.f32 %v812, %v885
  %v889 = vxor.u32 %v888, 2147483648
  %v890 = vmul.f32 %v889, 1.442695
  %v891 = vpow.pop %v890
  %v892 = vadd.f32 %v891, 1.0
  %v893 = vrcp.pop %v892
  %v894 = vmul.f32 1.0, %v893
  %v895 = vtanh.pop %v888
  %v896 = vmul.f32 %v894, %v688
  %898 = vrot.lane.b32.xlu0 %v895, 64
  %v899 = vpop.permute.xlu0 %898
  %v901 = vmul.f32 %v894, %v899
  %903 = vrot.lane.b32.xlu0 %v901, 32
  %v904 = vpop.permute.xlu0 %903
  %v906 = vadd.f32 %v896, %v904
  %v907 = vtanh.pop %v906
  %909 = vrot.lane.b32.xlu0 %v907, 64
  %v910 = vpop.permute.xlu0 %909
  %v912 = vmul.f32 %v894, %v910
  %vm913 = vcmp.gt.s32.totalorder %v206, 5
  %v914 = vsel %vm913, 1, 0
  %915 = vset.pattern.permute.xlu0 0
  %916 = vperm.xlu0 %915, %v914
  %v917 = vpop.permute.xlu0 %916
  %vm918 = vcmp.eq.s32.totalorder %v917, 1
  %v919 = vsel %vm918, %v912, %v687
  %v920 = vsel %vm918, %v906, %v688
  %v921 = vsel %vm918, %v912, 0.0
  %923 = vrot.lane.b32.xlu0 %v921, 32
  %v924 = vpop.permute.xlu0 %923
  %s926 = scalar_lea.vmem %s8, 40
  %927 = vst.msk [vmem:[%s926] sm:$0xff] %vm223, %v924
  %v928 = vld [vmem:[#allocation2 + $0x30] sm:$0xff]
  %930 = vrot.lane.b32.xlu0 %v803, 32
  %v931 = vpop.permute.xlu0 %930
  %v932 = vsel %vm223, %v931, 0
  %934 = vmatprep.subr.mxu0 0.0
  %935 = vmatpush1.msra.mxu0 0.0
  %936 = vmatprep.subr.mxu0 0.0
  %937 = vmatpush1.msra.mxu0 0.0
  %938 = vmatprep.subr.mxu0 0.0
  %939 = vmatpush1.msra.mxu0 0.0
  %940 = vmatprep.subr.mxu0 0.0
  %941 = vmatpush1.msra.mxu0 0.0
  %942 = vmatprep.subr.mxu0 0.0
  %943 = vmatpush1.msra.mxu0 0.0
  %944 = vmatprep.subr.mxu0 0.0
  %945 = vmatpush1.msra.mxu0 0.0
  %946 = vmatprep.subr.mxu0 0.0
  %947 = vmatpush1.msra.mxu0 0.0
  %948 = vmatprep.subr.mxu0 0.0
  %949 = vmatpush1.msra.mxu0 0.0
  %950 = vmatprep.subr.mxu0 0.0
  %951 = vmatpush1.msra.mxu0 0.0
  %952 = vmatprep.subr.mxu0 0.0
  %953 = vmatpush1.msra.mxu0 0.0
  %954 = vmatprep.subr.mxu0 0.0
  %955 = vmatpush1.msra.mxu0 0.0
  %956 = vmatprep.subr.mxu0 0.0
  %957 = vmatpush1.msra.mxu0 0.0
  %958 = vmatprep.subr.mxu0 0.0
  %959 = vmatpush1.msra.mxu0 %v210
  %960 = vmatprep.subr.mxu0 0.0
  %961 = vmatpush1.msra.mxu0 %v209
  %962 = vmatprep.subr.mxu0 0.0
  %963 = vmatpush1.msra.mxu0 %v208
  %964 = vmatprep.subr.mxu0 0.0
  %965 = vmatpush1.msra.mxu0 %v207
  %966 = vmatprep.subr.mxu0 0.0
  %967 = vmatpush2.msra.mxu0 0.0
  %968 = vmatprep.subr.mxu0 0.0
  %969 = vmatpush2.msra.mxu0 0.0
  %970 = vmatprep.subr.mxu0 0.0
  %971 = vmatpush2.msra.mxu0 0.0
  %972 = vmatprep.subr.mxu0 0.0
  %973 = vmatpush2.msra.mxu0 0.0
  %974 = vmatprep.subr.mxu0 0.0
  %975 = vmatpush2.msra.mxu0 0.0
  %976 = vmatprep.subr.mxu0 0.0
  %977 = vmatpush2.msra.mxu0 0.0
  %978 = vmatprep.subr.mxu0 0.0
  %979 = vmatpush2.msra.mxu0 0.0
  %980 = vmatprep.subr.mxu0 0.0
  %981 = vmatpush2.msra.mxu0 0.0
  %982 = vmatprep.subr.mxu0 0.0
  %983 = vmatpush2.msra.mxu0 0.0
  %984 = vmatprep.subr.mxu0 0.0
  %985 = vmatpush2.msra.mxu0 0.0
  %986 = vmatprep.subr.mxu0 0.0
  %987 = vmatpush2.msra.mxu0 0.0
  %988 = vmatprep.subr.mxu0 0.0
  %989 = vmatpush2.msra.mxu0 0.0
  %990 = vmatprep.subr.mxu0 0.0
  %991 = vmatpush2.msra.mxu0 0.0
  %992 = vmatprep.subr.mxu0 0.0
  %993 = vmatpush2.msra.mxu0 0.0
  %994 = vmatprep.subr.mxu0 0.0
  %995 = vmatpush2.msra.mxu0 0.0
  %996 = vmatprep.subr.mxu0 0.0
  %997 = vmatpush2.msra.mxu0 0.0
  %998 = vmatprep.mubr.f32.mxu0 0.0
  %999 = vmatmul.mubr.f32.gmra.mxu0 %v932
  %v1000 = vpop.f32.mrf.mxu0
  %v1001 = vadd.f32 0.0, %v1000
  %v1002 = vpop.f32.mrf.mxu0
  %1003 = vdwg.mxu0
  %v1004 = vadd.f32 %v928, %v1001
  %v1005 = vxor.u32 %v1004, 2147483648
  %v1006 = vmul.f32 %v1005, 1.442695
  %v1007 = vpow.pop %v1006
  %v1008 = vadd.f32 %v1007, 1.0
  %v1009 = vrcp.pop %v1008
  %v1010 = vmul.f32 1.0, %v1009
  %v1011 = vtanh.pop %v1004
  %v1012 = vmul.f32 %v1010, %v804
  %1014 = vrot.lane.b32.xlu0 %v1011, 64
  %v1015 = vpop.permute.xlu0 %1014
  %v1017 = vmul.f32 %v1010, %v1015
  %1019 = vrot.lane.b32.xlu0 %v1017, 32
  %v1020 = vpop.permute.xlu0 %1019
  %v1022 = vadd.f32 %v1012, %v1020
  %v1023 = vtanh.pop %v1022
  %1025 = vrot.lane.b32.xlu0 %v1023, 64
  %v1026 = vpop.permute.xlu0 %1025
  %v1028 = vmul.f32 %v1010, %v1026
  %vm1029 = vcmp.gt.s32.totalorder %v206, 3
  %v1030 = vsel %vm1029, 1, 0
  %1031 = vset.pattern.permute.xlu0 0
  %1032 = vperm.xlu0 %1031, %v1030
  %v1033 = vpop.permute.xlu0 %1032
  %vm1034 = vcmp.eq.s32.totalorder %v1033, 1
  %v1035 = vsel %vm1034, %v1028, %v803
  %v1036 = vsel %vm1034, %v1022, %v804
  %v1037 = vsel %vm1034, %v1028, 0.0
  %1039 = vrot.lane.b32.xlu0 %v1037, 32
  %v1040 = vpop.permute.xlu0 %1039
  %s1042 = scalar_lea.vmem %s7, 24
  %1043 = vst.msk [vmem:[%s1042] sm:$0xff] %vm223, %v1040
  %v1044 = vld [vmem:[#allocation2 + $0x48] sm:$0xff]
  %1046 = vrot.lane.b32.xlu0 %v919, 32
  %v1047 = vpop.permute.xlu0 %1046
  %v1048 = vsel %vm223, %v1047, 0
  %1050 = vmatprep.subr.mxu0 0.0
  %1051 = vmatpush1.msra.mxu0 0.0
  %1052 = vmatprep.subr.mxu0 0.0
  %1053 = vmatpush1.msra.mxu0 0.0
  %1054 = vmatprep.subr.mxu0 0.0
  %1055 = vmatpush1.msra.mxu0 0.0
  %1056 = vmatprep.subr.mxu0 0.0
  %1057 = vmatpush1.msra.mxu0 0.0
  %1058 = vmatprep.subr.mxu0 0.0
  %1059 = vmatpush1.msra.mxu0 0.0
  %1060 = vmatprep.subr.mxu0 0.0
  %1061 = vmatpush1.msra.mxu0 0.0
  %1062 = vmatprep.subr.mxu0 0.0
  %1063 = vmatpush1.msra.mxu0 0.0
  %1064 = vmatprep.subr.mxu0 0.0
  %1065 = vmatpush1.msra.mxu0 0.0
  %1066 = vmatprep.subr.mxu0 0.0
  %1067 = vmatpush1.msra.mxu0 0.0
  %1068 = vmatprep.subr.mxu0 0.0
  %1069 = vmatpush1.msra.mxu0 0.0
  %1070 = vmatprep.subr.mxu0 0.0
  %1071 = vmatpush1.msra.mxu0 0.0
  %1072 = vmatprep.subr.mxu0 0.0
  %1073 = vmatpush1.msra.mxu0 0.0
  %1074 = vmatprep.subr.mxu0 0.0
  %1075 = vmatpush1.msra.mxu0 %v215
  %1076 = vmatprep.subr.mxu0 0.0
  %1077 = vmatpush1.msra.mxu0 %v214
  %1078 = vmatprep.subr.mxu0 0.0
  %1079 = vmatpush1.msra.mxu0 %v213
  %1080 = vmatprep.subr.mxu0 0.0
  %1081 = vmatpush1.msra.mxu0 %v212
  %1082 = vmatprep.subr.mxu0 0.0
  %1083 = vmatpush2.msra.mxu0 0.0
  %1084 = vmatprep.subr.mxu0 0.0
  %1085 = vmatpush2.msra.mxu0 0.0
  %1086 = vmatprep.subr.mxu0 0.0
  %1087 = vmatpush2.msra.mxu0 0.0
  %1088 = vmatprep.subr.mxu0 0.0
  %1089 = vmatpush2.msra.mxu0 0.0
  %1090 = vmatprep.subr.mxu0 0.0
  %1091 = vmatpush2.msra.mxu0 0.0
  %1092 = vmatprep.subr.mxu0 0.0
  %1093 = vmatpush2.msra.mxu0 0.0
  %1094 = vmatprep.subr.mxu0 0.0
  %1095 = vmatpush2.msra.mxu0 0.0
  %1096 = vmatprep.subr.mxu0 0.0
  %1097 = vmatpush2.msra.mxu0 0.0
  %1098 = vmatprep.subr.mxu0 0.0
  %1099 = vmatpush2.msra.mxu0 0.0
  %1100 = vmatprep.subr.mxu0 0.0
  %1101 = vmatpush2.msra.mxu0 0.0
  %1102 = vmatprep.subr.mxu0 0.0
  %1103 = vmatpush2.msra.mxu0 0.0
  %1104 = vmatprep.subr.mxu0 0.0
  %1105 = vmatpush2.msra.mxu0 0.0
  %1106 = vmatprep.subr.mxu0 0.0
  %1107 = vmatpush2.msra.mxu0 0.0
  %1108 = vmatprep.subr.mxu0 0.0
  %1109 = vmatpush2.msra.mxu0 0.0
  %1110 = vmatprep.subr.mxu0 0.0
  %1111 = vmatpush2.msra.mxu0 0.0
  %1112 = vmatprep.subr.mxu0 0.0
  %1113 = vmatpush2.msra.mxu0 0.0
  %1114 = vmatprep.mubr.f32.mxu0 0.0
  %1115 = vmatmul.mubr.f32.gmra.mxu0 %v1048
  %v1116 = vpop.f32.mrf.mxu0
  %v1117 = vadd.f32 0.0, %v1116
  %v1118 = vpop.f32.mrf.mxu0
  %1119 = vdwg.mxu0
  %v1120 = vadd.f32 %v1044, %v1117
  %v1121 = vxor.u32 %v1120, 2147483648
  %v1122 = vmul.f32 %v1121, 1.442695
  %v1123 = vpow.pop %v1122
  %v1124 = vadd.f32 %v1123, 1.0
  %v1125 = vrcp.pop %v1124
  %v1126 = vmul.f32 1.0, %v1125
  %v1127 = vtanh.pop %v1120
  %v1128 = vmul.f32 %v1126, %v920
  %1130 = vrot.lane.b32.xlu0 %v1127, 64
  %v1131 = vpop.permute.xlu0 %1130
  %v1133 = vmul.f32 %v1126, %v1131
  %1135 = vrot.lane.b32.xlu0 %v1133, 32
  %v1136 = vpop.permute.xlu0 %1135
  %v1138 = vadd.f32 %v1128, %v1136
  %v1139 = vtanh.pop %v1138
  %1141 = vrot.lane.b32.xlu0 %v1139, 64
  %v1142 = vpop.permute.xlu0 %1141
  %v1144 = vmul.f32 %v1126, %v1142
  %vm1145 = vcmp.gt.s32.totalorder %v206, 4
  %v1146 = vsel %vm1145, 1, 0
  %1147 = vset.pattern.permute.xlu0 0
  %1148 = vperm.xlu0 %1147, %v1146
  %v1149 = vpop.permute.xlu0 %1148
  %vm1150 = vcmp.eq.s32.totalorder %v1149, 1
  %v1151 = vsel %vm1150, %v1144, %v919
  %v1152 = vsel %vm1150, %v1138, %v920
  %v1153 = vsel %vm1150, %v1144, 0.0
  %1155 = vrot.lane.b32.xlu0 %v1153, 32
  %v1156 = vpop.permute.xlu0 %1155
  %s1158 = scalar_lea.vmem %s8, 32
  %1159 = vst.msk [vmem:[%s1158] sm:$0xff] %vm223, %v1156
  %v1160 = vld [vmem:[#allocation2 + $0x40] sm:$0xff]
  %1162 = vrot.lane.b32.xlu0 %v1035, 32
  %v1163 = vpop.permute.xlu0 %1162
  %v1164 = vsel %vm223, %v1163, 0
  %1166 = vmatprep.subr.mxu0 0.0
  %1167 = vmatpush1.msra.mxu0 0.0
  %1168 = vmatprep.subr.mxu0 0.0
  %1169 = vmatpush1.msra.mxu0 0.0
  %1170 = vmatprep.subr.mxu0 0.0
  %1171 = vmatpush1.msra.mxu0 0.0
  %1172 = vmatprep.subr.mxu0 0.0
  %1173 = vmatpush1.msra.mxu0 0.0
  %1174 = vmatprep.subr.mxu0 0.0
  %1175 = vmatpush1.msra.mxu0 0.0
  %1176 = vmatprep.subr.mxu0 0.0
  %1177 = vmatpush1.msra.mxu0 0.0
  %1178 = vmatprep.subr.mxu0 0.0
  %1179 = vmatpush1.msra.mxu0 0.0
  %1180 = vmatprep.subr.mxu0 0.0
  %1181 = vmatpush1.msra.mxu0 0.0
  %1182 = vmatprep.subr.mxu0 0.0
  %1183 = vmatpush1.msra.mxu0 0.0
  %1184 = vmatprep.subr.mxu0 0.0
  %1185 = vmatpush1.msra.mxu0 0.0
  %1186 = vmatprep.subr.mxu0 0.0
  %1187 = vmatpush1.msra.mxu0 0.0
  %1188 = vmatprep.subr.mxu0 0.0
  %1189 = vmatpush1.msra.mxu0 0.0
  %1190 = vmatprep.subr.mxu0 0.0
  %1191 = vmatpush1.msra.mxu0 %v210
  %1192 = vmatprep.subr.mxu0 0.0
  %1193 = vmatpush1.msra.mxu0 %v209
  %1194 = vmatprep.subr.mxu0 0.0
  %1195 = vmatpush1.msra.mxu0 %v208
  %1196 = vmatprep.subr.mxu0 0.0
  %1197 = vmatpush1.msra.mxu0 %v207
  %1198 = vmatprep.subr.mxu0 0.0
  %1199 = vmatpush2.msra.mxu0 0.0
  %1200 = vmatprep.subr.mxu0 0.0
  %1201 = vmatpush2.msra.mxu0 0.0
  %1202 = vmatprep.subr.mxu0 0.0
  %1203 = vmatpush2.msra.mxu0 0.0
  %1204 = vmatprep.subr.mxu0 0.0
  %1205 = vmatpush2.msra.mxu0 0.0
  %1206 = vmatprep.subr.mxu0 0.0
  %1207 = vmatpush2.msra.mxu0 0.0
  %1208 = vmatprep.subr.mxu0 0.0
  %1209 = vmatpush2.msra.mxu0 0.0
  %1210 = vmatprep.subr.mxu0 0.0
  %1211 = vmatpush2.msra.mxu0 0.0
  %1212 = vmatprep.subr.mxu0 0.0
  %1213 = vmatpush2.msra.mxu0 0.0
  %1214 = vmatprep.subr.mxu0 0.0
  %1215 = vmatpush2.msra.mxu0 0.0
  %1216 = vmatprep.subr.mxu0 0.0
  %1217 = vmatpush2.msra.mxu0 0.0
  %1218 = vmatprep.subr.mxu0 0.0
  %1219 = vmatpush2.msra.mxu0 0.0
  %1220 = vmatprep.subr.mxu0 0.0
  %1221 = vmatpush2.msra.mxu0 0.0
  %1222 = vmatprep.subr.mxu0 0.0
  %1223 = vmatpush2.msra.mxu0 0.0
  %1224 = vmatprep.subr.mxu0 0.0
  %1225 = vmatpush2.msra.mxu0 0.0
  %1226 = vmatprep.subr.mxu0 0.0
  %1227 = vmatpush2.msra.mxu0 0.0
  %1228 = vmatprep.subr.mxu0 0.0
  %1229 = vmatpush2.msra.mxu0 0.0
  %1230 = vmatprep.mubr.f32.mxu0 0.0
  %1231 = vmatmul.mubr.f32.gmra.mxu0 %v1164
  %v1232 = vpop.f32.mrf.mxu0
  %v1233 = vadd.f32 0.0, %v1232
  %v1234 = vpop.f32.mrf.mxu0
  %1235 = vdwg.mxu0
  %v1236 = vadd.f32 %v1160, %v1233
  %v1237 = vxor.u32 %v1236, 2147483648
  %v1238 = vmul.f32 %v1237, 1.442695
  %v1239 = vpow.pop %v1238
  %v1240 = vadd.f32 %v1239, 1.0
  %v1241 = vrcp.pop %v1240
  %v1242 = vmul.f32 1.0, %v1241
  %v1243 = vtanh.pop %v1236
  %v1244 = vmul.f32 %v1242, %v1036
  %1246 = vrot.lane.b32.xlu0 %v1243, 64
  %v1247 = vpop.permute.xlu0 %1246
  %v1249 = vmul.f32 %v1242, %v1247
  %1251 = vrot.lane.b32.xlu0 %v1249, 32
  %v1252 = vpop.permute.xlu0 %1251
  %v1254 = vadd.f32 %v1244, %v1252
  %v1255 = vtanh.pop %v1254
  %1257 = vrot.lane.b32.xlu0 %v1255, 64
  %v1258 = vpop.permute.xlu0 %1257
  %v1260 = vmul.f32 %v1242, %v1258
  %v1261 = vsel %vm1150, %v1260, %v1035
  %v1262 = vsel %vm1150, %v1254, %v1036
  %v1263 = vsel %vm1150, %v1260, 0.0
  %1265 = vrot.lane.b32.xlu0 %v1263, 32
  %v1266 = vpop.permute.xlu0 %1265
  %s1268 = scalar_lea.vmem %s7, 32
  %1269 = vst.msk [vmem:[%s1268] sm:$0xff] %vm223, %v1266
  %v1270 = vld [vmem:[#allocation2 + $0x38] sm:$0xff]
  %1272 = vrot.lane.b32.xlu0 %v1151, 32
  %v1273 = vpop.permute.xlu0 %1272
  %v1274 = vsel %vm223, %v1273, 0
  %1276 = vmatprep.subr.mxu0 0.0
  %1277 = vmatpush1.msra.mxu0 0.0
  %1278 = vmatprep.subr.mxu0 0.0
  %1279 = vmatpush1.msra.mxu0 0.0
  %1280 = vmatprep.subr.mxu0 0.0
  %1281 = vmatpush1.msra.mxu0 0.0
  %1282 = vmatprep.subr.mxu0 0.0
  %1283 = vmatpush1.msra.mxu0 0.0
  %1284 = vmatprep.subr.mxu0 0.0
  %1285 = vmatpush1.msra.mxu0 0.0
  %1286 = vmatprep.subr.mxu0 0.0
  %1287 = vmatpush1.msra.mxu0 0.0
  %1288 = vmatprep.subr.mxu0 0.0
  %1289 = vmatpush1.msra.mxu0 0.0
  %1290 = vmatprep.subr.mxu0 0.0
  %1291 = vmatpush1.msra.mxu0 0.0
  %1292 = vmatprep.subr.mxu0 0.0
  %1293 = vmatpush1.msra.mxu0 0.0
  %1294 = vmatprep.subr.mxu0 0.0
  %1295 = vmatpush1.msra.mxu0 0.0
  %1296 = vmatprep.subr.mxu0 0.0
  %1297 = vmatpush1.msra.mxu0 0.0
  %1298 = vmatprep.subr.mxu0 0.0
  %1299 = vmatpush1.msra.mxu0 0.0
  %1300 = vmatprep.subr.mxu0 0.0
  %1301 = vmatpush1.msra.mxu0 %v215
  %1302 = vmatprep.subr.mxu0 0.0
  %1303 = vmatpush1.msra.mxu0 %v214
  %1304 = vmatprep.subr.mxu0 0.0
  %1305 = vmatpush1.msra.mxu0 %v213
  %1306 = vmatprep.subr.mxu0 0.0
  %1307 = vmatpush1.msra.mxu0 %v212
  %1308 = vmatprep.subr.mxu0 0.0
  %1309 = vmatpush2.msra.mxu0 0.0
  %1310 = vmatprep.subr.mxu0 0.0
  %1311 = vmatpush2.msra.mxu0 0.0
  %1312 = vmatprep.subr.mxu0 0.0
  %1313 = vmatpush2.msra.mxu0 0.0
  %1314 = vmatprep.subr.mxu0 0.0
  %1315 = vmatpush2.msra.mxu0 0.0
  %1316 = vmatprep.subr.mxu0 0.0
  %1317 = vmatpush2.msra.mxu0 0.0
  %1318 = vmatprep.subr.mxu0 0.0
  %1319 = vmatpush2.msra.mxu0 0.0
  %1320 = vmatprep.subr.mxu0 0.0
  %1321 = vmatpush2.msra.mxu0 0.0
  %1322 = vmatprep.subr.mxu0 0.0
  %1323 = vmatpush2.msra.mxu0 0.0
  %1324 = vmatprep.subr.mxu0 0.0
  %1325 = vmatpush2.msra.mxu0 0.0
  %1326 = vmatprep.subr.mxu0 0.0
  %1327 = vmatpush2.msra.mxu0 0.0
  %1328 = vmatprep.subr.mxu0 0.0
  %1329 = vmatpush2.msra.mxu0 0.0
  %1330 = vmatprep.subr.mxu0 0.0
  %1331 = vmatpush2.msra.mxu0 0.0
  %1332 = vmatprep.subr.mxu0 0.0
  %1333 = vmatpush2.msra.mxu0 0.0
  %1334 = vmatprep.subr.mxu0 0.0
  %1335 = vmatpush2.msra.mxu0 0.0
  %1336 = vmatprep.subr.mxu0 0.0
  %1337 = vmatpush2.msra.mxu0 0.0
  %1338 = vmatprep.subr.mxu0 0.0
  %1339 = vmatpush2.msra.mxu0 0.0
  %1340 = vmatprep.mubr.f32.mxu0 0.0
  %1341 = vmatmul.mubr.f32.gmra.mxu0 %v1274
  %v1342 = vpop.f32.mrf.mxu0
  %v1343 = vadd.f32 0.0, %v1342
  %v1344 = vpop.f32.mrf.mxu0
  %1345 = vdwg.mxu0
  %v1346 = vadd.f32 %v1270, %v1343
  %v1347 = vxor.u32 %v1346, 2147483648
  %v1348 = vmul.f32 %v1347, 1.442695
  %v1349 = vpow.pop %v1348
  %v1350 = vadd.f32 %v1349, 1.0
  %v1351 = vrcp.pop %v1350
  %v1352 = vmul.f32 1.0, %v1351
  %v1353 = vtanh.pop %v1346
  %v1354 = vmul.f32 %v1352, %v1152
  %1356 = vrot.lane.b32.xlu0 %v1353, 64
  %v1357 = vpop.permute.xlu0 %1356
  %v1359 = vmul.f32 %v1352, %v1357
  %1361 = vrot.lane.b32.xlu0 %v1359, 32
  %v1362 = vpop.permute.xlu0 %1361
  %v1364 = vadd.f32 %v1354, %v1362
  %v1365 = vtanh.pop %v1364
  %1367 = vrot.lane.b32.xlu0 %v1365, 64
  %v1368 = vpop.permute.xlu0 %1367
  %v1370 = vmul.f32 %v1352, %v1368
  %v1371 = vsel %vm1034, %v1370, %v1151
  %v1372 = vsel %vm1034, %v1364, %v1152
  %v1373 = vsel %vm1034, %v1370, 0.0
  %1375 = vrot.lane.b32.xlu0 %v1373, 32
  %v1376 = vpop.permute.xlu0 %1375
  %s1378 = scalar_lea.vmem %s8, 24
  %1379 = vst.msk [vmem:[%s1378] sm:$0xff] %vm223, %v1376
  %v1380 = vld [vmem:[#allocation2 + $0x50] sm:$0xff]
  %1382 = vrot.lane.b32.xlu0 %v1261, 32
  %v1383 = vpop.permute.xlu0 %1382
  %v1384 = vsel %vm223, %v1383, 0
  %1386 = vmatprep.subr.mxu0 0.0
  %1387 = vmatpush1.msra.mxu0 0.0
  %1388 = vmatprep.subr.mxu0 0.0
  %1389 = vmatpush1.msra.mxu0 0.0
  %1390 = vmatprep.subr.mxu0 0.0
  %1391 = vmatpush1.msra.mxu0 0.0
  %1392 = vmatprep.subr.mxu0 0.0
  %1393 = vmatpush1.msra.mxu0 0.0
  %1394 = vmatprep.subr.mxu0 0.0
  %1395 = vmatpush1.msra.mxu0 0.0
  %1396 = vmatprep.subr.mxu0 0.0
  %1397 = vmatpush1.msra.mxu0 0.0
  %1398 = vmatprep.subr.mxu0 0.0
  %1399 = vmatpush1.msra.mxu0 0.0
  %1400 = vmatprep.subr.mxu0 0.0
  %1401 = vmatpush1.msra.mxu0 0.0
  %1402 = vmatprep.subr.mxu0 0.0
  %1403 = vmatpush1.msra.mxu0 0.0
  %1404 = vmatprep.subr.mxu0 0.0
  %1405 = vmatpush1.msra.mxu0 0.0
  %1406 = vmatprep.subr.mxu0 0.0
  %1407 = vmatpush1.msra.mxu0 0.0
  %1408 = vmatprep.subr.mxu0 0.0
  %1409 = vmatpush1.msra.mxu0 0.0
  %1410 = vmatprep.subr.mxu0 0.0
  %1411 = vmatpush1.msra.mxu0 %v210
  %1412 = vmatprep.subr.mxu0 0.0
  %1413 = vmatpush1.msra.mxu0 %v209
  %1414 = vmatprep.subr.mxu0 0.0
  %1415 = vmatpush1.msra.mxu0 %v208
  %1416 = vmatprep.subr.mxu0 0.0
  %1417 = vmatpush1.msra.mxu0 %v207
  %1418 = vmatprep.subr.mxu0 0.0
  %1419 = vmatpush2.msra.mxu0 0.0
  %1420 = vmatprep.subr.mxu0 0.0
  %1421 = vmatpush2.msra.mxu0 0.0
  %1422 = vmatprep.subr.mxu0 0.0
  %1423 = vmatpush2.msra.mxu0 0.0
  %1424 = vmatprep.subr.mxu0 0.0
  %1425 = vmatpush2.msra.mxu0 0.0
  %1426 = vmatprep.subr.mxu0 0.0
  %1427 = vmatpush2.msra.mxu0 0.0
  %1428 = vmatprep.subr.mxu0 0.0
  %1429 = vmatpush2.msra.mxu0 0.0
  %1430 = vmatprep.subr.mxu0 0.0
  %1431 = vmatpush2.msra.mxu0 0.0
  %1432 = vmatprep.subr.mxu0 0.0
  %1433 = vmatpush2.msra.mxu0 0.0
  %1434 = vmatprep.subr.mxu0 0.0
  %1435 = vmatpush2.msra.mxu0 0.0
  %1436 = vmatprep.subr.mxu0 0.0
  %1437 = vmatpush2.msra.mxu0 0.0
  %1438 = vmatprep.subr.mxu0 0.0
  %1439 = vmatpush2.msra.mxu0 0.0
  %1440 = vmatprep.subr.mxu0 0.0
  %1441 = vmatpush2.msra.mxu0 0.0
  %1442 = vmatprep.subr.mxu0 0.0
  %1443 = vmatpush2.msra.mxu0 0.0
  %1444 = vmatprep.subr.mxu0 0.0
  %1445 = vmatpush2.msra.mxu0 0.0
  %1446 = vmatprep.subr.mxu0 0.0
  %1447 = vmatpush2.msra.mxu0 0.0
  %1448 = vmatprep.subr.mxu0 0.0
  %1449 = vmatpush2.msra.mxu0 0.0
  %1450 = vmatprep.mubr.f32.mxu0 0.0
  %1451 = vmatmul.mubr.f32.gmra.mxu0 %v1384
  %v1452 = vpop.f32.mrf.mxu0
  %v1453 = vadd.f32 0.0, %v1452
  %v1454 = vpop.f32.mrf.mxu0
  %1455 = vdwg.mxu0
  %v1456 = vadd.f32 %v1380, %v1453
  %v1457 = vxor.u32 %v1456, 2147483648
  %v1458 = vmul.f32 %v1457, 1.442695
  %v1459 = vpow.pop %v1458
  %v1460 = vadd.f32 %v1459, 1.0
  %v1461 = vrcp.pop %v1460
  %v1462 = vmul.f32 1.0, %v1461
  %v1463 = vtanh.pop %v1456
  %v1464 = vmul.f32 %v1462, %v1262
  %1466 = vrot.lane.b32.xlu0 %v1463, 64
  %v1467 = vpop.permute.xlu0 %1466
  %v1469 = vmul.f32 %v1462, %v1467
  %1471 = vrot.lane.b32.xlu0 %v1469, 32
  %v1472 = vpop.permute.xlu0 %1471
  %v1474 = vadd.f32 %v1464, %v1472
  %v1475 = vtanh.pop %v1474
  %1477 = vrot.lane.b32.xlu0 %v1475, 64
  %v1478 = vpop.permute.xlu0 %1477
  %v1480 = vmul.f32 %v1462, %v1478
  %v1481 = vsel %vm918, %v1480, %v1261
  %v1482 = vsel %vm918, %v1474, %v1262
  %v1483 = vsel %vm918, %v1480, 0.0
  %1485 = vrot.lane.b32.xlu0 %v1483, 32
  %v1486 = vpop.permute.xlu0 %1485
  %s1488 = scalar_lea.vmem %s7, 40
  %1489 = vst.msk [vmem:[%s1488] sm:$0xff] %vm223, %v1486
  %v1490 = vld [vmem:[#allocation2 + $0x28] sm:$0xff]
  %1492 = vrot.lane.b32.xlu0 %v1371, 32
  %v1493 = vpop.permute.xlu0 %1492
  %v1494 = vsel %vm223, %v1493, 0
  %1496 = vmatprep.subr.mxu0 0.0
  %1497 = vmatpush1.msra.mxu0 0.0
  %1498 = vmatprep.subr.mxu0 0.0
  %1499 = vmatpush1.msra.mxu0 0.0
  %1500 = vmatprep.subr.mxu0 0.0
  %1501 = vmatpush1.msra.mxu0 0.0
  %1502 = vmatprep.subr.mxu0 0.0
  %1503 = vmatpush1.msra.mxu0 0.0
  %1504 = vmatprep.subr.mxu0 0.0
  %1505 = vmatpush1.msra.mxu0 0.0
  %1506 = vmatprep.subr.mxu0 0.0
  %1507 = vmatpush1.msra.mxu0 0.0
  %1508 = vmatprep.subr.mxu0 0.0
  %1509 = vmatpush1.msra.mxu0 0.0
  %1510 = vmatprep.subr.mxu0 0.0
  %1511 = vmatpush1.msra.mxu0 0.0
  %1512 = vmatprep.subr.mxu0 0.0
  %1513 = vmatpush1.msra.mxu0 0.0
  %1514 = vmatprep.subr.mxu0 0.0
  %1515 = vmatpush1.msra.mxu0 0.0
  %1516 = vmatprep.subr.mxu0 0.0
  %1517 = vmatpush1.msra.mxu0 0.0
  %1518 = vmatprep.subr.mxu0 0.0
  %1519 = vmatpush1.msra.mxu0 0.0
  %1520 = vmatprep.subr.mxu0 0.0
  %1521 = vmatpush1.msra.mxu0 %v215
  %1522 = vmatprep.subr.mxu0 0.0
  %1523 = vmatpush1.msra.mxu0 %v214
  %1524 = vmatprep.subr.mxu0 0.0
  %1525 = vmatpush1.msra.mxu0 %v213
  %1526 = vmatprep.subr.mxu0 0.0
  %1527 = vmatpush1.msra.mxu0 %v212
  %1528 = vmatprep.subr.mxu0 0.0
  %1529 = vmatpush2.msra.mxu0 0.0
  %1530 = vmatprep.subr.mxu0 0.0
  %1531 = vmatpush2.msra.mxu0 0.0
  %1532 = vmatprep.subr.mxu0 0.0
  %1533 = vmatpush2.msra.mxu0 0.0
  %1534 = vmatprep.subr.mxu0 0.0
  %1535 = vmatpush2.msra.mxu0 0.0
  %1536 = vmatprep.subr.mxu0 0.0
  %1537 = vmatpush2.msra.mxu0 0.0
  %1538 = vmatprep.subr.mxu0 0.0
  %1539 = vmatpush2.msra.mxu0 0.0
  %1540 = vmatprep.subr.mxu0 0.0
  %1541 = vmatpush2.msra.mxu0 0.0
  %1542 = vmatprep.subr.mxu0 0.0
  %1543 = vmatpush2.msra.mxu0 0.0
  %1544 = vmatprep.subr.mxu0 0.0
  %1545 = vmatpush2.msra.mxu0 0.0
  %1546 = vmatprep.subr.mxu0 0.0
  %1547 = vmatpush2.msra.mxu0 0.0
  %1548 = vmatprep.subr.mxu0 0.0
  %1549 = vmatpush2.msra.mxu0 0.0
  %1550 = vmatprep.subr.mxu0 0.0
  %1551 = vmatpush2.msra.mxu0 0.0
  %1552 = vmatprep.subr.mxu0 0.0
  %1553 = vmatpush2.msra.mxu0 0.0
  %1554 = vmatprep.subr.mxu0 0.0
  %1555 = vmatpush2.msra.mxu0 0.0
  %1556 = vmatprep.subr.mxu0 0.0
  %1557 = vmatpush2.msra.mxu0 0.0
  %1558 = vmatprep.subr.mxu0 0.0
  %1559 = vmatpush2.msra.mxu0 0.0
  %1560 = vmatprep.mubr.f32.mxu0 0.0
  %1561 = vmatmul.mubr.f32.gmra.mxu0 %v1494
  %v1562 = vpop.f32.mrf.mxu0
  %v1563 = vadd.f32 0.0, %v1562
  %v1564 = vpop.f32.mrf.mxu0
  %1565 = vdwg.mxu0
  %v1566 = vadd.f32 %v1490, %v1563
  %v1567 = vxor.u32 %v1566, 2147483648
  %v1568 = vmul.f32 %v1567, 1.442695
  %v1569 = vpow.pop %v1568
  %v1570 = vadd.f32 %v1569, 1.0
  %v1571 = vrcp.pop %v1570
  %v1572 = vmul.f32 1.0, %v1571
  %v1573 = vtanh.pop %v1566
  %v1574 = vmul.f32 %v1572, %v1372
  %1576 = vrot.lane.b32.xlu0 %v1573, 64
  %v1577 = vpop.permute.xlu0 %1576
  %v1579 = vmul.f32 %v1572, %v1577
  %1581 = vrot.lane.b32.xlu0 %v1579, 32
  %v1582 = vpop.permute.xlu0 %1581
  %v1584 = vadd.f32 %v1574, %v1582
  %v1585 = vtanh.pop %v1584
  %1587 = vrot.lane.b32.xlu0 %v1585, 64
  %v1588 = vpop.permute.xlu0 %1587
  %v1590 = vmul.f32 %v1572, %v1588
  %v1591 = vsel %vm802, %v1590, %v1371
  %v1592 = vsel %vm802, %v1584, %v1372
  %v1593 = vsel %vm802, %v1590, 0.0
  %1595 = vrot.lane.b32.xlu0 %v1593, 32
  %v1596 = vpop.permute.xlu0 %1595
  %s1598 = scalar_lea.vmem %s8, 16
  %1599 = vst.msk [vmem:[%s1598] sm:$0xff] %vm223, %v1596
  %v1600 = vld [vmem:[#allocation2 + $0x60] sm:$0xff]
  %1602 = vrot.lane.b32.xlu0 %v1481, 32
  %v1603 = vpop.permute.xlu0 %1602
  %v1604 = vsel %vm223, %v1603, 0
  %1606 = vmatprep.subr.mxu0 0.0
  %1607 = vmatpush1.msra.mxu0 0.0
  %1608 = vmatprep.subr.mxu0 0.0
  %1609 = vmatpush1.msra.mxu0 0.0
  %1610 = vmatprep.subr.mxu0 0.0
  %1611 = vmatpush1.msra.mxu0 0.0
  %1612 = vmatprep.subr.mxu0 0.0
  %1613 = vmatpush1.msra.mxu0 0.0
  %1614 = vmatprep.subr.mxu0 0.0
  %1615 = vmatpush1.msra.mxu0 0.0
  %1616 = vmatprep.subr.mxu0 0.0
  %1617 = vmatpush1.msra.mxu0 0.0
  %1618 = vmatprep.subr.mxu0 0.0
  %1619 = vmatpush1.msra.mxu0 0.0
  %1620 = vmatprep.subr.mxu0 0.0
  %1621 = vmatpush1.msra.mxu0 0.0
  %1622 = vmatprep.subr.mxu0 0.0
  %1623 = vmatpush1.msra.mxu0 0.0
  %1624 = vmatprep.subr.mxu0 0.0
  %1625 = vmatpush1.msra.mxu0 0.0
  %1626 = vmatprep.subr.mxu0 0.0
  %1627 = vmatpush1.msra.mxu0 0.0
  %1628 = vmatprep.subr.mxu0 0.0
  %1629 = vmatpush1.msra.mxu0 0.0
  %1630 = vmatprep.subr.mxu0 0.0
  %1631 = vmatpush1.msra.mxu0 %v210
  %1632 = vmatprep.subr.mxu0 0.0
  %1633 = vmatpush1.msra.mxu0 %v209
  %1634 = vmatprep.subr.mxu0 0.0
  %1635 = vmatpush1.msra.mxu0 %v208
  %1636 = vmatprep.subr.mxu0 0.0
  %1637 = vmatpush1.msra.mxu0 %v207
  %1638 = vmatprep.subr.mxu0 0.0
  %1639 = vmatpush2.msra.mxu0 0.0
  %1640 = vmatprep.subr.mxu0 0.0
  %1641 = vmatpush2.msra.mxu0 0.0
  %1642 = vmatprep.subr.mxu0 0.0
  %1643 = vmatpush2.msra.mxu0 0.0
  %1644 = vmatprep.subr.mxu0 0.0
  %1645 = vmatpush2.msra.mxu0 0.0
  %1646 = vmatprep.subr.mxu0 0.0
  %1647 = vmatpush2.msra.mxu0 0.0
  %1648 = vmatprep.subr.mxu0 0.0
  %1649 = vmatpush2.msra.mxu0 0.0
  %1650 = vmatprep.subr.mxu0 0.0
  %1651 = vmatpush2.msra.mxu0 0.0
  %1652 = vmatprep.subr.mxu0 0.0
  %1653 = vmatpush2.msra.mxu0 0.0
  %1654 = vmatprep.subr.mxu0 0.0
  %1655 = vmatpush2.msra.mxu0 0.0
  %1656 = vmatprep.subr.mxu0 0.0
  %1657 = vmatpush2.msra.mxu0 0.0
  %1658 = vmatprep.subr.mxu0 0.0
  %1659 = vmatpush2.msra.mxu0 0.0
  %1660 = vmatprep.subr.mxu0 0.0
  %1661 = vmatpush2.msra.mxu0 0.0
  %1662 = vmatprep.subr.mxu0 0.0
  %1663 = vmatpush2.msra.mxu0 0.0
  %1664 = vmatprep.subr.mxu0 0.0
  %1665 = vmatpush2.msra.mxu0 0.0
  %1666 = vmatprep.subr.mxu0 0.0
  %1667 = vmatpush2.msra.mxu0 0.0
  %1668 = vmatprep.subr.mxu0 0.0
  %1669 = vmatpush2.msra.mxu0 0.0
  %1670 = vmatprep.mubr.f32.mxu0 0.0
  %1671 = vmatmul.mubr.f32.gmra.mxu0 %v1604
  %v1672 = vpop.f32.mrf.mxu0
  %v1673 = vadd.f32 0.0, %v1672
  %v1674 = vpop.f32.mrf.mxu0
  %1675 = vdwg.mxu0
  %v1676 = vadd.f32 %v1600, %v1673
  %v1677 = vxor.u32 %v1676, 2147483648
  %v1678 = vmul.f32 %v1677, 1.442695
  %v1679 = vpow.pop %v1678
  %v1680 = vadd.f32 %v1679, 1.0
  %v1681 = vrcp.pop %v1680
  %v1682 = vmul.f32 1.0, %v1681
  %v1683 = vtanh.pop %v1676
  %v1684 = vmul.f32 %v1682, %v1482
  %1686 = vrot.lane.b32.xlu0 %v1683, 64
  %v1687 = vpop.permute.xlu0 %1686
  %v1689 = vmul.f32 %v1682, %v1687
  %1691 = vrot.lane.b32.xlu0 %v1689, 32
  %v1692 = vpop.permute.xlu0 %1691
  %v1694 = vadd.f32 %v1684, %v1692
  %v1695 = vtanh.pop %v1694
  %1697 = vrot.lane.b32.xlu0 %v1695, 64
  %v1698 = vpop.permute.xlu0 %1697
  %v1700 = vmul.f32 %v1682, %v1698
  %v1701 = vsel %vm686, %v1700, %v1481
  %v1702 = vsel %vm686, %v1694, %v1482
  %v1703 = vsel %vm686, %v1700, 0.0
  %1705 = vrot.lane.b32.xlu0 %v1703, 32
  %v1706 = vpop.permute.xlu0 %1705
  %s1708 = scalar_lea.vmem %s7, 48
  %1709 = vst.msk [vmem:[%s1708] sm:$0xff] %vm223, %v1706
  %v1710 = vld [vmem:[#allocation2 + $0x18] sm:$0xff]
  %1712 = vrot.lane.b32.xlu0 %v1591, 32
  %v1713 = vpop.permute.xlu0 %1712
  %v1714 = vsel %vm223, %v1713, 0
  %1716 = vmatprep.subr.mxu0 0.0
  %1717 = vmatpush1.msra.mxu0 0.0
  %1718 = vmatprep.subr.mxu0 0.0
  %1719 = vmatpush1.msra.mxu0 0.0
  %1720 = vmatprep.subr.mxu0 0.0
  %1721 = vmatpush1.msra.mxu0 0.0
  %1722 = vmatprep.subr.mxu0 0.0
  %1723 = vmatpush1.msra.mxu0 0.0
  %1724 = vmatprep.subr.mxu0 0.0
  %1725 = vmatpush1.msra.mxu0 0.0
  %1726 = vmatprep.subr.mxu0 0.0
  %1727 = vmatpush1.msra.mxu0 0.0
  %1728 = vmatprep.subr.mxu0 0.0
  %1729 = vmatpush1.msra.mxu0 0.0
  %1730 = vmatprep.subr.mxu0 0.0
  %1731 = vmatpush1.msra.mxu0 0.0
  %1732 = vmatprep.subr.mxu0 0.0
  %1733 = vmatpush1.msra.mxu0 0.0
  %1734 = vmatprep.subr.mxu0 0.0
  %1735 = vmatpush1.msra.mxu0 0.0
  %1736 = vmatprep.subr.mxu0 0.0
  %1737 = vmatpush1.msra.mxu0 0.0
  %1738 = vmatprep.subr.mxu0 0.0
  %1739 = vmatpush1.msra.mxu0 0.0
  %1740 = vmatprep.subr.mxu0 0.0
  %1741 = vmatpush1.msra.mxu0 %v215
  %1742 = vmatprep.subr.mxu0 0.0
  %1743 = vmatpush1.msra.mxu0 %v214
  %1744 = vmatprep.subr.mxu0 0.0
  %1745 = vmatpush1.msra.mxu0 %v213
  %1746 = vmatprep.subr.mxu0 0.0
  %1747 = vmatpush1.msra.mxu0 %v212
  %1748 = vmatprep.subr.mxu0 0.0
  %1749 = vmatpush2.msra.mxu0 0.0
  %1750 = vmatprep.subr.mxu0 0.0
  %1751 = vmatpush2.msra.mxu0 0.0
  %1752 = vmatprep.subr.mxu0 0.0
  %1753 = vmatpush2.msra.mxu0 0.0
  %1754 = vmatprep.subr.mxu0 0.0
  %1755 = vmatpush2.msra.mxu0 0.0
  %1756 = vmatprep.subr.mxu0 0.0
  %1757 = vmatpush2.msra.mxu0 0.0
  %1758 = vmatprep.subr.mxu0 0.0
  %1759 = vmatpush2.msra.mxu0 0.0
  %1760 = vmatprep.subr.mxu0 0.0
  %1761 = vmatpush2.msra.mxu0 0.0
  %1762 = vmatprep.subr.mxu0 0.0
  %1763 = vmatpush2.msra.mxu0 0.0
  %1764 = vmatprep.subr.mxu0 0.0
  %1765 = vmatpush2.msra.mxu0 0.0
  %1766 = vmatprep.subr.mxu0 0.0
  %1767 = vmatpush2.msra.mxu0 0.0
  %1768 = vmatprep.subr.mxu0 0.0
  %1769 = vmatpush2.msra.mxu0 0.0
  %1770 = vmatprep.subr.mxu0 0.0
  %1771 = vmatpush2.msra.mxu0 0.0
  %1772 = vmatprep.subr.mxu0 0.0
  %1773 = vmatpush2.msra.mxu0 0.0
  %1774 = vmatprep.subr.mxu0 0.0
  %1775 = vmatpush2.msra.mxu0 0.0
  %1776 = vmatprep.subr.mxu0 0.0
  %1777 = vmatpush2.msra.mxu0 0.0
  %1778 = vmatprep.subr.mxu0 0.0
  %1779 = vmatpush2.msra.mxu0 0.0
  %1780 = vmatprep.mubr.f32.mxu0 0.0
  %1781 = vmatmul.mubr.f32.gmra.mxu0 %v1714
  %v1782 = vpop.f32.mrf.mxu0
  %v1783 = vadd.f32 0.0, %v1782
  %v1784 = vpop.f32.mrf.mxu0
  %1785 = vdwg.mxu0
  %v1786 = vadd.f32 %v1710, %v1783
  %v1787 = vxor.u32 %v1786, 2147483648
  %v1788 = vmul.f32 %v1787, 1.442695
  %v1789 = vpow.pop %v1788
  %v1790 = vadd.f32 %v1789, 1.0
  %v1791 = vrcp.pop %v1790
  %v1792 = vmul.f32 1.0, %v1791
  %v1793 = vtanh.pop %v1786
  %v1794 = vmul.f32 %v1792, %v1592
  %1796 = vrot.lane.b32.xlu0 %v1793, 64
  %v1797 = vpop.permute.xlu0 %1796
  %v1799 = vmul.f32 %v1792, %v1797
  %1801 = vrot.lane.b32.xlu0 %v1799, 32
  %v1802 = vpop.permute.xlu0 %1801
  %v1804 = vadd.f32 %v1794, %v1802
  %v1805 = vtanh.pop %v1804
  %1807 = vrot.lane.b32.xlu0 %v1805, 64
  %v1808 = vpop.permute.xlu0 %1807
  %v1810 = vmul.f32 %v1792, %v1808
  %v1811 = vsel %vm570, %v1810, %v1591
  %v1812 = vsel %vm570, %v1804, %v1592
  %v1813 = vsel %vm570, %v1810, 0.0
  %1815 = vrot.lane.b32.xlu0 %v1813, 32
  %v1816 = vpop.permute.xlu0 %1815
  %s1818 = scalar_lea.vmem %s8, 8
  %1819 = vst.msk [vmem:[%s1818] sm:$0xff] %vm223, %v1816
  %v1820 = vld [vmem:[#allocation2 + $0x70] sm:$0xff]
  %1822 = vrot.lane.b32.xlu0 %v1701, 32
  %v1823 = vpop.permute.xlu0 %1822
  %v1824 = vsel %vm223, %v1823, 0
  %1826 = vmatprep.subr.mxu0 0.0
  %1827 = vmatpush1.msra.mxu0 0.0
  %1828 = vmatprep.subr.mxu0 0.0
  %1829 = vmatpush1.msra.mxu0 0.0
  %1830 = vmatprep.subr.mxu0 0.0
  %1831 = vmatpush1.msra.mxu0 0.0
  %1832 = vmatprep.subr.mxu0 0.0
  %1833 = vmatpush1.msra.mxu0 0.0
  %1834 = vmatprep.subr.mxu0 0.0
  %1835 = vmatpush1.msra.mxu0 0.0
  %1836 = vmatprep.subr.mxu0 0.0
  %1837 = vmatpush1.msra.mxu0 0.0
  %1838 = vmatprep.subr.mxu0 0.0
  %1839 = vmatpush1.msra.mxu0 0.0
  %1840 = vmatprep.subr.mxu0 0.0
  %1841 = vmatpush1.msra.mxu0 0.0
  %1842 = vmatprep.subr.mxu0 0.0
  %1843 = vmatpush1.msra.mxu0 0.0
  %1844 = vmatprep.subr.mxu0 0.0
  %1845 = vmatpush1.msra.mxu0 0.0
  %1846 = vmatprep.subr.mxu0 0.0
  %1847 = vmatpush1.msra.mxu0 0.0
  %1848 = vmatprep.subr.mxu0 0.0
  %1849 = vmatpush1.msra.mxu0 0.0
  %1850 = vmatprep.subr.mxu0 0.0
  %1851 = vmatpush1.msra.mxu0 %v210
  %1852 = vmatprep.subr.mxu0 0.0
  %1853 = vmatpush1.msra.mxu0 %v209
  %1854 = vmatprep.subr.mxu0 0.0
  %1855 = vmatpush1.msra.mxu0 %v208
  %1856 = vmatprep.subr.mxu0 0.0
  %1857 = vmatpush1.msra.mxu0 %v207
  %1858 = vmatprep.subr.mxu0 0.0
  %1859 = vmatpush2.msra.mxu0 0.0
  %1860 = vmatprep.subr.mxu0 0.0
  %1861 = vmatpush2.msra.mxu0 0.0
  %1862 = vmatprep.subr.mxu0 0.0
  %1863 = vmatpush2.msra.mxu0 0.0
  %1864 = vmatprep.subr.mxu0 0.0
  %1865 = vmatpush2.msra.mxu0 0.0
  %1866 = vmatprep.subr.mxu0 0.0
  %1867 = vmatpush2.msra.mxu0 0.0
  %1868 = vmatprep.subr.mxu0 0.0
  %1869 = vmatpush2.msra.mxu0 0.0
  %1870 = vmatprep.subr.mxu0 0.0
  %1871 = vmatpush2.msra.mxu0 0.0
  %1872 = vmatprep.subr.mxu0 0.0
  %1873 = vmatpush2.msra.mxu0 0.0
  %1874 = vmatprep.subr.mxu0 0.0
  %1875 = vmatpush2.msra.mxu0 0.0
  %1876 = vmatprep.subr.mxu0 0.0
  %1877 = vmatpush2.msra.mxu0 0.0
  %1878 = vmatprep.subr.mxu0 0.0
  %1879 = vmatpush2.msra.mxu0 0.0
  %1880 = vmatprep.subr.mxu0 0.0
  %1881 = vmatpush2.msra.mxu0 0.0
  %1882 = vmatprep.subr.mxu0 0.0
  %1883 = vmatpush2.msra.mxu0 0.0
  %1884 = vmatprep.subr.mxu0 0.0
  %1885 = vmatpush2.msra.mxu0 0.0
  %1886 = vmatprep.subr.mxu0 0.0
  %1887 = vmatpush2.msra.mxu0 0.0
  %1888 = vmatprep.subr.mxu0 0.0
  %1889 = vmatpush2.msra.mxu0 0.0
  %1890 = vmatprep.mubr.f32.mxu0 0.0
  %1891 = vmatmul.mubr.f32.gmra.mxu0 %v1824
  %v1892 = vpop.f32.mrf.mxu0
  %v1893 = vadd.f32 0.0, %v1892
  %v1894 = vpop.f32.mrf.mxu0
  %1895 = vdwg.mxu0
  %v1896 = vadd.f32 %v1820, %v1893
  %v1897 = vxor.u32 %v1896, 2147483648
  %v1898 = vmul.f32 %v1897, 1.442695
  %v1899 = vpow.pop %v1898
  %v1900 = vadd.f32 %v1899, 1.0
  %v1901 = vrcp.pop %v1900
  %v1902 = vmul.f32 1.0, %v1901
  %v1903 = vtanh.pop %v1896
  %v1904 = vmul.f32 %v1902, %v1702
  %1906 = vrot.lane.b32.xlu0 %v1903, 64
  %v1907 = vpop.permute.xlu0 %1906
  %v1909 = vmul.f32 %v1902, %v1907
  %1911 = vrot.lane.b32.xlu0 %v1909, 32
  %v1912 = vpop.permute.xlu0 %1911
  %v1914 = vadd.f32 %v1904, %v1912
  %v1915 = vtanh.pop %v1914
  %1917 = vrot.lane.b32.xlu0 %v1915, 64
  %v1918 = vpop.permute.xlu0 %1917
  %v1920 = vmul.f32 %v1902, %v1918
  %v1921 = vsel %vm451, %v1920, 0.0
  %1923 = vrot.lane.b32.xlu0 %v1921, 32
  %v1924 = vpop.permute.xlu0 %1923
  %s1926 = scalar_lea.vmem %s7, 56
  %1927 = vst.msk [vmem:[%s1926] sm:$0xff] %vm223, %v1924
  %v1928 = vld [vmem:[#allocation2 + $0x8] sm:$0xff]
  %1930 = vrot.lane.b32.xlu0 %v1811, 32
  %v1931 = vpop.permute.xlu0 %1930
  %v1932 = vsel %vm223, %v1931, 0
  %1934 = vmatprep.subr.mxu0 0.0
  %1935 = vmatpush1.msra.mxu0 0.0
  %1936 = vmatprep.subr.mxu0 0.0
  %1937 = vmatpush1.msra.mxu0 0.0
  %1938 = vmatprep.subr.mxu0 0.0
  %1939 = vmatpush1.msra.mxu0 0.0
  %1940 = vmatprep.subr.mxu0 0.0
  %1941 = vmatpush1.msra.mxu0 0.0
  %1942 = vmatprep.subr.mxu0 0.0
  %1943 = vmatpush1.msra.mxu0 0.0
  %1944 = vmatprep.subr.mxu0 0.0
  %1945 = vmatpush1.msra.mxu0 0.0
  %1946 = vmatprep.subr.mxu0 0.0
  %1947 = vmatpush1.msra.mxu0 0.0
  %1948 = vmatprep.subr.mxu0 0.0
  %1949 = vmatpush1.msra.mxu0 0.0
  %1950 = vmatprep.subr.mxu0 0.0
  %1951 = vmatpush1.msra.mxu0 0.0
  %1952 = vmatprep.subr.mxu0 0.0
  %1953 = vmatpush1.msra.mxu0 0.0
  %1954 = vmatprep.subr.mxu0 0.0
  %1955 = vmatpush1.msra.mxu0 0.0
  %1956 = vmatprep.subr.mxu0 0.0
  %1957 = vmatpush1.msra.mxu0 0.0
  %1958 = vmatprep.subr.mxu0 0.0
  %1959 = vmatpush1.msra.mxu0 %v215
  %1960 = vmatprep.subr.mxu0 0.0
  %1961 = vmatpush1.msra.mxu0 %v214
  %1962 = vmatprep.subr.mxu0 0.0
  %1963 = vmatpush1.msra.mxu0 %v213
  %1964 = vmatprep.subr.mxu0 0.0
  %1965 = vmatpush1.msra.mxu0 %v212
  %1966 = vmatprep.subr.mxu0 0.0
  %1967 = vmatpush2.msra.mxu0 0.0
  %1968 = vmatprep.subr.mxu0 0.0
  %1969 = vmatpush2.msra.mxu0 0.0
  %1970 = vmatprep.subr.mxu0 0.0
  %1971 = vmatpush2.msra.mxu0 0.0
  %1972 = vmatprep.subr.mxu0 0.0
  %1973 = vmatpush2.msra.mxu0 0.0
  %1974 = vmatprep.subr.mxu0 0.0
  %1975 = vmatpush2.msra.mxu0 0.0
  %1976 = vmatprep.subr.mxu0 0.0
  %1977 = vmatpush2.msra.mxu0 0.0
  %1978 = vmatprep.subr.mxu0 0.0
  %1979 = vmatpush2.msra.mxu0 0.0
  %1980 = vmatprep.subr.mxu0 0.0
  %1981 = vmatpush2.msra.mxu0 0.0
  %1982 = vmatprep.subr.mxu0 0.0
  %1983 = vmatpush2.msra.mxu0 0.0
  %1984 = vmatprep.subr.mxu0 0.0
  %1985 = vmatpush2.msra.mxu0 0.0
  %1986 = vmatprep.subr.mxu0 0.0
  %1987 = vmatpush2.msra.mxu0 0.0
  %1988 = vmatprep.subr.mxu0 0.0
  %1989 = vmatpush2.msra.mxu0 0.0
  %1990 = vmatprep.subr.mxu0 0.0
  %1991 = vmatpush2.msra.mxu0 0.0
  %1992 = vmatprep.subr.mxu0 0.0
  %1993 = vmatpush2.msra.mxu0 0.0
  %1994 = vmatprep.subr.mxu0 0.0
  %1995 = vmatpush2.msra.mxu0 0.0
  %1996 = vmatprep.subr.mxu0 0.0
  %1997 = vmatpush2.msra.mxu0 0.0
  %1998 = vmatprep.mubr.f32.mxu0 0.0
  %1999 = vmatmul.mubr.f32.gmra.mxu0 %v1932
  %v2000 = vpop.f32.mrf.mxu0
  %v2001 = vadd.f32 0.0, %v2000
  %v2002 = vpop.f32.mrf.mxu0
  %2003 = vdwg.mxu0
  %v2004 = vadd.f32 %v1928, %v2001
  %v2005 = vxor.u32 %v2004, 2147483648
  %v2006 = vmul.f32 %v2005, 1.442695
  %v2007 = vpow.pop %v2006
  %v2008 = vadd.f32 %v2007, 1.0
  %v2009 = vrcp.pop %v2008
  %v2010 = vmul.f32 1.0, %v2009
  %v2011 = vtanh.pop %v2004
  %v2012 = vmul.f32 %v2010, %v1812
  %2014 = vrot.lane.b32.xlu0 %v2011, 64
  %v2015 = vpop.permute.xlu0 %2014
  %v2017 = vmul.f32 %v2010, %v2015
  %2019 = vrot.lane.b32.xlu0 %v2017, 32
  %v2020 = vpop.permute.xlu0 %2019
  %v2022 = vadd.f32 %v2012, %v2020
  %v2023 = vtanh.pop %v2022
  %2025 = vrot.lane.b32.xlu0 %v2023, 64
  %v2026 = vpop.permute.xlu0 %2025
  %v2028 = vmul.f32 %v2010, %v2026
  %v2029 = vsel %vm331, %v2028, 0.0
  %2031 = vrot.lane.b32.xlu0 %v2029, 32
  %v2032 = vpop.permute.xlu0 %2031
  %2034 = vst.msk [vmem:[%s8] sm:$0xff] %vm223, %v2032
  // Predicated region
  $region30: #{sentence_extractor_forward.1} parent=0 // pred_check
    _
  $region31: #{sentence_extractor_forward.1} parent=0 // pred_check_branch
    %2036 = sbr.rel (0) target = $region33
  $region32: #{sentence_extractor_forward.1} parent=0 // pred_region
    _
  $region33: #{sentence_extractor_forward.1} parent=0 // pred_fallthru
    _
  // Predicated region
  $region34: #{sentence_extractor_forward.1} parent=0 // pred_check
    _
  $region35: #{sentence_extractor_forward.1} parent=0 // pred_check_branch
    %2038 = sbr.rel (0) target = $region37
  $region36: #{sentence_extractor_forward.1} parent=0 // pred_region
    _
  $region37: #{sentence_extractor_forward.1} parent=0 // pred_fallthru
    _
  // Predicated region
  $region38: #{sentence_extractor_forward.1} parent=0 // pred_check
    _
  $region39: #{sentence_extractor_forward.1} parent=0 // pred_check_branch
    %2040 = sbr.rel (0) target = $region41
  $region40: #{sentence_extractor_forward.1} parent=0 // pred_region
    _
  $region41: #{sentence_extractor_forward.1} parent=0 // pred_fallthru
    _
  // Predicated region
  $region42: #{sentence_extractor_forward.1} parent=0 // pred_check
    _
  $region43: #{sentence_extractor_forward.1} parent=0 // pred_check_branch
    %2042 = sbr.rel (0) target = $region45
  $region44: #{sentence_extractor_forward.1} parent=0 // pred_region
    _
  $region45: #{sentence_extractor_forward.1} parent=0 // pred_fallthru
    _

</llo_original>
